<compile_context>
chip_gen: v7x
topology: tpu7x:2x2x1
jax: 0.10.0
libtpu: 0.0.40
codegen_flags: <defaults>
</compile_context>

<pallas_src>
import jax
import jax.numpy as jnp
from jax.experimental import pallas as pl
from jax.experimental.pallas import tpu as pltpu

B, N, D = 2, 8, 32      # bags, instances per bag, embedding dim
H = 4                   # num_heads (from the module: num_heads=4)
DH = D // H             # head dim
G = H * B               # fused (head, bag) batch dim for the attention contractions
L = 16                  # aggregator attention hidden dim
C = 1                   # classifier output dim (code below assumes C == 1)
OUT_LANES = 128         # lane-dense output slab width


def mil_kernel(x_ref, wq_ref, wk_ref, wv_ref, bq_ref, bk_ref, bv_ref,
               wo_ref, bo_ref, va_ref, wa_ref, wc_ref, bc_ref, y_ref):
    x = x_ref[...].astype(jnp.float32)                                    # (B, N, D)
    # Replicate each bag once per head: g = h*B + b  (leading-dim broadcast + merge,
    # no lane/sublane shuffles).
    xg = jnp.broadcast_to(x[None], (H, B, N, D)).reshape(G, N, D)         # (G, N, D)

    # ---- nn.MultiheadAttention: per-(head,bag) batched projections ----
    # 1/sqrt(DH) is already folded into wq/bq on the host.
    q = jnp.einsum('gnd,gdk->gnk', xg, wq_ref[...],
                   preferred_element_type=jnp.float32) + bq_ref[...]      # (G, N, DH)
    k = jnp.einsum('gnd,gdk->gnk', xg, wk_ref[...],
                   preferred_element_type=jnp.float32) + bk_ref[...]      # (G, N, DH)
    v = jnp.einsum('gnd,gdk->gnk', xg, wv_ref[...],
                   preferred_element_type=jnp.float32) + bv_ref[...]      # (G, N, DH)

    # scores + softmax (row softmax over keys)
    s = jnp.einsum('gid,gjd->gij', q, k,
                   preferred_element_type=jnp.float32)                    # (G, N, N)
    s = s - jnp.max(s, axis=-1, keepdims=True)
    p = jnp.exp(s)
    p = p * pl.reciprocal(jnp.sum(p, axis=-1, keepdims=True), approx=True)

    o = jnp.einsum('gij,gjd->gid', p, v,
                   preferred_element_type=jnp.float32)                    # (G, N, DH)

    # out_proj: per-head slice of W_o, summed over heads (concat(heads) @ Wo == sum_h o_h @ Wo_h)
    fo = jnp.einsum('gnd,gdk->gnk', o, wo_ref[...],
                    preferred_element_type=jnp.float32)                   # (G, N, D)
    feat = jnp.sum(fo.reshape(H, B, N, D), axis=0) + bo_ref[...]          # (B, N, D)

    # ---- attention-based MIL aggregator: a = softmax_n(tanh(feat V) w) ----
    featf = feat.reshape(B * N, D)                                        # (BN, D)
    t = jnp.tanh(jnp.dot(featf, va_ref[...],
                         preferred_element_type=jnp.float32))             # (BN, L)
    # score = t @ w  (L -> 1): VPU multiply + lane reduce, no 1-lane MXU matmul.
    sc = jnp.sum(t.reshape(B, N, L) * wa_ref[...], axis=-1, keepdims=True)  # (B, N, 1)
    sc = sc - jnp.max(sc, axis=1, keepdims=True)
    a = jnp.exp(sc)
    a = a * pl.reciprocal(jnp.sum(a, axis=1, keepdims=True), approx=True)   # (B, N, 1)
    z = jnp.sum(a * feat, axis=1)                                           # (B, D)

    # ---- classifier Linear(D, C=1): VPU multiply + lane reduce ----
    y = jnp.sum(z * wc_ref[...], axis=-1, keepdims=True) + bc_ref[...]      # (B, 1)

    # Lane-dense single store; wrapper slices [:, :C].
    y_ref[...] = jnp.broadcast_to(y, (B, OUT_LANES)).astype(y_ref.dtype)


def mil_nn_forward(x, params):
    wqkv, bqkv, wo, bo, va, wa, wc, bc = params
    scale = 1.0 / jnp.sqrt(jnp.float32(DH))

    wq, wk, wv = wqkv[:, :D], wqkv[:, D:2 * D], wqkv[:, 2 * D:]
    bq, bk, bv = bqkv[:, :D], bqkv[:, D:2 * D], bqkv[:, 2 * D:]

    def per_head_w(w):            # (D, D) -> (H, D, DH)
        return w.reshape(D, H, DH).transpose(1, 0, 2)

    def per_head_b(b):            # (1, D) -> (H, 1, DH)
        return b.reshape(1, H, DH).transpose(1, 0, 2)

    # Fold the attention scale into the Q projection, split per head, replicate per bag
    # (g = h*B + b, matching the in-kernel xg layout).
    wq_g = jnp.repeat(per_head_w(wq * scale), B, axis=0)       # (G, D, DH)
    wk_g = jnp.repeat(per_head_w(wk), B, axis=0)
    wv_g = jnp.repeat(per_head_w(wv), B, axis=0)
    bq_g = jnp.repeat(per_head_b(bq * scale), B, axis=0)       # (G, 1, DH)
    bk_g = jnp.repeat(per_head_b(bk), B, axis=0)
    bv_g = jnp.repeat(per_head_b(bv), B, axis=0)
    wo_g = jnp.repeat(wo.reshape(H, DH, D), B, axis=0)         # (G, DH, D)
    wa_row = wa.T                                              # (1, L)
    wc_row = wc.T                                              # (C, D) == (1, D), C == 1
    bc2 = bc                                                   # (1, C)

    inputs = (x, wq_g, wk_g, wv_g, bq_g, bk_g, bv_g, wo_g, bo, va, wa_row, wc_row, bc2)

    def full_spec(shape):
        return pl.BlockSpec(shape, lambda b: (0,) * len(shape))

    out = pl.pallas_call(
        mil_kernel,
        out_shape=jax.ShapeDtypeStruct((B, OUT_LANES), jnp.float32),
        grid_spec=pltpu.PrefetchScalarGridSpec(
            num_scalar_prefetch=0,
            grid=(1,),                                   # single fused invocation
            in_specs=[full_spec(a.shape) for a in inputs],
            out_specs=pl.BlockSpec((B, OUT_LANES), lambda b: (0, 0)),
        ),
        compiler_params=pltpu.CompilerParams(dimension_semantics=("arbitrary",)),
    )(*inputs)
    return out[:, :C]


def reference(x, params):
    """Pure-JAX reference with canonical (un-transformed) weights."""
    wqkv, bqkv, wo, bo, va, wa, wc, bc = params
    qkv = x @ wqkv + bqkv
    q, k, v = jnp.split(qkv, 3, axis=-1)
    qh = q.reshape(B, N, H, DH).transpose(0, 2, 1, 3)
    kh = k.reshape(B, N, H, DH).transpose(0, 2, 1, 3)
    vh = v.reshape(B, N, H, DH).transpose(0, 2, 1, 3)
    s = jnp.einsum('bhqd,bhkd->bhqk', qh, kh) / jnp.sqrt(jnp.float32(DH))
    p = jax.nn.softmax(s, axis=-1)
    o = jnp.einsum('bhqk,bhkd->bhqd', p, vh).transpose(0, 2, 1, 3).reshape(B, N, D)
    feat = o @ wo + bo
    t = jnp.tanh(feat @ va)
    a = jax.nn.softmax(t @ wa, axis=1)                                  # (B, N, 1)
    z = jnp.sum(a * feat, axis=1)                                       # (B, D)
    return z @ wc + bc


def init_params(key):
    ks = jax.random.split(key, 8)
    scale = 0.1
    # Weights stored pre-transposed (input_dim, output_dim) so the math is x @ W.
    wqkv = scale * jax.random.normal(ks[0], (D, 3 * D), jnp.float32)    # in_proj
    bqkv = scale * jax.random.normal(ks[1], (1, 3 * D), jnp.float32)
    wo = scale * jax.random.normal(ks[2], (D, D), jnp.float32)          # out_proj
    bo = scale * jax.random.normal(ks[3], (1, D), jnp.float32)
    va = scale * jax.random.normal(ks[4], (D, L), jnp.float32)          # aggregator V
    wa = scale * jax.random.normal(ks[5], (L, 1), jnp.float32)          # aggregator w
    wc = scale * jax.random.normal(ks[6], (D, C), jnp.float32)          # classifier
    bc = scale * jax.random.normal(ks[7], (1, C), jnp.float32)
    return (wqkv, bqkv, wo, bo, va, wa, wc, bc)


if __name__ == "__main__":
    key = jax.random.PRNGKey(0)
    kx, kp = jax.random.split(key)
    x = jax.random.normal(kx, (B, N, D), jnp.float32)
    params = init_params(kp)

    out = jax.block_until_ready(mil_nn_forward(x, params))
    ref = jax.block_until_ready(reference(x, params))

    assert out.shape == (B, C), out.shape
    # Tolerance loosened for pl.reciprocal(approx=True) in the two softmax denominators.
    assert jnp.allclose(out, ref, atol=5e-3, rtol=5e-3), (out, ref)
    print("KERNEL_OK")
</pallas_src>

<mosaic_0001>
module attributes {stable_mosaic.version = 11 : i64} {
  func.func @mil_kernel(%arg0: i32, %arg1: memref<2x8x32xf32, #tpu.memory_space<vmem>>, %arg2: memref<8x32x8xf32, #tpu.memory_space<vmem>>, %arg3: memref<8x32x8xf32, #tpu.memory_space<vmem>>, %arg4: memref<8x32x8xf32, #tpu.memory_space<vmem>>, %arg5: memref<8x1x8xf32, #tpu.memory_space<vmem>>, %arg6: memref<8x1x8xf32, #tpu.memory_space<vmem>>, %arg7: memref<8x1x8xf32, #tpu.memory_space<vmem>>, %arg8: memref<8x8x32xf32, #tpu.memory_space<vmem>>, %arg9: memref<1x32xf32, #tpu.memory_space<vmem>>, %arg10: memref<32x16xf32, #tpu.memory_space<vmem>>, %arg11: memref<1x16xf32, #tpu.memory_space<vmem>>, %arg12: memref<1x32xf32, #tpu.memory_space<vmem>>, %arg13: memref<1x1xf32, #tpu.memory_space<vmem>>, %arg14: memref<2x128xf32, #tpu.memory_space<vmem>>) attributes {dimension_semantics = [#tpu.dimension_semantics<arbitrary>], iteration_bounds = array<i64: 1>, scalar_prefetch = 0 : i64, scratch_operands = 0 : i64, tpu.core_type = #tpu.core_type<tc>, window_params = [{pipeline_mode = #tpu.pipeline_mode<synchronous>, transform_indices = @transform_0, window_bounds = array<i64: 2, 8, 32>}, {pipeline_mode = #tpu.pipeline_mode<synchronous>, transform_indices = @transform_1, window_bounds = array<i64: 8, 32, 8>}, {pipeline_mode = #tpu.pipeline_mode<synchronous>, transform_indices = @transform_2, window_bounds = array<i64: 8, 32, 8>}, {pipeline_mode = #tpu.pipeline_mode<synchronous>, transform_indices = @transform_3, window_bounds = array<i64: 8, 32, 8>}, {pipeline_mode = #tpu.pipeline_mode<synchronous>, transform_indices = @transform_4, window_bounds = array<i64: 8, 1, 8>}, {pipeline_mode = #tpu.pipeline_mode<synchronous>, transform_indices = @transform_5, window_bounds = array<i64: 8, 1, 8>}, {pipeline_mode = #tpu.pipeline_mode<synchronous>, transform_indices = @transform_6, window_bounds = array<i64: 8, 1, 8>}, {pipeline_mode = #tpu.pipeline_mode<synchronous>, transform_indices = @transform_7, window_bounds = array<i64: 8, 8, 32>}, {pipeline_mode = #tpu.pipeline_mode<synchronous>, transform_indices = @transform_8, window_bounds = array<i64: 1, 32>}, {pipeline_mode = #tpu.pipeline_mode<synchronous>, transform_indices = @transform_9, window_bounds = array<i64: 32, 16>}, {pipeline_mode = #tpu.pipeline_mode<synchronous>, transform_indices = @transform_10, window_bounds = array<i64: 1, 16>}, {pipeline_mode = #tpu.pipeline_mode<synchronous>, transform_indices = @transform_11, window_bounds = array<i64: 1, 32>}, {pipeline_mode = #tpu.pipeline_mode<synchronous>, transform_indices = @transform_12, window_bounds = array<i64: 1, 1>}, {pipeline_mode = #tpu.pipeline_mode<synchronous>, transform_indices = @transform_13, window_bounds = array<i64: 2, 128>}]} {
    %c0 = arith.constant 0 : index
    %c0_0 = arith.constant 0 : index
    %c0_1 = arith.constant 0 : index
    %0 = vector.load %arg1[%c0, %c0_0, %c0_1] : memref<2x8x32xf32, #tpu.memory_space<vmem>>, vector<2x8x32xf32>
    %1 = vector.shape_cast %0 : vector<2x8x32xf32> to vector<1x2x8x32xf32>
    %2 = vector.shape_cast %1 : vector<1x2x8x32xf32> to vector<1x2x8x32xf32>
    %3 = vector.broadcast %2 : vector<1x2x8x32xf32> to vector<4x2x8x32xf32>
    %4 = vector.shape_cast %3 : vector<4x2x8x32xf32> to vector<8x8x32xf32>
    %c0_2 = arith.constant 0 : index
    %c0_3 = arith.constant 0 : index
    %c0_4 = arith.constant 0 : index
    %5 = vector.load %arg2[%c0_2, %c0_3, %c0_4] : memref<8x32x8xf32, #tpu.memory_space<vmem>>, vector<8x32x8xf32>
    "tpu.trace_start"() <{level = 10 : i32, message = "gnd,gdk->gnk"}> : () -> ()
    %cst = arith.constant dense<0.000000e+00> : vector<8x8x8xf32>
    %6 = tpu.matmul %4, %5, %cst {dimension_numbers = #tpu.dot_dimension_numbers<[2], [1], [1], [2], [0, 0, 0, 1, 1, 2], [0], [0]>} : vector<8x8x32xf32>, vector<8x32x8xf32>, vector<8x8x8xf32> -> vector<8x8x8xf32>
    "tpu.trace_stop"() : () -> ()
    %c0_5 = arith.constant 0 : index
    %c0_6 = arith.constant 0 : index
    %c0_7 = arith.constant 0 : index
    %7 = vector.load %arg5[%c0_5, %c0_6, %c0_7] : memref<8x1x8xf32, #tpu.memory_space<vmem>>, vector<8x1x8xf32>
    %8 = vector.broadcast %7 : vector<8x1x8xf32> to vector<8x8x8xf32>
    %9 = arith.addf %6, %8 : vector<8x8x8xf32>
    %c0_8 = arith.constant 0 : index
    %c0_9 = arith.constant 0 : index
    %c0_10 = arith.constant 0 : index
    %10 = vector.load %arg3[%c0_8, %c0_9, %c0_10] : memref<8x32x8xf32, #tpu.memory_space<vmem>>, vector<8x32x8xf32>
    "tpu.trace_start"() <{level = 10 : i32, message = "gnd,gdk->gnk"}> : () -> ()
    %cst_11 = arith.constant dense<0.000000e+00> : vector<8x8x8xf32>
    %11 = tpu.matmul %4, %10, %cst_11 {dimension_numbers = #tpu.dot_dimension_numbers<[2], [1], [1], [2], [0, 0, 0, 1, 1, 2], [0], [0]>} : vector<8x8x32xf32>, vector<8x32x8xf32>, vector<8x8x8xf32> -> vector<8x8x8xf32>
    "tpu.trace_stop"() : () -> ()
    %c0_12 = arith.constant 0 : index
    %c0_13 = arith.constant 0 : index
    %c0_14 = arith.constant 0 : index
    %12 = vector.load %arg6[%c0_12, %c0_13, %c0_14] : memref<8x1x8xf32, #tpu.memory_space<vmem>>, vector<8x1x8xf32>
    %13 = vector.broadcast %12 : vector<8x1x8xf32> to vector<8x8x8xf32>
    %14 = arith.addf %11, %13 : vector<8x8x8xf32>
    %c0_15 = arith.constant 0 : index
    %c0_16 = arith.constant 0 : index
    %c0_17 = arith.constant 0 : index
    %15 = vector.load %arg4[%c0_15, %c0_16, %c0_17] : memref<8x32x8xf32, #tpu.memory_space<vmem>>, vector<8x32x8xf32>
    "tpu.trace_start"() <{level = 10 : i32, message = "gnd,gdk->gnk"}> : () -> ()
    %cst_18 = arith.constant dense<0.000000e+00> : vector<8x8x8xf32>
    %16 = tpu.matmul %4, %15, %cst_18 {dimension_numbers = #tpu.dot_dimension_numbers<[2], [1], [1], [2], [0, 0, 0, 1, 1, 2], [0], [0]>} : vector<8x8x32xf32>, vector<8x32x8xf32>, vector<8x8x8xf32> -> vector<8x8x8xf32>
    "tpu.trace_stop"() : () -> ()
    %c0_19 = arith.constant 0 : index
    %c0_20 = arith.constant 0 : index
    %c0_21 = arith.constant 0 : index
    %17 = vector.load %arg7[%c0_19, %c0_20, %c0_21] : memref<8x1x8xf32, #tpu.memory_space<vmem>>, vector<8x1x8xf32>
    %18 = vector.broadcast %17 : vector<8x1x8xf32> to vector<8x8x8xf32>
    %19 = arith.addf %16, %18 : vector<8x8x8xf32>
    "tpu.trace_start"() <{level = 10 : i32, message = "gid,gjd->gij"}> : () -> ()
    %cst_22 = arith.constant dense<0.000000e+00> : vector<8x8x8xf32>
    %20 = tpu.matmul %9, %14, %cst_22 {dimension_numbers = #tpu.dot_dimension_numbers<[2], [2], [1], [1], [0, 0, 0, 1, 1, 1], [0], [0]>} : vector<8x8x8xf32>, vector<8x8x8xf32>, vector<8x8x8xf32> -> vector<8x8x8xf32>
    "tpu.trace_stop"() : () -> ()
    %cst_23 = arith.constant dense<0xFF800000> : vector<8x8xf32>
    %21 = vector.multi_reduction <maximumf>, %20, %cst_23 [2] : vector<8x8x8xf32> to vector<8x8xf32>
    %22 = vector.shape_cast %21 : vector<8x8xf32> to vector<8x8x1xf32>
    %23 = vector.broadcast %22 : vector<8x8x1xf32> to vector<8x8x8xf32>
    %24 = arith.subf %20, %23 : vector<8x8x8xf32>
    %25 = math.exp %24 : vector<8x8x8xf32>
    %cst_24 = arith.constant dense<0.000000e+00> : vector<8x8xf32>
    %26 = vector.multi_reduction <add>, %25, %cst_24 [2] : vector<8x8x8xf32> to vector<8x8xf32>
    %27 = vector.shape_cast %26 : vector<8x8xf32> to vector<8x8x1xf32>
    %28 = tpu.reciprocal %27 {approx = true} : vector<8x8x1xf32> -> vector<8x8x1xf32>
    %29 = vector.broadcast %28 : vector<8x8x1xf32> to vector<8x8x8xf32>
    %30 = arith.mulf %25, %29 : vector<8x8x8xf32>
    "tpu.trace_start"() <{level = 10 : i32, message = "gij,gjd->gid"}> : () -> ()
    %cst_25 = arith.constant dense<0.000000e+00> : vector<8x8x8xf32>
    %31 = tpu.matmul %30, %19, %cst_25 {dimension_numbers = #tpu.dot_dimension_numbers<[2], [1], [1], [2], [0, 0, 0, 1, 1, 2], [0], [0]>} : vector<8x8x8xf32>, vector<8x8x8xf32>, vector<8x8x8xf32> -> vector<8x8x8xf32>
    "tpu.trace_stop"() : () -> ()
    %c0_26 = arith.constant 0 : index
    %c0_27 = arith.constant 0 : index
    %c0_28 = arith.constant 0 : index
    %32 = vector.load %arg8[%c0_26, %c0_27, %c0_28] : memref<8x8x32xf32, #tpu.memory_space<vmem>>, vector<8x8x32xf32>
    "tpu.trace_start"() <{level = 10 : i32, message = "gnd,gdk->gnk"}> : () -> ()
    %cst_29 = arith.constant dense<0.000000e+00> : vector<8x8x32xf32>
    %33 = tpu.matmul %31, %32, %cst_29 {dimension_numbers = #tpu.dot_dimension_numbers<[2], [1], [1], [2], [0, 0, 0, 1, 1, 2], [0], [0]>} : vector<8x8x8xf32>, vector<8x8x32xf32>, vector<8x8x32xf32> -> vector<8x8x32xf32>
    "tpu.trace_stop"() : () -> ()
    %34 = vector.shape_cast %33 : vector<8x8x32xf32> to vector<4x2x8x32xf32>
    %cst_30 = arith.constant dense<0.000000e+00> : vector<2x8x32xf32>
    %35 = vector.multi_reduction <add>, %34, %cst_30 [0] : vector<4x2x8x32xf32> to vector<2x8x32xf32>
    %c0_31 = arith.constant 0 : index
    %c0_32 = arith.constant 0 : index
    %36 = vector.load %arg9[%c0_31, %c0_32] : memref<1x32xf32, #tpu.memory_space<vmem>>, vector<1x32xf32>
    %37 = vector.shape_cast %36 : vector<1x32xf32> to vector<1x1x32xf32>
    %38 = vector.broadcast %37 : vector<1x1x32xf32> to vector<2x8x32xf32>
    %39 = arith.addf %35, %38 : vector<2x8x32xf32>
    %40 = vector.shape_cast %39 : vector<2x8x32xf32> to vector<16x32xf32>
    %c0_33 = arith.constant 0 : index
    %c0_34 = arith.constant 0 : index
    %41 = vector.load %arg10[%c0_33, %c0_34] : memref<32x16xf32, #tpu.memory_space<vmem>>, vector<32x16xf32>
    %cst_35 = arith.constant dense<0.000000e+00> : vector<16x16xf32>
    %42 = tpu.matmul %40, %41, %cst_35 {dimension_numbers = #tpu.dot_dimension_numbers<[1], [0], [0], [1], [0, 0, 1, 1], [], []>} : vector<16x32xf32>, vector<32x16xf32>, vector<16x16xf32> -> vector<16x16xf32>
    %43 = math.tanh %42 : vector<16x16xf32>
    %44 = vector.shape_cast %43 : vector<16x16xf32> to vector<2x8x16xf32>
    %c0_36 = arith.constant 0 : index
    %c0_37 = arith.constant 0 : index
    %45 = vector.load %arg11[%c0_36, %c0_37] : memref<1x16xf32, #tpu.memory_space<vmem>>, vector<1x16xf32>
    %46 = vector.shape_cast %45 : vector<1x16xf32> to vector<1x1x16xf32>
    %47 = vector.broadcast %46 : vector<1x1x16xf32> to vector<2x8x16xf32>
    %48 = arith.mulf %44, %47 : vector<2x8x16xf32>
    %cst_38 = arith.constant dense<0.000000e+00> : vector<2x8xf32>
    %49 = vector.multi_reduction <add>, %48, %cst_38 [2] : vector<2x8x16xf32> to vector<2x8xf32>
    %50 = vector.shape_cast %49 : vector<2x8xf32> to vector<2x8x1xf32>
    %cst_39 = arith.constant dense<0xFF800000> : vector<2x1xf32>
    %51 = vector.multi_reduction <maximumf>, %50, %cst_39 [1] : vector<2x8x1xf32> to vector<2x1xf32>
    %52 = vector.shape_cast %51 : vector<2x1xf32> to vector<2x1x1xf32>
    %53 = vector.broadcast %52 : vector<2x1x1xf32> to vector<2x8x1xf32>
    %54 = arith.subf %50, %53 : vector<2x8x1xf32>
    %55 = math.exp %54 : vector<2x8x1xf32>
    %cst_40 = arith.constant dense<0.000000e+00> : vector<2x1xf32>
    %56 = vector.multi_reduction <add>, %55, %cst_40 [1] : vector<2x8x1xf32> to vector<2x1xf32>
    %57 = vector.shape_cast %56 : vector<2x1xf32> to vector<2x1x1xf32>
    %58 = tpu.reciprocal %57 {approx = true} : vector<2x1x1xf32> -> vector<2x1x1xf32>
    %59 = vector.broadcast %58 : vector<2x1x1xf32> to vector<2x8x1xf32>
    %60 = arith.mulf %55, %59 : vector<2x8x1xf32>
    %61 = vector.broadcast %60 : vector<2x8x1xf32> to vector<2x8x32xf32>
    %62 = arith.mulf %61, %39 : vector<2x8x32xf32>
    %cst_41 = arith.constant dense<0.000000e+00> : vector<2x32xf32>
    %63 = vector.multi_reduction <add>, %62, %cst_41 [1] : vector<2x8x32xf32> to vector<2x32xf32>
    %c0_42 = arith.constant 0 : index
    %c0_43 = arith.constant 0 : index
    %64 = vector.load %arg12[%c0_42, %c0_43] : memref<1x32xf32, #tpu.memory_space<vmem>>, vector<1x32xf32>
    %65 = vector.broadcast %64 : vector<1x32xf32> to vector<2x32xf32>
    %66 = arith.mulf %63, %65 : vector<2x32xf32>
    %cst_44 = arith.constant dense<0.000000e+00> : vector<2xf32>
    %67 = vector.multi_reduction <add>, %66, %cst_44 [1] : vector<2x32xf32> to vector<2xf32>
    %68 = vector.shape_cast %67 : vector<2xf32> to vector<2x1xf32>
    %c0_45 = arith.constant 0 : index
    %c0_46 = arith.constant 0 : index
    %69 = vector.load %arg13[%c0_45, %c0_46] : memref<1x1xf32, #tpu.memory_space<vmem>>, vector<1x1xf32>
    %70 = vector.broadcast %69 : vector<1x1xf32> to vector<2x1xf32>
    %71 = arith.addf %68, %70 : vector<2x1xf32>
    %72 = vector.shape_cast %71 : vector<2x1xf32> to vector<2x1xf32>
    %73 = vector.broadcast %72 : vector<2x1xf32> to vector<2x128xf32>
    %c0_47 = arith.constant 0 : index
    %c0_48 = arith.constant 0 : index
    %74 = vector.load %arg14[%c0_47, %c0_48] : memref<2x128xf32, #tpu.memory_space<vmem>>, vector<2x128xf32>
    tpu.vector_store %arg14[%c0_47, %c0_48], %73 {strides = array<i32>} : memref<2x128xf32, #tpu.memory_space<vmem>>, vector<2x128xf32>,
    return
  }
  func.func @transform_0(%arg0: i32) -> (i32, i32, i32) {
    %c0_i32 = arith.constant 0 : i32
    %c0_i32_0 = arith.constant 0 : i32
    %c0_i32_1 = arith.constant 0 : i32
    %c0_i32_2 = arith.constant 0 : i32
    return %c0_i32, %c0_i32_0, %c0_i32_1 : i32, i32, i32
  }
  func.func @transform_1(%arg0: i32) -> (i32, i32, i32) {
    %c0_i32 = arith.constant 0 : i32
    %c0_i32_0 = arith.constant 0 : i32
    %c0_i32_1 = arith.constant 0 : i32
    %c0_i32_2 = arith.constant 0 : i32
    return %c0_i32, %c0_i32_0, %c0_i32_1 : i32, i32, i32
  }
  func.func @transform_2(%arg0: i32) -> (i32, i32, i32) {
    %c0_i32 = arith.constant 0 : i32
    %c0_i32_0 = arith.constant 0 : i32
    %c0_i32_1 = arith.constant 0 : i32
    %c0_i32_2 = arith.constant 0 : i32
    return %c0_i32, %c0_i32_0, %c0_i32_1 : i32, i32, i32
  }
  func.func @transform_3(%arg0: i32) -> (i32, i32, i32) {
    %c0_i32 = arith.constant 0 : i32
    %c0_i32_0 = arith.constant 0 : i32
    %c0_i32_1 = arith.constant 0 : i32
    %c0_i32_2 = arith.constant 0 : i32
    return %c0_i32, %c0_i32_0, %c0_i32_1 : i32, i32, i32
  }
  func.func @transform_4(%arg0: i32) -> (i32, i32, i32) {
    %c0_i32 = arith.constant 0 : i32
    %c0_i32_0 = arith.constant 0 : i32
    %c0_i32_1 = arith.constant 0 : i32
    %c0_i32_2 = arith.constant 0 : i32
    return %c0_i32, %c0_i32_0, %c0_i32_1 : i32, i32, i32
  }
  func.func @transform_5(%arg0: i32) -> (i32, i32, i32) {
    %c0_i32 = arith.constant 0 : i32
    %c0_i32_0 = arith.constant 0 : i32
    %c0_i32_1 = arith.constant 0 : i32
    %c0_i32_2 = arith.constant 0 : i32
    return %c0_i32, %c0_i32_0, %c0_i32_1 : i32, i32, i32
  }
  func.func @transform_6(%arg0: i32) -> (i32, i32, i32) {
    %c0_i32 = arith.constant 0 : i32
    %c0_i32_0 = arith.constant 0 : i32
    %c0_i32_1 = arith.constant 0 : i32
    %c0_i32_2 = arith.constant 0 : i32
    return %c0_i32, %c0_i32_0, %c0_i32_1 : i32, i32, i32
  }
  func.func @transform_7(%arg0: i32) -> (i32, i32, i32) {
    %c0_i32 = arith.constant 0 : i32
    %c0_i32_0 = arith.constant 0 : i32
    %c0_i32_1 = arith.constant 0 : i32
    %c0_i32_2 = arith.constant 0 : i32
    return %c0_i32, %c0_i32_0, %c0_i32_1 : i32, i32, i32
  }
  func.func @transform_8(%arg0: i32) -> (i32, i32) {
    %c0_i32 = arith.constant 0 : i32
    %c0_i32_0 = arith.constant 0 : i32
    %c0_i32_1 = arith.constant 0 : i32
    return %c0_i32, %c0_i32_0 : i32, i32
  }
  func.func @transform_9(%arg0: i32) -> (i32, i32) {
    %c0_i32 = arith.constant 0 : i32
    %c0_i32_0 = arith.constant 0 : i32
    %c0_i32_1 = arith.constant 0 : i32
    return %c0_i32, %c0_i32_0 : i32, i32
  }
  func.func @transform_10(%arg0: i32) -> (i32, i32) {
    %c0_i32 = arith.constant 0 : i32
    %c0_i32_0 = arith.constant 0 : i32
    %c0_i32_1 = arith.constant 0 : i32
    return %c0_i32, %c0_i32_0 : i32, i32
  }
  func.func @transform_11(%arg0: i32) -> (i32, i32) {
    %c0_i32 = arith.constant 0 : i32
    %c0_i32_0 = arith.constant 0 : i32
    %c0_i32_1 = arith.constant 0 : i32
    return %c0_i32, %c0_i32_0 : i32, i32
  }
  func.func @transform_12(%arg0: i32) -> (i32, i32) {
    %c0_i32 = arith.constant 0 : i32
    %c0_i32_0 = arith.constant 0 : i32
    %c0_i32_1 = arith.constant 0 : i32
    return %c0_i32, %c0_i32_0 : i32, i32
  }
  func.func @transform_13(%arg0: i32) -> (i32, i32) {
    %c0_i32 = arith.constant 0 : i32
    %c0_i32_0 = arith.constant 0 : i32
    %c0_i32_1 = arith.constant 0 : i32
    return %c0_i32, %c0_i32_0 : i32, i32
  }
}

</mosaic_0001>

<llo_original>
// kernel: tpu_custom_call.1
$region0: #{tpu_custom_call.1}
  #allocation0 [shape = 'u32[]', space=smem, size = 0x4, offset = 0x4, fixed_abs, tag = 'smem constant byte address 0x4 - core index']
  #allocation1 [shape = 'u32[144,128]{1,0:T(1,128)}', space=vmem, size = 0x12000, scoped, tag = 'internal scratch']
  #allocation2 [shape = 'f32[1,1]{1,0:T(1,128)S(1)}', space=vmem, size = 0x200, scoped, tag = 'scoped memory for tpu_custom_call.1']
  %s0 = inlined_call_operand.vmem [shape: f32[2,8,32], index: 0, kind: input, shape index: {}]
  %s1 = inlined_call_operand.vmem [shape: f32[8,32,8], index: 1, kind: input, shape index: {}]
  %s2 = inlined_call_operand.vmem [shape: f32[8,32,8], index: 2, kind: input, shape index: {}]
  %s3 = inlined_call_operand.vmem [shape: f32[8,32,8], index: 3, kind: input, shape index: {}]
  %s4 = inlined_call_operand.vmem [shape: f32[8,1,8], index: 4, kind: input, shape index: {}]
  %s5 = inlined_call_operand.vmem [shape: f32[8,1,8], index: 5, kind: input, shape index: {}]
  %s6 = inlined_call_operand.vmem [shape: f32[8,1,8], index: 6, kind: input, shape index: {}]
  %s7 = inlined_call_operand.vmem [shape: f32[8,8,32], index: 7, kind: input, shape index: {}]
  %s8 = inlined_call_operand.vmem [shape: f32[1,32], index: 8, kind: input, shape index: {}]
  %s9 = inlined_call_operand.vmem [shape: f32[32,16], index: 9, kind: input, shape index: {}]
  %s10 = inlined_call_operand.vmem [shape: f32[1,16], index: 10, kind: input, shape index: {}]
  %s11 = inlined_call_operand.vmem [shape: f32[1,32], index: 11, kind: input, shape index: {}]
  %s12 = inlined_call_operand.<no memory space> [shape: f32[1,1], index: 12, kind: input, shape index: {}]
  %s13 = inlined_call_operand.hbm [shape: f32[2,128], index: 13, kind: output, shape index: {}]
  %s14 = sld [smem:[#allocation0]]
  $region62: #{tpu_custom_call.1} parent=0
    _
  %s16 = ssub.s32 1, %s14
  %s17 = scalar_select 0, %s16, %s14
  %v18 = vstv %s12
  %19 = vst [vmem:[#allocation2] sm:$0x1] %v18
  $region1: #{tpu_custom_call.1} parent=0
    #allocation3 [shape = 'u8[1024]{0}', space=vmem, size = 0x400, scoped, tag = 'output window, operand 0, single buffered']
    #allocation4 [shape = 's32[1]{0}', space=sflag, size = 0x4, scoped, tag = 'scoped memory for tpu_custom_call.1']
    %20 = vsyncpa [#allocation4], 0
    // Predicated region
    $region2: #{tpu_custom_call.1} parent=1 // pred_check
      _
    $region3: #{tpu_custom_call.1} parent=1 // pred_check_branch
      %22 = sbr.rel (0) target = $region5
    $region4: #{tpu_custom_call.1} parent=1 // pred_region
      _
    $region5: #{tpu_custom_call.1} parent=1 // pred_fallthru
      _
    // Predicated region
    $region6: #{tpu_custom_call.1} parent=1 // pred_check
      _
    $region7: #{tpu_custom_call.1} parent=1 // pred_check_branch
      %24 = sbr.rel (0) target = $region9
    $region8: #{tpu_custom_call.1} parent=1 // pred_region
      _
    $region9: #{tpu_custom_call.1} parent=1 // pred_fallthru
      _
    // Predicated region
    $region10: #{tpu_custom_call.1} parent=1 // pred_check
      _
    $region11: #{tpu_custom_call.1} parent=1 // pred_check_branch
      %26 = sbr.rel (0) target = $region13
    $region12: #{tpu_custom_call.1} parent=1 // pred_region
      _
    $region13: #{tpu_custom_call.1} parent=1 // pred_fallthru
      _
    // Predicated region
    $region14: #{tpu_custom_call.1} parent=1 // pred_check
      _
    $region15: #{tpu_custom_call.1} parent=1 // pred_check_branch
      %28 = sbr.rel (0) target = $region17
    $region16: #{tpu_custom_call.1} parent=1 // pred_region
      _
    $region17: #{tpu_custom_call.1} parent=1 // pred_fallthru
      _
    // Predicated region
    $region18: #{tpu_custom_call.1} parent=1 // pred_check
      _
    $region19: #{tpu_custom_call.1} parent=1 // pred_check_branch
      %30 = sbr.rel (0) target = $region21
    $region20: #{tpu_custom_call.1} parent=1 // pred_region
      _
    $region21: #{tpu_custom_call.1} parent=1 // pred_fallthru
      _
    // Predicated region
    $region22: #{tpu_custom_call.1} parent=1 // pred_check
      _
    $region23: #{tpu_custom_call.1} parent=1 // pred_check_branch
      %32 = sbr.rel (0) target = $region25
    $region24: #{tpu_custom_call.1} parent=1 // pred_region
      _
    $region25: #{tpu_custom_call.1} parent=1 // pred_fallthru
      _
    // Predicated region
    $region26: #{tpu_custom_call.1} parent=1 // pred_check
      _
    $region27: #{tpu_custom_call.1} parent=1 // pred_check_branch
      %34 = sbr.rel (0) target = $region29
    $region28: #{tpu_custom_call.1} parent=1 // pred_region
      _
    $region29: #{tpu_custom_call.1} parent=1 // pred_fallthru
      _
    // Predicated region
    $region30: #{tpu_custom_call.1} parent=1 // pred_check
      _
    $region31: #{tpu_custom_call.1} parent=1 // pred_check_branch
      %36 = sbr.rel (0) target = $region33
    $region32: #{tpu_custom_call.1} parent=1 // pred_region
      _
    $region33: #{tpu_custom_call.1} parent=1 // pred_fallthru
      _
    // Predicated region
    $region34: #{tpu_custom_call.1} parent=1 // pred_check
      _
    $region35: #{tpu_custom_call.1} parent=1 // pred_check_branch
      %38 = sbr.rel (0) target = $region37
    $region36: #{tpu_custom_call.1} parent=1 // pred_region
      _
    $region37: #{tpu_custom_call.1} parent=1 // pred_fallthru
      _
    // Predicated region
    $region38: #{tpu_custom_call.1} parent=1 // pred_check
      _
    $region39: #{tpu_custom_call.1} parent=1 // pred_check_branch
      %40 = sbr.rel (0) target = $region41
    $region40: #{tpu_custom_call.1} parent=1 // pred_region
      _
    $region41: #{tpu_custom_call.1} parent=1 // pred_fallthru
      _
    // Predicated region
    $region42: #{tpu_custom_call.1} parent=1 // pred_check
      _
    $region43: #{tpu_custom_call.1} parent=1 // pred_check_branch
      %42 = sbr.rel (0) target = $region45
    $region44: #{tpu_custom_call.1} parent=1 // pred_region
      _
    $region45: #{tpu_custom_call.1} parent=1 // pred_fallthru
      _
    // Predicated region
    $region46: #{tpu_custom_call.1} parent=1 // pred_check
      _
    $region47: #{tpu_custom_call.1} parent=1 // pred_check_branch
      %44 = sbr.rel (0) target = $region49
    $region48: #{tpu_custom_call.1} parent=1 // pred_region
      _
    $region49: #{tpu_custom_call.1} parent=1 // pred_fallthru
      _
    // Predicated region
    $region50: #{tpu_custom_call.1} parent=1 // pred_check
      _
    $region51: #{tpu_custom_call.1} parent=1 // pred_check_branch
      %46 = sbr.rel (0) target = $region53
    $region52: #{tpu_custom_call.1} parent=1 // pred_region
      _
    $region53: #{tpu_custom_call.1} parent=1 // pred_fallthru
      _
    %v47 = vld [vmem:[%s0] sm:$0xff]
    %v48 = vld [vmem:[%s0 + $0x8] sm:$0xff]
    %v49 = vld [vmem:[%s1] sm:$0xff]
    %v50 = vld [vmem:[%s1 + $0x8] sm:$0xff]
    %v51 = vld [vmem:[%s1 + $0x10] sm:$0xff]
    %v52 = vld [vmem:[%s1 + $0x18] sm:$0xff]
    %v53 = vld [vmem:[%s1 + $0x20] sm:$0xff]
    %v54 = vld [vmem:[%s1 + $0x28] sm:$0xff]
    %v55 = vld [vmem:[%s1 + $0x30] sm:$0xff]
    %v56 = vld [vmem:[%s1 + $0x38] sm:$0xff]
    %v57 = vld [vmem:[%s1 + $0x40] sm:$0xff]
    %v58 = vld [vmem:[%s1 + $0x48] sm:$0xff]
    %v59 = vld [vmem:[%s1 + $0x50] sm:$0xff]
    %v60 = vld [vmem:[%s1 + $0x58] sm:$0xff]
    %v61 = vld [vmem:[%s1 + $0x60] sm:$0xff]
    %v62 = vld [vmem:[%s1 + $0x68] sm:$0xff]
    %v63 = vld [vmem:[%s1 + $0x70] sm:$0xff]
    %v64 = vld [vmem:[%s1 + $0x78] sm:$0xff]
    %v65 = vld [vmem:[%s1 + $0x80] sm:$0xff]
    %v66 = vld [vmem:[%s1 + $0x88] sm:$0xff]
    %v67 = vld [vmem:[%s1 + $0x90] sm:$0xff]
    %v68 = vld [vmem:[%s1 + $0x98] sm:$0xff]
    %v69 = vld [vmem:[%s1 + $0xa0] sm:$0xff]
    %v70 = vld [vmem:[%s1 + $0xa8] sm:$0xff]
    %v71 = vld [vmem:[%s1 + $0xb0] sm:$0xff]
    %v72 = vld [vmem:[%s1 + $0xb8] sm:$0xff]
    %v73 = vld [vmem:[%s1 + $0xc0] sm:$0xff]
    %v74 = vld [vmem:[%s1 + $0xc8] sm:$0xff]
    %v75 = vld [vmem:[%s1 + $0xd0] sm:$0xff]
    %v76 = vld [vmem:[%s1 + $0xd8] sm:$0xff]
    %v77 = vld [vmem:[%s1 + $0xe0] sm:$0xff]
    %v78 = vld [vmem:[%s1 + $0xe8] sm:$0xff]
    %v79 = vld [vmem:[%s1 + $0xf0] sm:$0xff]
    %v80 = vld [vmem:[%s1 + $0xf8] sm:$0xff]
    %v81 = vld [vmem:[%s4] sm:$0x1]
    %v82 = vld [vmem:[%s4 + $0x1] sm:$0x1]
    %v83 = vld [vmem:[%s4 + $0x2] sm:$0x1]
    %v84 = vld [vmem:[%s4 + $0x3] sm:$0x1]
    %v85 = vld [vmem:[%s4 + $0x4] sm:$0x1]
    %v86 = vld [vmem:[%s4 + $0x5] sm:$0x1]
    %v87 = vld [vmem:[%s4 + $0x6] sm:$0x1]
    %v88 = vld [vmem:[%s4 + $0x7] sm:$0x1]
    %v97 = vlaneseq
    %v98 = vshrl.u32 %v97, 7
    %v99 = vsub.s32 0, %v98
    %v100 = vrot.slane %v81, %v99
    %v101 = vlaneseq
    %v102 = vshrl.u32 %v101, 7
    %v103 = vsub.s32 0, %v102
    %v104 = vrot.slane %v82, %v103
    %v105 = vlaneseq
    %v106 = vshrl.u32 %v105, 7
    %v107 = vsub.s32 0, %v106
    %v108 = vrot.slane %v83, %v107
    %v109 = vlaneseq
    %v110 = vshrl.u32 %v109, 7
    %v111 = vsub.s32 0, %v110
    %v112 = vrot.slane %v84, %v111
    %v113 = vlaneseq
    %v114 = vshrl.u32 %v113, 7
    %v115 = vsub.s32 0, %v114
    %v116 = vrot.slane %v85, %v115
    %v117 = vlaneseq
    %v118 = vshrl.u32 %v117, 7
    %v119 = vsub.s32 0, %v118
    %v120 = vrot.slane %v86, %v119
    %v121 = vlaneseq
    %v122 = vshrl.u32 %v121, 7
    %v123 = vsub.s32 0, %v122
    %v124 = vrot.slane %v87, %v123
    %v125 = vlaneseq
    %v126 = vshrl.u32 %v125, 7
    %v127 = vsub.s32 0, %v126
    %v128 = vrot.slane %v88, %v127
    %vm137 = vcmask 261120
    %v139 = vsel %vm137, %v47, 0
    %141 = vmatprep.subr.mxu0 0.0
    %142 = vmatpush1.msra.mxu0 %v49
    %143 = vmatprep.subr.mxu0 0.0
    %144 = vmatpush1.msra.mxu0 %v50
    %145 = vmatprep.subr.mxu0 0.0
    %146 = vmatpush1.msra.mxu0 %v51
    %147 = vmatprep.subr.mxu0 0.0
    %148 = vmatpush1.msra.mxu0 %v52
    %149 = vmatprep.subr.mxu0 0.0
    %150 = vmatpush1.msra.mxu0 0.0
    %151 = vmatprep.subr.mxu0 0.0
    %152 = vmatpush1.msra.mxu0 0.0
    %153 = vmatprep.subr.mxu0 0.0
    %154 = vmatpush1.msra.mxu0 0.0
    %155 = vmatprep.subr.mxu0 0.0
    %156 = vmatpush1.msra.mxu0 0.0
    %157 = vmatprep.subr.mxu0 0.0
    %158 = vmatpush1.msra.mxu0 0.0
    %159 = vmatprep.subr.mxu0 0.0
    %160 = vmatpush1.msra.mxu0 0.0
    %161 = vmatprep.subr.mxu0 0.0
    %162 = vmatpush1.msra.mxu0 0.0
    %163 = vmatprep.subr.mxu0 0.0
    %164 = vmatpush1.msra.mxu0 0.0
    %165 = vmatprep.subr.mxu0 0.0
    %166 = vmatpush1.msra.mxu0 0.0
    %167 = vmatprep.subr.mxu0 0.0
    %168 = vmatpush1.msra.mxu0 0.0
    %169 = vmatprep.subr.mxu0 0.0
    %170 = vmatpush1.msra.mxu0 0.0
    %171 = vmatprep.subr.mxu0 0.0
    %172 = vmatpush1.msra.mxu0 0.0
    %173 = vmatprep.subr.mxu0 0.0
    %174 = vmatpush1.msra.mxu0 0.0
    %175 = vmatprep.subr.mxu0 0.0
    %176 = vmatpush1.msra.mxu0 0.0
    %177 = vmatprep.subr.mxu0 0.0
    %178 = vmatpush1.msra.mxu0 0.0
    %179 = vmatprep.subr.mxu0 0.0
    %180 = vmatpush1.msra.mxu0 0.0
    %181 = vmatprep.subr.mxu0 0.0
    %182 = vmatpush1.msra.mxu0 0.0
    %183 = vmatprep.subr.mxu0 0.0
    %184 = vmatpush1.msra.mxu0 0.0
    %185 = vmatprep.subr.mxu0 0.0
    %186 = vmatpush1.msra.mxu0 0.0
    %187 = vmatprep.subr.mxu0 0.0
    %188 = vmatpush1.msra.mxu0 0.0
    %189 = vmatprep.subr.mxu0 0.0
    %190 = vmatpush1.msra.mxu0 0.0
    %191 = vmatprep.subr.mxu0 0.0
    %192 = vmatpush1.msra.mxu0 0.0
    %193 = vmatprep.subr.mxu0 0.0
    %194 = vmatpush1.msra.mxu0 0.0
    %195 = vmatprep.subr.mxu0 0.0
    %196 = vmatpush1.msra.mxu0 0.0
    %197 = vmatprep.subr.mxu0 0.0
    %198 = vmatpush1.msra.mxu0 0.0
    %199 = vmatprep.subr.mxu0 0.0
    %200 = vmatpush1.msra.mxu0 0.0
    %201 = vmatprep.subr.mxu0 0.0
    %202 = vmatpush1.msra.mxu0 0.0
    %203 = vmatprep.subr.mxu0 0.0
    %204 = vmatpush1.msra.mxu0 0.0
    %205 = vmatprep.mubr.f32.mxu0 0.0
    %206 = vmatmul.mubr.f32.gmra.mrb[0].mxu0 %v139
    %v207 = vpop.f32.mrb[0].mxu0
    %v208 = vadd.f32 %v100, %v207
    %v209 = vpop.f32.mrb[0].mxu0
    %210 = vdwg.mxu0
    %v212 = vsel %vm137, %v48, 0
    %214 = vmatprep.subr.mxu0 0.0
    %215 = vmatpush1.msra.mxu0 %v53
    %216 = vmatprep.subr.mxu0 0.0
    %217 = vmatpush1.msra.mxu0 %v54
    %218 = vmatprep.subr.mxu0 0.0
    %219 = vmatpush1.msra.mxu0 %v55
    %220 = vmatprep.subr.mxu0 0.0
    %221 = vmatpush1.msra.mxu0 %v56
    %222 = vmatprep.subr.mxu0 0.0
    %223 = vmatpush1.msra.mxu0 0.0
    %224 = vmatprep.subr.mxu0 0.0
    %225 = vmatpush1.msra.mxu0 0.0
    %226 = vmatprep.subr.mxu0 0.0
    %227 = vmatpush1.msra.mxu0 0.0
    %228 = vmatprep.subr.mxu0 0.0
    %229 = vmatpush1.msra.mxu0 0.0
    %230 = vmatprep.subr.mxu0 0.0
    %231 = vmatpush1.msra.mxu0 0.0
    %232 = vmatprep.subr.mxu0 0.0
    %233 = vmatpush1.msra.mxu0 0.0
    %234 = vmatprep.subr.mxu0 0.0
    %235 = vmatpush1.msra.mxu0 0.0
    %236 = vmatprep.subr.mxu0 0.0
    %237 = vmatpush1.msra.mxu0 0.0
    %238 = vmatprep.subr.mxu0 0.0
    %239 = vmatpush1.msra.mxu0 0.0
    %240 = vmatprep.subr.mxu0 0.0
    %241 = vmatpush1.msra.mxu0 0.0
    %242 = vmatprep.subr.mxu0 0.0
    %243 = vmatpush1.msra.mxu0 0.0
    %244 = vmatprep.subr.mxu0 0.0
    %245 = vmatpush1.msra.mxu0 0.0
    %246 = vmatprep.subr.mxu0 0.0
    %247 = vmatpush1.msra.mxu0 0.0
    %248 = vmatprep.subr.mxu0 0.0
    %249 = vmatpush1.msra.mxu0 0.0
    %250 = vmatprep.subr.mxu0 0.0
    %251 = vmatpush1.msra.mxu0 0.0
    %252 = vmatprep.subr.mxu0 0.0
    %253 = vmatpush1.msra.mxu0 0.0
    %254 = vmatprep.subr.mxu0 0.0
    %255 = vmatpush1.msra.mxu0 0.0
    %256 = vmatprep.subr.mxu0 0.0
    %257 = vmatpush1.msra.mxu0 0.0
    %258 = vmatprep.subr.mxu0 0.0
    %259 = vmatpush1.msra.mxu0 0.0
    %260 = vmatprep.subr.mxu0 0.0
    %261 = vmatpush1.msra.mxu0 0.0
    %262 = vmatprep.subr.mxu0 0.0
    %263 = vmatpush1.msra.mxu0 0.0
    %264 = vmatprep.subr.mxu0 0.0
    %265 = vmatpush1.msra.mxu0 0.0
    %266 = vmatprep.subr.mxu0 0.0
    %267 = vmatpush1.msra.mxu0 0.0
    %268 = vmatprep.subr.mxu0 0.0
    %269 = vmatpush1.msra.mxu0 0.0
    %270 = vmatprep.subr.mxu0 0.0
    %271 = vmatpush1.msra.mxu0 0.0
    %272 = vmatprep.subr.mxu0 0.0
    %273 = vmatpush1.msra.mxu0 0.0
    %274 = vmatprep.subr.mxu0 0.0
    %275 = vmatpush1.msra.mxu0 0.0
    %276 = vmatprep.subr.mxu0 0.0
    %277 = vmatpush1.msra.mxu0 0.0
    %278 = vmatprep.mubr.f32.mxu0 0.0
    %279 = vmatmul.mubr.f32.gmra.mrb[0].mxu0 %v212
    %v280 = vpop.f32.mrb[0].mxu0
    %v281 = vadd.f32 %v104, %v280
    %v282 = vpop.f32.mrb[0].mxu0
    %283 = vdwg.mxu0
    %284 = vmatprep.subr.mxu0 0.0
    %285 = vmatpush1.msra.mxu0 %v57
    %286 = vmatprep.subr.mxu0 0.0
    %287 = vmatpush1.msra.mxu0 %v58
    %288 = vmatprep.subr.mxu0 0.0
    %289 = vmatpush1.msra.mxu0 %v59
    %290 = vmatprep.subr.mxu0 0.0
    %291 = vmatpush1.msra.mxu0 %v60
    %292 = vmatprep.subr.mxu0 0.0
    %293 = vmatpush1.msra.mxu0 0.0
    %294 = vmatprep.subr.mxu0 0.0
    %295 = vmatpush1.msra.mxu0 0.0
    %296 = vmatprep.subr.mxu0 0.0
    %297 = vmatpush1.msra.mxu0 0.0
    %298 = vmatprep.subr.mxu0 0.0
    %299 = vmatpush1.msra.mxu0 0.0
    %300 = vmatprep.subr.mxu0 0.0
    %301 = vmatpush1.msra.mxu0 0.0
    %302 = vmatprep.subr.mxu0 0.0
    %303 = vmatpush1.msra.mxu0 0.0
    %304 = vmatprep.subr.mxu0 0.0
    %305 = vmatpush1.msra.mxu0 0.0
    %306 = vmatprep.subr.mxu0 0.0
    %307 = vmatpush1.msra.mxu0 0.0
    %308 = vmatprep.subr.mxu0 0.0
    %309 = vmatpush1.msra.mxu0 0.0
    %310 = vmatprep.subr.mxu0 0.0
    %311 = vmatpush1.msra.mxu0 0.0
    %312 = vmatprep.subr.mxu0 0.0
    %313 = vmatpush1.msra.mxu0 0.0
    %314 = vmatprep.subr.mxu0 0.0
    %315 = vmatpush1.msra.mxu0 0.0
    %316 = vmatprep.subr.mxu0 0.0
    %317 = vmatpush1.msra.mxu0 0.0
    %318 = vmatprep.subr.mxu0 0.0
    %319 = vmatpush1.msra.mxu0 0.0
    %320 = vmatprep.subr.mxu0 0.0
    %321 = vmatpush1.msra.mxu0 0.0
    %322 = vmatprep.subr.mxu0 0.0
    %323 = vmatpush1.msra.mxu0 0.0
    %324 = vmatprep.subr.mxu0 0.0
    %325 = vmatpush1.msra.mxu0 0.0
    %326 = vmatprep.subr.mxu0 0.0
    %327 = vmatpush1.msra.mxu0 0.0
    %328 = vmatprep.subr.mxu0 0.0
    %329 = vmatpush1.msra.mxu0 0.0
    %330 = vmatprep.subr.mxu0 0.0
    %331 = vmatpush1.msra.mxu0 0.0
    %332 = vmatprep.subr.mxu0 0.0
    %333 = vmatpush1.msra.mxu0 0.0
    %334 = vmatprep.subr.mxu0 0.0
    %335 = vmatpush1.msra.mxu0 0.0
    %336 = vmatprep.subr.mxu0 0.0
    %337 = vmatpush1.msra.mxu0 0.0
    %338 = vmatprep.subr.mxu0 0.0
    %339 = vmatpush1.msra.mxu0 0.0
    %340 = vmatprep.subr.mxu0 0.0
    %341 = vmatpush1.msra.mxu0 0.0
    %342 = vmatprep.subr.mxu0 0.0
    %343 = vmatpush1.msra.mxu0 0.0
    %344 = vmatprep.subr.mxu0 0.0
    %345 = vmatpush1.msra.mxu0 0.0
    %346 = vmatprep.subr.mxu0 0.0
    %347 = vmatpush1.msra.mxu0 0.0
    %348 = vmatprep.mubr.f32.mxu0 0.0
    %349 = vmatmul.mubr.f32.gmra.mrb[0].mxu0 %v139
    %v350 = vpop.f32.mrb[0].mxu0
    %v351 = vadd.f32 %v108, %v350
    %v352 = vpop.f32.mrb[0].mxu0
    %353 = vdwg.mxu0
    %354 = vmatprep.subr.mxu0 0.0
    %355 = vmatpush1.msra.mxu0 %v61
    %356 = vmatprep.subr.mxu0 0.0
    %357 = vmatpush1.msra.mxu0 %v62
    %358 = vmatprep.subr.mxu0 0.0
    %359 = vmatpush1.msra.mxu0 %v63
    %360 = vmatprep.subr.mxu0 0.0
    %361 = vmatpush1.msra.mxu0 %v64
    %362 = vmatprep.subr.mxu0 0.0
    %363 = vmatpush1.msra.mxu0 0.0
    %364 = vmatprep.subr.mxu0 0.0
    %365 = vmatpush1.msra.mxu0 0.0
    %366 = vmatprep.subr.mxu0 0.0
    %367 = vmatpush1.msra.mxu0 0.0
    %368 = vmatprep.subr.mxu0 0.0
    %369 = vmatpush1.msra.mxu0 0.0
    %370 = vmatprep.subr.mxu0 0.0
    %371 = vmatpush1.msra.mxu0 0.0
    %372 = vmatprep.subr.mxu0 0.0
    %373 = vmatpush1.msra.mxu0 0.0
    %374 = vmatprep.subr.mxu0 0.0
    %375 = vmatpush1.msra.mxu0 0.0
    %376 = vmatprep.subr.mxu0 0.0
    %377 = vmatpush1.msra.mxu0 0.0
    %378 = vmatprep.subr.mxu0 0.0
    %379 = vmatpush1.msra.mxu0 0.0
    %380 = vmatprep.subr.mxu0 0.0
    %381 = vmatpush1.msra.mxu0 0.0
    %382 = vmatprep.subr.mxu0 0.0
    %383 = vmatpush1.msra.mxu0 0.0
    %384 = vmatprep.subr.mxu0 0.0
    %385 = vmatpush1.msra.mxu0 0.0
    %386 = vmatprep.subr.mxu0 0.0
    %387 = vmatpush1.msra.mxu0 0.0
    %388 = vmatprep.subr.mxu0 0.0
    %389 = vmatpush1.msra.mxu0 0.0
    %390 = vmatprep.subr.mxu0 0.0
    %391 = vmatpush1.msra.mxu0 0.0
    %392 = vmatprep.subr.mxu0 0.0
    %393 = vmatpush1.msra.mxu0 0.0
    %394 = vmatprep.subr.mxu0 0.0
    %395 = vmatpush1.msra.mxu0 0.0
    %396 = vmatprep.subr.mxu0 0.0
    %397 = vmatpush1.msra.mxu0 0.0
    %398 = vmatprep.subr.mxu0 0.0
    %399 = vmatpush1.msra.mxu0 0.0
    %400 = vmatprep.subr.mxu0 0.0
    %401 = vmatpush1.msra.mxu0 0.0
    %402 = vmatprep.subr.mxu0 0.0
    %403 = vmatpush1.msra.mxu0 0.0
    %404 = vmatprep.subr.mxu0 0.0
    %405 = vmatpush1.msra.mxu0 0.0
    %406 = vmatprep.subr.mxu0 0.0
    %407 = vmatpush1.msra.mxu0 0.0
    %408 = vmatprep.subr.mxu0 0.0
    %409 = vmatpush1.msra.mxu0 0.0
    %410 = vmatprep.subr.mxu0 0.0
    %411 = vmatpush1.msra.mxu0 0.0
    %412 = vmatprep.subr.mxu0 0.0
    %413 = vmatpush1.msra.mxu0 0.0
    %414 = vmatprep.subr.mxu0 0.0
    %415 = vmatpush1.msra.mxu0 0.0
    %416 = vmatprep.subr.mxu0 0.0
    %417 = vmatpush1.msra.mxu0 0.0
    %418 = vmatprep.mubr.f32.mxu0 0.0
    %419 = vmatmul.mubr.f32.gmra.mrb[0].mxu0 %v212
    %v420 = vpop.f32.mrb[0].mxu0
    %v421 = vadd.f32 %v112, %v420
    %v422 = vpop.f32.mrb[0].mxu0
    %423 = vdwg.mxu0
    %424 = vmatprep.subr.mxu0 0.0
    %425 = vmatpush1.msra.mxu0 %v65
    %426 = vmatprep.subr.mxu0 0.0
    %427 = vmatpush1.msra.mxu0 %v66
    %428 = vmatprep.subr.mxu0 0.0
    %429 = vmatpush1.msra.mxu0 %v67
    %430 = vmatprep.subr.mxu0 0.0
    %431 = vmatpush1.msra.mxu0 %v68
    %432 = vmatprep.subr.mxu0 0.0
    %433 = vmatpush1.msra.mxu0 0.0
    %434 = vmatprep.subr.mxu0 0.0
    %435 = vmatpush1.msra.mxu0 0.0
    %436 = vmatprep.subr.mxu0 0.0
    %437 = vmatpush1.msra.mxu0 0.0
    %438 = vmatprep.subr.mxu0 0.0
    %439 = vmatpush1.msra.mxu0 0.0
    %440 = vmatprep.subr.mxu0 0.0
    %441 = vmatpush1.msra.mxu0 0.0
    %442 = vmatprep.subr.mxu0 0.0
    %443 = vmatpush1.msra.mxu0 0.0
    %444 = vmatprep.subr.mxu0 0.0
    %445 = vmatpush1.msra.mxu0 0.0
    %446 = vmatprep.subr.mxu0 0.0
    %447 = vmatpush1.msra.mxu0 0.0
    %448 = vmatprep.subr.mxu0 0.0
    %449 = vmatpush1.msra.mxu0 0.0
    %450 = vmatprep.subr.mxu0 0.0
    %451 = vmatpush1.msra.mxu0 0.0
    %452 = vmatprep.subr.mxu0 0.0
    %453 = vmatpush1.msra.mxu0 0.0
    %454 = vmatprep.subr.mxu0 0.0
    %455 = vmatpush1.msra.mxu0 0.0
    %456 = vmatprep.subr.mxu0 0.0
    %457 = vmatpush1.msra.mxu0 0.0
    %458 = vmatprep.subr.mxu0 0.0
    %459 = vmatpush1.msra.mxu0 0.0
    %460 = vmatprep.subr.mxu0 0.0
    %461 = vmatpush1.msra.mxu0 0.0
    %462 = vmatprep.subr.mxu0 0.0
    %463 = vmatpush1.msra.mxu0 0.0
    %464 = vmatprep.subr.mxu0 0.0
    %465 = vmatpush1.msra.mxu0 0.0
    %466 = vmatprep.subr.mxu0 0.0
    %467 = vmatpush1.msra.mxu0 0.0
    %468 = vmatprep.subr.mxu0 0.0
    %469 = vmatpush1.msra.mxu0 0.0
    %470 = vmatprep.subr.mxu0 0.0
    %471 = vmatpush1.msra.mxu0 0.0
    %472 = vmatprep.subr.mxu0 0.0
    %473 = vmatpush1.msra.mxu0 0.0
    %474 = vmatprep.subr.mxu0 0.0
    %475 = vmatpush1.msra.mxu0 0.0
    %476 = vmatprep.subr.mxu0 0.0
    %477 = vmatpush1.msra.mxu0 0.0
    %478 = vmatprep.subr.mxu0 0.0
    %479 = vmatpush1.msra.mxu0 0.0
    %480 = vmatprep.subr.mxu0 0.0
    %481 = vmatpush1.msra.mxu0 0.0
    %482 = vmatprep.subr.mxu0 0.0
    %483 = vmatpush1.msra.mxu0 0.0
    %484 = vmatprep.subr.mxu0 0.0
    %485 = vmatpush1.msra.mxu0 0.0
    %486 = vmatprep.subr.mxu0 0.0
    %487 = vmatpush1.msra.mxu0 0.0
    %488 = vmatprep.mubr.f32.mxu0 0.0
    %489 = vmatmul.mubr.f32.gmra.mrb[0].mxu0 %v139
    %v490 = vpop.f32.mrb[0].mxu0
    %v491 = vadd.f32 %v116, %v490
    %v492 = vpop.f32.mrb[0].mxu0
    %493 = vdwg.mxu0
    %494 = vmatprep.subr.mxu0 0.0
    %495 = vmatpush1.msra.mxu0 %v69
    %496 = vmatprep.subr.mxu0 0.0
    %497 = vmatpush1.msra.mxu0 %v70
    %498 = vmatprep.subr.mxu0 0.0
    %499 = vmatpush1.msra.mxu0 %v71
    %500 = vmatprep.subr.mxu0 0.0
    %501 = vmatpush1.msra.mxu0 %v72
    %502 = vmatprep.subr.mxu0 0.0
    %503 = vmatpush1.msra.mxu0 0.0
    %504 = vmatprep.subr.mxu0 0.0
    %505 = vmatpush1.msra.mxu0 0.0
    %506 = vmatprep.subr.mxu0 0.0
    %507 = vmatpush1.msra.mxu0 0.0
    %508 = vmatprep.subr.mxu0 0.0
    %509 = vmatpush1.msra.mxu0 0.0
    %510 = vmatprep.subr.mxu0 0.0
    %511 = vmatpush1.msra.mxu0 0.0
    %512 = vmatprep.subr.mxu0 0.0
    %513 = vmatpush1.msra.mxu0 0.0
    %514 = vmatprep.subr.mxu0 0.0
    %515 = vmatpush1.msra.mxu0 0.0
    %516 = vmatprep.subr.mxu0 0.0
    %517 = vmatpush1.msra.mxu0 0.0
    %518 = vmatprep.subr.mxu0 0.0
    %519 = vmatpush1.msra.mxu0 0.0
    %520 = vmatprep.subr.mxu0 0.0
    %521 = vmatpush1.msra.mxu0 0.0
    %522 = vmatprep.subr.mxu0 0.0
    %523 = vmatpush1.msra.mxu0 0.0
    %524 = vmatprep.subr.mxu0 0.0
    %525 = vmatpush1.msra.mxu0 0.0
    %526 = vmatprep.subr.mxu0 0.0
    %527 = vmatpush1.msra.mxu0 0.0
    %528 = vmatprep.subr.mxu0 0.0
    %529 = vmatpush1.msra.mxu0 0.0
    %530 = vmatprep.subr.mxu0 0.0
    %531 = vmatpush1.msra.mxu0 0.0
    %532 = vmatprep.subr.mxu0 0.0
    %533 = vmatpush1.msra.mxu0 0.0
    %534 = vmatprep.subr.mxu0 0.0
    %535 = vmatpush1.msra.mxu0 0.0
    %536 = vmatprep.subr.mxu0 0.0
    %537 = vmatpush1.msra.mxu0 0.0
    %538 = vmatprep.subr.mxu0 0.0
    %539 = vmatpush1.msra.mxu0 0.0
    %540 = vmatprep.subr.mxu0 0.0
    %541 = vmatpush1.msra.mxu0 0.0
    %542 = vmatprep.subr.mxu0 0.0
    %543 = vmatpush1.msra.mxu0 0.0
    %544 = vmatprep.subr.mxu0 0.0
    %545 = vmatpush1.msra.mxu0 0.0
    %546 = vmatprep.subr.mxu0 0.0
    %547 = vmatpush1.msra.mxu0 0.0
    %548 = vmatprep.subr.mxu0 0.0
    %549 = vmatpush1.msra.mxu0 0.0
    %550 = vmatprep.subr.mxu0 0.0
    %551 = vmatpush1.msra.mxu0 0.0
    %552 = vmatprep.subr.mxu0 0.0
    %553 = vmatpush1.msra.mxu0 0.0
    %554 = vmatprep.subr.mxu0 0.0
    %555 = vmatpush1.msra.mxu0 0.0
    %556 = vmatprep.subr.mxu0 0.0
    %557 = vmatpush1.msra.mxu0 0.0
    %558 = vmatprep.mubr.f32.mxu0 0.0
    %559 = vmatmul.mubr.f32.gmra.mrb[0].mxu0 %v212
    %v560 = vpop.f32.mrb[0].mxu0
    %v561 = vadd.f32 %v120, %v560
    %v562 = vpop.f32.mrb[0].mxu0
    %563 = vdwg.mxu0
    %564 = vmatprep.subr.mxu0 0.0
    %565 = vmatpush1.msra.mxu0 %v73
    %566 = vmatprep.subr.mxu0 0.0
    %567 = vmatpush1.msra.mxu0 %v74
    %568 = vmatprep.subr.mxu0 0.0
    %569 = vmatpush1.msra.mxu0 %v75
    %570 = vmatprep.subr.mxu0 0.0
    %571 = vmatpush1.msra.mxu0 %v76
    %572 = vmatprep.subr.mxu0 0.0
    %573 = vmatpush1.msra.mxu0 0.0
    %574 = vmatprep.subr.mxu0 0.0
    %575 = vmatpush1.msra.mxu0 0.0
    %576 = vmatprep.subr.mxu0 0.0
    %577 = vmatpush1.msra.mxu0 0.0
    %578 = vmatprep.subr.mxu0 0.0
    %579 = vmatpush1.msra.mxu0 0.0
    %580 = vmatprep.subr.mxu0 0.0
    %581 = vmatpush1.msra.mxu0 0.0
    %582 = vmatprep.subr.mxu0 0.0
    %583 = vmatpush1.msra.mxu0 0.0
    %584 = vmatprep.subr.mxu0 0.0
    %585 = vmatpush1.msra.mxu0 0.0
    %586 = vmatprep.subr.mxu0 0.0
    %587 = vmatpush1.msra.mxu0 0.0
    %588 = vmatprep.subr.mxu0 0.0
    %589 = vmatpush1.msra.mxu0 0.0
    %590 = vmatprep.subr.mxu0 0.0
    %591 = vmatpush1.msra.mxu0 0.0
    %592 = vmatprep.subr.mxu0 0.0
    %593 = vmatpush1.msra.mxu0 0.0
    %594 = vmatprep.subr.mxu0 0.0
    %595 = vmatpush1.msra.mxu0 0.0
    %596 = vmatprep.subr.mxu0 0.0
    %597 = vmatpush1.msra.mxu0 0.0
    %598 = vmatprep.subr.mxu0 0.0
    %599 = vmatpush1.msra.mxu0 0.0
    %600 = vmatprep.subr.mxu0 0.0
    %601 = vmatpush1.msra.mxu0 0.0
    %602 = vmatprep.subr.mxu0 0.0
    %603 = vmatpush1.msra.mxu0 0.0
    %604 = vmatprep.subr.mxu0 0.0
    %605 = vmatpush1.msra.mxu0 0.0
    %606 = vmatprep.subr.mxu0 0.0
    %607 = vmatpush1.msra.mxu0 0.0
    %608 = vmatprep.subr.mxu0 0.0
    %609 = vmatpush1.msra.mxu0 0.0
    %610 = vmatprep.subr.mxu0 0.0
    %611 = vmatpush1.msra.mxu0 0.0
    %612 = vmatprep.subr.mxu0 0.0
    %613 = vmatpush1.msra.mxu0 0.0
    %614 = vmatprep.subr.mxu0 0.0
    %615 = vmatpush1.msra.mxu0 0.0
    %616 = vmatprep.subr.mxu0 0.0
    %617 = vmatpush1.msra.mxu0 0.0
    %618 = vmatprep.subr.mxu0 0.0
    %619 = vmatpush1.msra.mxu0 0.0
    %620 = vmatprep.subr.mxu0 0.0
    %621 = vmatpush1.msra.mxu0 0.0
    %622 = vmatprep.subr.mxu0 0.0
    %623 = vmatpush1.msra.mxu0 0.0
    %624 = vmatprep.subr.mxu0 0.0
    %625 = vmatpush1.msra.mxu0 0.0
    %626 = vmatprep.subr.mxu0 0.0
    %627 = vmatpush1.msra.mxu0 0.0
    %628 = vmatprep.mubr.f32.mxu0 0.0
    %629 = vmatmul.mubr.f32.gmra.mrb[0].mxu0 %v139
    %v630 = vpop.f32.mrb[0].mxu0
    %v631 = vadd.f32 %v124, %v630
    %v632 = vpop.f32.mrb[0].mxu0
    %633 = vdwg.mxu0
    %634 = vmatprep.subr.mxu0 0.0
    %635 = vmatpush1.msra.mxu0 %v77
    %636 = vmatprep.subr.mxu0 0.0
    %637 = vmatpush1.msra.mxu0 %v78
    %638 = vmatprep.subr.mxu0 0.0
    %639 = vmatpush1.msra.mxu0 %v79
    %640 = vmatprep.subr.mxu0 0.0
    %641 = vmatpush1.msra.mxu0 %v80
    %642 = vmatprep.subr.mxu0 0.0
    %643 = vmatpush1.msra.mxu0 0.0
    %644 = vmatprep.subr.mxu0 0.0
    %645 = vmatpush1.msra.mxu0 0.0
    %646 = vmatprep.subr.mxu0 0.0
    %647 = vmatpush1.msra.mxu0 0.0
    %648 = vmatprep.subr.mxu0 0.0
    %649 = vmatpush1.msra.mxu0 0.0
    %650 = vmatprep.subr.mxu0 0.0
    %651 = vmatpush1.msra.mxu0 0.0
    %652 = vmatprep.subr.mxu0 0.0
    %653 = vmatpush1.msra.mxu0 0.0
    %654 = vmatprep.subr.mxu0 0.0
    %655 = vmatpush1.msra.mxu0 0.0
    %656 = vmatprep.subr.mxu0 0.0
    %657 = vmatpush1.msra.mxu0 0.0
    %658 = vmatprep.subr.mxu0 0.0
    %659 = vmatpush1.msra.mxu0 0.0
    %660 = vmatprep.subr.mxu0 0.0
    %661 = vmatpush1.msra.mxu0 0.0
    %662 = vmatprep.subr.mxu0 0.0
    %663 = vmatpush1.msra.mxu0 0.0
    %664 = vmatprep.subr.mxu0 0.0
    %665 = vmatpush1.msra.mxu0 0.0
    %666 = vmatprep.subr.mxu0 0.0
    %667 = vmatpush1.msra.mxu0 0.0
    %668 = vmatprep.subr.mxu0 0.0
    %669 = vmatpush1.msra.mxu0 0.0
    %670 = vmatprep.subr.mxu0 0.0
    %671 = vmatpush1.msra.mxu0 0.0
    %672 = vmatprep.subr.mxu0 0.0
    %673 = vmatpush1.msra.mxu0 0.0
    %674 = vmatprep.subr.mxu0 0.0
    %675 = vmatpush1.msra.mxu0 0.0
    %676 = vmatprep.subr.mxu0 0.0
    %677 = vmatpush1.msra.mxu0 0.0
    %678 = vmatprep.subr.mxu0 0.0
    %679 = vmatpush1.msra.mxu0 0.0
    %680 = vmatprep.subr.mxu0 0.0
    %681 = vmatpush1.msra.mxu0 0.0
    %682 = vmatprep.subr.mxu0 0.0
    %683 = vmatpush1.msra.mxu0 0.0
    %684 = vmatprep.subr.mxu0 0.0
    %685 = vmatpush1.msra.mxu0 0.0
    %686 = vmatprep.subr.mxu0 0.0
    %687 = vmatpush1.msra.mxu0 0.0
    %688 = vmatprep.subr.mxu0 0.0
    %689 = vmatpush1.msra.mxu0 0.0
    %690 = vmatprep.subr.mxu0 0.0
    %691 = vmatpush1.msra.mxu0 0.0
    %692 = vmatprep.subr.mxu0 0.0
    %693 = vmatpush1.msra.mxu0 0.0
    %694 = vmatprep.subr.mxu0 0.0
    %695 = vmatpush1.msra.mxu0 0.0
    %696 = vmatprep.subr.mxu0 0.0
    %697 = vmatpush1.msra.mxu0 0.0
    %698 = vmatprep.mubr.f32.mxu0 0.0
    %699 = vmatmul.mubr.f32.gmra.mrb[0].mxu0 %v212
    %v700 = vpop.f32.mrb[0].mxu0
    %v701 = vadd.f32 %v128, %v700
    %v702 = vpop.f32.mrb[0].mxu0
    %703 = vdwg.mxu0
    %v704 = vld [vmem:[%s2] sm:$0xff]
    %v705 = vld [vmem:[%s2 + $0x8] sm:$0xff]
    %v706 = vld [vmem:[%s2 + $0x10] sm:$0xff]
    %v707 = vld [vmem:[%s2 + $0x18] sm:$0xff]
    %v708 = vld [vmem:[%s2 + $0x20] sm:$0xff]
    %v709 = vld [vmem:[%s2 + $0x28] sm:$0xff]
    %v710 = vld [vmem:[%s2 + $0x30] sm:$0xff]
    %v711 = vld [vmem:[%s2 + $0x38] sm:$0xff]
    %v712 = vld [vmem:[%s2 + $0x40] sm:$0xff]
    %v713 = vld [vmem:[%s2 + $0x48] sm:$0xff]
    %v714 = vld [vmem:[%s2 + $0x50] sm:$0xff]
    %v715 = vld [vmem:[%s2 + $0x58] sm:$0xff]
    %v716 = vld [vmem:[%s2 + $0x60] sm:$0xff]
    %v717 = vld [vmem:[%s2 + $0x68] sm:$0xff]
    %v718 = vld [vmem:[%s2 + $0x70] sm:$0xff]
    %v719 = vld [vmem:[%s2 + $0x78] sm:$0xff]
    %v720 = vld [vmem:[%s2 + $0x80] sm:$0xff]
    %v721 = vld [vmem:[%s2 + $0x88] sm:$0xff]
    %v722 = vld [vmem:[%s2 + $0x90] sm:$0xff]
    %v723 = vld [vmem:[%s2 + $0x98] sm:$0xff]
    %v724 = vld [vmem:[%s2 + $0xa0] sm:$0xff]
    %v725 = vld [vmem:[%s2 + $0xa8] sm:$0xff]
    %v726 = vld [vmem:[%s2 + $0xb0] sm:$0xff]
    %v727 = vld [vmem:[%s2 + $0xb8] sm:$0xff]
    %v728 = vld [vmem:[%s2 + $0xc0] sm:$0xff]
    %v729 = vld [vmem:[%s2 + $0xc8] sm:$0xff]
    %v730 = vld [vmem:[%s2 + $0xd0] sm:$0xff]
    %v731 = vld [vmem:[%s2 + $0xd8] sm:$0xff]
    %v732 = vld [vmem:[%s2 + $0xe0] sm:$0xff]
    %v733 = vld [vmem:[%s2 + $0xe8] sm:$0xff]
    %v734 = vld [vmem:[%s2 + $0xf0] sm:$0xff]
    %v735 = vld [vmem:[%s2 + $0xf8] sm:$0xff]
    %v736 = vld [vmem:[%s5] sm:$0x1]
    %v737 = vld [vmem:[%s5 + $0x1] sm:$0x1]
    %v738 = vld [vmem:[%s5 + $0x2] sm:$0x1]
    %v739 = vld [vmem:[%s5 + $0x3] sm:$0x1]
    %v740 = vld [vmem:[%s5 + $0x4] sm:$0x1]
    %v741 = vld [vmem:[%s5 + $0x5] sm:$0x1]
    %v742 = vld [vmem:[%s5 + $0x6] sm:$0x1]
    %v743 = vld [vmem:[%s5 + $0x7] sm:$0x1]
    %v752 = vlaneseq
    %v753 = vshrl.u32 %v752, 7
    %v754 = vsub.s32 0, %v753
    %v755 = vrot.slane %v736, %v754
    %v756 = vlaneseq
    %v757 = vshrl.u32 %v756, 7
    %v758 = vsub.s32 0, %v757
    %v759 = vrot.slane %v737, %v758
    %v760 = vlaneseq
    %v761 = vshrl.u32 %v760, 7
    %v762 = vsub.s32 0, %v761
    %v763 = vrot.slane %v738, %v762
    %v764 = vlaneseq
    %v765 = vshrl.u32 %v764, 7
    %v766 = vsub.s32 0, %v765
    %v767 = vrot.slane %v739, %v766
    %v768 = vlaneseq
    %v769 = vshrl.u32 %v768, 7
    %v770 = vsub.s32 0, %v769
    %v771 = vrot.slane %v740, %v770
    %v772 = vlaneseq
    %v773 = vshrl.u32 %v772, 7
    %v774 = vsub.s32 0, %v773
    %v775 = vrot.slane %v741, %v774
    %v776 = vlaneseq
    %v777 = vshrl.u32 %v776, 7
    %v778 = vsub.s32 0, %v777
    %v779 = vrot.slane %v742, %v778
    %v780 = vlaneseq
    %v781 = vshrl.u32 %v780, 7
    %v782 = vsub.s32 0, %v781
    %v783 = vrot.slane %v743, %v782
    %792 = vmatprep.subr.mxu0 0.0
    %793 = vmatpush1.msra.mxu0 %v704
    %794 = vmatprep.subr.mxu0 0.0
    %795 = vmatpush1.msra.mxu0 %v705
    %796 = vmatprep.subr.mxu0 0.0
    %797 = vmatpush1.msra.mxu0 %v706
    %798 = vmatprep.subr.mxu0 0.0
    %799 = vmatpush1.msra.mxu0 %v707
    %800 = vmatprep.subr.mxu0 0.0
    %801 = vmatpush1.msra.mxu0 0.0
    %802 = vmatprep.subr.mxu0 0.0
    %803 = vmatpush1.msra.mxu0 0.0
    %804 = vmatprep.subr.mxu0 0.0
    %805 = vmatpush1.msra.mxu0 0.0
    %806 = vmatprep.subr.mxu0 0.0
    %807 = vmatpush1.msra.mxu0 0.0
    %808 = vmatprep.subr.mxu0 0.0
    %809 = vmatpush1.msra.mxu0 0.0
    %810 = vmatprep.subr.mxu0 0.0
    %811 = vmatpush1.msra.mxu0 0.0
    %812 = vmatprep.subr.mxu0 0.0
    %813 = vmatpush1.msra.mxu0 0.0
    %814 = vmatprep.subr.mxu0 0.0
    %815 = vmatpush1.msra.mxu0 0.0
    %816 = vmatprep.subr.mxu0 0.0
    %817 = vmatpush1.msra.mxu0 0.0
    %818 = vmatprep.subr.mxu0 0.0
    %819 = vmatpush1.msra.mxu0 0.0
    %820 = vmatprep.subr.mxu0 0.0
    %821 = vmatpush1.msra.mxu0 0.0
    %822 = vmatprep.subr.mxu0 0.0
    %823 = vmatpush1.msra.mxu0 0.0
    %824 = vmatprep.subr.mxu0 0.0
    %825 = vmatpush1.msra.mxu0 0.0
    %826 = vmatprep.subr.mxu0 0.0
    %827 = vmatpush1.msra.mxu0 0.0
    %828 = vmatprep.subr.mxu0 0.0
    %829 = vmatpush1.msra.mxu0 0.0
    %830 = vmatprep.subr.mxu0 0.0
    %831 = vmatpush1.msra.mxu0 0.0
    %832 = vmatprep.subr.mxu0 0.0
    %833 = vmatpush1.msra.mxu0 0.0
    %834 = vmatprep.subr.mxu0 0.0
    %835 = vmatpush1.msra.mxu0 0.0
    %836 = vmatprep.subr.mxu0 0.0
    %837 = vmatpush1.msra.mxu0 0.0
    %838 = vmatprep.subr.mxu0 0.0
    %839 = vmatpush1.msra.mxu0 0.0
    %840 = vmatprep.subr.mxu0 0.0
    %841 = vmatpush1.msra.mxu0 0.0
    %842 = vmatprep.subr.mxu0 0.0
    %843 = vmatpush1.msra.mxu0 0.0
    %844 = vmatprep.subr.mxu0 0.0
    %845 = vmatpush1.msra.mxu0 0.0
    %846 = vmatprep.subr.mxu0 0.0
    %847 = vmatpush1.msra.mxu0 0.0
    %848 = vmatprep.subr.mxu0 0.0
    %849 = vmatpush1.msra.mxu0 0.0
    %850 = vmatprep.subr.mxu0 0.0
    %851 = vmatpush1.msra.mxu0 0.0
    %852 = vmatprep.subr.mxu0 0.0
    %853 = vmatpush1.msra.mxu0 0.0
    %854 = vmatprep.subr.mxu0 0.0
    %855 = vmatpush1.msra.mxu0 0.0
    %856 = vmatprep.mubr.f32.mxu0 0.0
    %857 = vmatmul.mubr.f32.gmra.mrb[0].mxu0 %v139
    %v858 = vpop.f32.mrb[0].mxu0
    %v859 = vadd.f32 %v755, %v858
    %v860 = vpop.f32.mrb[0].mxu0
    %861 = vdwg.mxu0
    %862 = vmatprep.subr.mxu0 0.0
    %863 = vmatpush1.msra.mxu0 %v708
    %864 = vmatprep.subr.mxu0 0.0
    %865 = vmatpush1.msra.mxu0 %v709
    %866 = vmatprep.subr.mxu0 0.0
    %867 = vmatpush1.msra.mxu0 %v710
    %868 = vmatprep.subr.mxu0 0.0
    %869 = vmatpush1.msra.mxu0 %v711
    %870 = vmatprep.subr.mxu0 0.0
    %871 = vmatpush1.msra.mxu0 0.0
    %872 = vmatprep.subr.mxu0 0.0
    %873 = vmatpush1.msra.mxu0 0.0
    %874 = vmatprep.subr.mxu0 0.0
    %875 = vmatpush1.msra.mxu0 0.0
    %876 = vmatprep.subr.mxu0 0.0
    %877 = vmatpush1.msra.mxu0 0.0
    %878 = vmatprep.subr.mxu0 0.0
    %879 = vmatpush1.msra.mxu0 0.0
    %880 = vmatprep.subr.mxu0 0.0
    %881 = vmatpush1.msra.mxu0 0.0
    %882 = vmatprep.subr.mxu0 0.0
    %883 = vmatpush1.msra.mxu0 0.0
    %884 = vmatprep.subr.mxu0 0.0
    %885 = vmatpush1.msra.mxu0 0.0
    %886 = vmatprep.subr.mxu0 0.0
    %887 = vmatpush1.msra.mxu0 0.0
    %888 = vmatprep.subr.mxu0 0.0
    %889 = vmatpush1.msra.mxu0 0.0
    %890 = vmatprep.subr.mxu0 0.0
    %891 = vmatpush1.msra.mxu0 0.0
    %892 = vmatprep.subr.mxu0 0.0
    %893 = vmatpush1.msra.mxu0 0.0
    %894 = vmatprep.subr.mxu0 0.0
    %895 = vmatpush1.msra.mxu0 0.0
    %896 = vmatprep.subr.mxu0 0.0
    %897 = vmatpush1.msra.mxu0 0.0
    %898 = vmatprep.subr.mxu0 0.0
    %899 = vmatpush1.msra.mxu0 0.0
    %900 = vmatprep.subr.mxu0 0.0
    %901 = vmatpush1.msra.mxu0 0.0
    %902 = vmatprep.subr.mxu0 0.0
    %903 = vmatpush1.msra.mxu0 0.0
    %904 = vmatprep.subr.mxu0 0.0
    %905 = vmatpush1.msra.mxu0 0.0
    %906 = vmatprep.subr.mxu0 0.0
    %907 = vmatpush1.msra.mxu0 0.0
    %908 = vmatprep.subr.mxu0 0.0
    %909 = vmatpush1.msra.mxu0 0.0
    %910 = vmatprep.subr.mxu0 0.0
    %911 = vmatpush1.msra.mxu0 0.0
    %912 = vmatprep.subr.mxu0 0.0
    %913 = vmatpush1.msra.mxu0 0.0
    %914 = vmatprep.subr.mxu0 0.0
    %915 = vmatpush1.msra.mxu0 0.0
    %916 = vmatprep.subr.mxu0 0.0
    %917 = vmatpush1.msra.mxu0 0.0
    %918 = vmatprep.subr.mxu0 0.0
    %919 = vmatpush1.msra.mxu0 0.0
    %920 = vmatprep.subr.mxu0 0.0
    %921 = vmatpush1.msra.mxu0 0.0
    %922 = vmatprep.subr.mxu0 0.0
    %923 = vmatpush1.msra.mxu0 0.0
    %924 = vmatprep.subr.mxu0 0.0
    %925 = vmatpush1.msra.mxu0 0.0
    %926 = vmatprep.mubr.f32.mxu0 0.0
    %927 = vmatmul.mubr.f32.gmra.mrb[0].mxu0 %v212
    %v928 = vpop.f32.mrb[0].mxu0
    %v929 = vadd.f32 %v759, %v928
    %v930 = vpop.f32.mrb[0].mxu0
    %931 = vdwg.mxu0
    %932 = vmatprep.subr.mxu0 0.0
    %933 = vmatpush1.msra.mxu0 %v712
    %934 = vmatprep.subr.mxu0 0.0
    %935 = vmatpush1.msra.mxu0 %v713
    %936 = vmatprep.subr.mxu0 0.0
    %937 = vmatpush1.msra.mxu0 %v714
    %938 = vmatprep.subr.mxu0 0.0
    %939 = vmatpush1.msra.mxu0 %v715
    %940 = vmatprep.subr.mxu0 0.0
    %941 = vmatpush1.msra.mxu0 0.0
    %942 = vmatprep.subr.mxu0 0.0
    %943 = vmatpush1.msra.mxu0 0.0
    %944 = vmatprep.subr.mxu0 0.0
    %945 = vmatpush1.msra.mxu0 0.0
    %946 = vmatprep.subr.mxu0 0.0
    %947 = vmatpush1.msra.mxu0 0.0
    %948 = vmatprep.subr.mxu0 0.0
    %949 = vmatpush1.msra.mxu0 0.0
    %950 = vmatprep.subr.mxu0 0.0
    %951 = vmatpush1.msra.mxu0 0.0
    %952 = vmatprep.subr.mxu0 0.0
    %953 = vmatpush1.msra.mxu0 0.0
    %954 = vmatprep.subr.mxu0 0.0
    %955 = vmatpush1.msra.mxu0 0.0
    %956 = vmatprep.subr.mxu0 0.0
    %957 = vmatpush1.msra.mxu0 0.0
    %958 = vmatprep.subr.mxu0 0.0
    %959 = vmatpush1.msra.mxu0 0.0
    %960 = vmatprep.subr.mxu0 0.0
    %961 = vmatpush1.msra.mxu0 0.0
    %962 = vmatprep.subr.mxu0 0.0
    %963 = vmatpush1.msra.mxu0 0.0
    %964 = vmatprep.subr.mxu0 0.0
    %965 = vmatpush1.msra.mxu0 0.0
    %966 = vmatprep.subr.mxu0 0.0
    %967 = vmatpush1.msra.mxu0 0.0
    %968 = vmatprep.subr.mxu0 0.0
    %969 = vmatpush1.msra.mxu0 0.0
    %970 = vmatprep.subr.mxu0 0.0
    %971 = vmatpush1.msra.mxu0 0.0
    %972 = vmatprep.subr.mxu0 0.0
    %973 = vmatpush1.msra.mxu0 0.0
    %974 = vmatprep.subr.mxu0 0.0
    %975 = vmatpush1.msra.mxu0 0.0
    %976 = vmatprep.subr.mxu0 0.0
    %977 = vmatpush1.msra.mxu0 0.0
    %978 = vmatprep.subr.mxu0 0.0
    %979 = vmatpush1.msra.mxu0 0.0
    %980 = vmatprep.subr.mxu0 0.0
    %981 = vmatpush1.msra.mxu0 0.0
    %982 = vmatprep.subr.mxu0 0.0
    %983 = vmatpush1.msra.mxu0 0.0
    %984 = vmatprep.subr.mxu0 0.0
    %985 = vmatpush1.msra.mxu0 0.0
    %986 = vmatprep.subr.mxu0 0.0
    %987 = vmatpush1.msra.mxu0 0.0
    %988 = vmatprep.subr.mxu0 0.0
    %989 = vmatpush1.msra.mxu0 0.0
    %990 = vmatprep.subr.mxu0 0.0
    %991 = vmatpush1.msra.mxu0 0.0
    %992 = vmatprep.subr.mxu0 0.0
    %993 = vmatpush1.msra.mxu0 0.0
    %994 = vmatprep.subr.mxu0 0.0
    %995 = vmatpush1.msra.mxu0 0.0
    %996 = vmatprep.mubr.f32.mxu0 0.0
    %997 = vmatmul.mubr.f32.gmra.mrb[0].mxu0 %v139
    %v998 = vpop.f32.mrb[0].mxu0
    %v999 = vadd.f32 %v763, %v998
    %v1000 = vpop.f32.mrb[0].mxu0
    %1001 = vdwg.mxu0
    %1002 = vmatprep.subr.mxu0 0.0
    %1003 = vmatpush1.msra.mxu0 %v716
    %1004 = vmatprep.subr.mxu0 0.0
    %1005 = vmatpush1.msra.mxu0 %v717
    %1006 = vmatprep.subr.mxu0 0.0
    %1007 = vmatpush1.msra.mxu0 %v718
    %1008 = vmatprep.subr.mxu0 0.0
    %1009 = vmatpush1.msra.mxu0 %v719
    %1010 = vmatprep.subr.mxu0 0.0
    %1011 = vmatpush1.msra.mxu0 0.0
    %1012 = vmatprep.subr.mxu0 0.0
    %1013 = vmatpush1.msra.mxu0 0.0
    %1014 = vmatprep.subr.mxu0 0.0
    %1015 = vmatpush1.msra.mxu0 0.0
    %1016 = vmatprep.subr.mxu0 0.0
    %1017 = vmatpush1.msra.mxu0 0.0
    %1018 = vmatprep.subr.mxu0 0.0
    %1019 = vmatpush1.msra.mxu0 0.0
    %1020 = vmatprep.subr.mxu0 0.0
    %1021 = vmatpush1.msra.mxu0 0.0
    %1022 = vmatprep.subr.mxu0 0.0
    %1023 = vmatpush1.msra.mxu0 0.0
    %1024 = vmatprep.subr.mxu0 0.0
    %1025 = vmatpush1.msra.mxu0 0.0
    %1026 = vmatprep.subr.mxu0 0.0
    %1027 = vmatpush1.msra.mxu0 0.0
    %1028 = vmatprep.subr.mxu0 0.0
    %1029 = vmatpush1.msra.mxu0 0.0
    %1030 = vmatprep.subr.mxu0 0.0
    %1031 = vmatpush1.msra.mxu0 0.0
    %1032 = vmatprep.subr.mxu0 0.0
    %1033 = vmatpush1.msra.mxu0 0.0
    %1034 = vmatprep.subr.mxu0 0.0
    %1035 = vmatpush1.msra.mxu0 0.0
    %1036 = vmatprep.subr.mxu0 0.0
    %1037 = vmatpush1.msra.mxu0 0.0
    %1038 = vmatprep.subr.mxu0 0.0
    %1039 = vmatpush1.msra.mxu0 0.0
    %1040 = vmatprep.subr.mxu0 0.0
    %1041 = vmatpush1.msra.mxu0 0.0
    %1042 = vmatprep.subr.mxu0 0.0
    %1043 = vmatpush1.msra.mxu0 0.0
    %1044 = vmatprep.subr.mxu0 0.0
    %1045 = vmatpush1.msra.mxu0 0.0
    %1046 = vmatprep.subr.mxu0 0.0
    %1047 = vmatpush1.msra.mxu0 0.0
    %1048 = vmatprep.subr.mxu0 0.0
    %1049 = vmatpush1.msra.mxu0 0.0
    %1050 = vmatprep.subr.mxu0 0.0
    %1051 = vmatpush1.msra.mxu0 0.0
    %1052 = vmatprep.subr.mxu0 0.0
    %1053 = vmatpush1.msra.mxu0 0.0
    %1054 = vmatprep.subr.mxu0 0.0
    %1055 = vmatpush1.msra.mxu0 0.0
    %1056 = vmatprep.subr.mxu0 0.0
    %1057 = vmatpush1.msra.mxu0 0.0
    %1058 = vmatprep.subr.mxu0 0.0
    %1059 = vmatpush1.msra.mxu0 0.0
    %1060 = vmatprep.subr.mxu0 0.0
    %1061 = vmatpush1.msra.mxu0 0.0
    %1062 = vmatprep.subr.mxu0 0.0
    %1063 = vmatpush1.msra.mxu0 0.0
    %1064 = vmatprep.subr.mxu0 0.0
    %1065 = vmatpush1.msra.mxu0 0.0
    %1066 = vmatprep.mubr.f32.mxu0 0.0
    %1067 = vmatmul.mubr.f32.gmra.mrb[0].mxu0 %v212
    %v1068 = vpop.f32.mrb[0].mxu0
    %v1069 = vadd.f32 %v767, %v1068
    %v1070 = vpop.f32.mrb[0].mxu0
    %1071 = vdwg.mxu0
    %1072 = vmatprep.subr.mxu0 0.0
    %1073 = vmatpush1.msra.mxu0 %v720
    %1074 = vmatprep.subr.mxu0 0.0
    %1075 = vmatpush1.msra.mxu0 %v721
    %1076 = vmatprep.subr.mxu0 0.0
    %1077 = vmatpush1.msra.mxu0 %v722
    %1078 = vmatprep.subr.mxu0 0.0
    %1079 = vmatpush1.msra.mxu0 %v723
    %1080 = vmatprep.subr.mxu0 0.0
    %1081 = vmatpush1.msra.mxu0 0.0
    %1082 = vmatprep.subr.mxu0 0.0
    %1083 = vmatpush1.msra.mxu0 0.0
    %1084 = vmatprep.subr.mxu0 0.0
    %1085 = vmatpush1.msra.mxu0 0.0
    %1086 = vmatprep.subr.mxu0 0.0
    %1087 = vmatpush1.msra.mxu0 0.0
    %1088 = vmatprep.subr.mxu0 0.0
    %1089 = vmatpush1.msra.mxu0 0.0
    %1090 = vmatprep.subr.mxu0 0.0
    %1091 = vmatpush1.msra.mxu0 0.0
    %1092 = vmatprep.subr.mxu0 0.0
    %1093 = vmatpush1.msra.mxu0 0.0
    %1094 = vmatprep.subr.mxu0 0.0
    %1095 = vmatpush1.msra.mxu0 0.0
    %1096 = vmatprep.subr.mxu0 0.0
    %1097 = vmatpush1.msra.mxu0 0.0
    %1098 = vmatprep.subr.mxu0 0.0
    %1099 = vmatpush1.msra.mxu0 0.0
    %1100 = vmatprep.subr.mxu0 0.0
    %1101 = vmatpush1.msra.mxu0 0.0
    %1102 = vmatprep.subr.mxu0 0.0
    %1103 = vmatpush1.msra.mxu0 0.0
    %1104 = vmatprep.subr.mxu0 0.0
    %1105 = vmatpush1.msra.mxu0 0.0
    %1106 = vmatprep.subr.mxu0 0.0
    %1107 = vmatpush1.msra.mxu0 0.0
    %1108 = vmatprep.subr.mxu0 0.0
    %1109 = vmatpush1.msra.mxu0 0.0
    %1110 = vmatprep.subr.mxu0 0.0
    %1111 = vmatpush1.msra.mxu0 0.0
    %1112 = vmatprep.subr.mxu0 0.0
    %1113 = vmatpush1.msra.mxu0 0.0
    %1114 = vmatprep.subr.mxu0 0.0
    %1115 = vmatpush1.msra.mxu0 0.0
    %1116 = vmatprep.subr.mxu0 0.0
    %1117 = vmatpush1.msra.mxu0 0.0
    %1118 = vmatprep.subr.mxu0 0.0
    %1119 = vmatpush1.msra.mxu0 0.0
    %1120 = vmatprep.subr.mxu0 0.0
    %1121 = vmatpush1.msra.mxu0 0.0
    %1122 = vmatprep.subr.mxu0 0.0
    %1123 = vmatpush1.msra.mxu0 0.0
    %1124 = vmatprep.subr.mxu0 0.0
    %1125 = vmatpush1.msra.mxu0 0.0
    %1126 = vmatprep.subr.mxu0 0.0
    %1127 = vmatpush1.msra.mxu0 0.0
    %1128 = vmatprep.subr.mxu0 0.0
    %1129 = vmatpush1.msra.mxu0 0.0
    %1130 = vmatprep.subr.mxu0 0.0
    %1131 = vmatpush1.msra.mxu0 0.0
    %1132 = vmatprep.subr.mxu0 0.0
    %1133 = vmatpush1.msra.mxu0 0.0
    %1134 = vmatprep.subr.mxu0 0.0
    %1135 = vmatpush1.msra.mxu0 0.0
    %1136 = vmatprep.mubr.f32.mxu0 0.0
    %1137 = vmatmul.mubr.f32.gmra.mrb[0].mxu0 %v139
    %v1138 = vpop.f32.mrb[0].mxu0
    %v1139 = vadd.f32 %v771, %v1138
    %v1140 = vpop.f32.mrb[0].mxu0
    %1141 = vdwg.mxu0
    %1142 = vmatprep.subr.mxu0 0.0
    %1143 = vmatpush1.msra.mxu0 %v724
    %1144 = vmatprep.subr.mxu0 0.0
    %1145 = vmatpush1.msra.mxu0 %v725
    %1146 = vmatprep.subr.mxu0 0.0
    %1147 = vmatpush1.msra.mxu0 %v726
    %1148 = vmatprep.subr.mxu0 0.0
    %1149 = vmatpush1.msra.mxu0 %v727
    %1150 = vmatprep.subr.mxu0 0.0
    %1151 = vmatpush1.msra.mxu0 0.0
    %1152 = vmatprep.subr.mxu0 0.0
    %1153 = vmatpush1.msra.mxu0 0.0
    %1154 = vmatprep.subr.mxu0 0.0
    %1155 = vmatpush1.msra.mxu0 0.0
    %1156 = vmatprep.subr.mxu0 0.0
    %1157 = vmatpush1.msra.mxu0 0.0
    %1158 = vmatprep.subr.mxu0 0.0
    %1159 = vmatpush1.msra.mxu0 0.0
    %1160 = vmatprep.subr.mxu0 0.0
    %1161 = vmatpush1.msra.mxu0 0.0
    %1162 = vmatprep.subr.mxu0 0.0
    %1163 = vmatpush1.msra.mxu0 0.0
    %1164 = vmatprep.subr.mxu0 0.0
    %1165 = vmatpush1.msra.mxu0 0.0
    %1166 = vmatprep.subr.mxu0 0.0
    %1167 = vmatpush1.msra.mxu0 0.0
    %1168 = vmatprep.subr.mxu0 0.0
    %1169 = vmatpush1.msra.mxu0 0.0
    %1170 = vmatprep.subr.mxu0 0.0
    %1171 = vmatpush1.msra.mxu0 0.0
    %1172 = vmatprep.subr.mxu0 0.0
    %1173 = vmatpush1.msra.mxu0 0.0
    %1174 = vmatprep.subr.mxu0 0.0
    %1175 = vmatpush1.msra.mxu0 0.0
    %1176 = vmatprep.subr.mxu0 0.0
    %1177 = vmatpush1.msra.mxu0 0.0
    %1178 = vmatprep.subr.mxu0 0.0
    %1179 = vmatpush1.msra.mxu0 0.0
    %1180 = vmatprep.subr.mxu0 0.0
    %1181 = vmatpush1.msra.mxu0 0.0
    %1182 = vmatprep.subr.mxu0 0.0
    %1183 = vmatpush1.msra.mxu0 0.0
    %1184 = vmatprep.subr.mxu0 0.0
    %1185 = vmatpush1.msra.mxu0 0.0
    %1186 = vmatprep.subr.mxu0 0.0
    %1187 = vmatpush1.msra.mxu0 0.0
    %1188 = vmatprep.subr.mxu0 0.0
    %1189 = vmatpush1.msra.mxu0 0.0
    %1190 = vmatprep.subr.mxu0 0.0
    %1191 = vmatpush1.msra.mxu0 0.0
    %1192 = vmatprep.subr.mxu0 0.0
    %1193 = vmatpush1.msra.mxu0 0.0
    %1194 = vmatprep.subr.mxu0 0.0
    %1195 = vmatpush1.msra.mxu0 0.0
    %1196 = vmatprep.subr.mxu0 0.0
    %1197 = vmatpush1.msra.mxu0 0.0
    %1198 = vmatprep.subr.mxu0 0.0
    %1199 = vmatpush1.msra.mxu0 0.0
    %1200 = vmatprep.subr.mxu0 0.0
    %1201 = vmatpush1.msra.mxu0 0.0
    %1202 = vmatprep.subr.mxu0 0.0
    %1203 = vmatpush1.msra.mxu0 0.0
    %1204 = vmatprep.subr.mxu0 0.0
    %1205 = vmatpush1.msra.mxu0 0.0
    %1206 = vmatprep.mubr.f32.mxu0 0.0
    %1207 = vmatmul.mubr.f32.gmra.mrb[0].mxu0 %v212
    %v1208 = vpop.f32.mrb[0].mxu0
    %v1209 = vadd.f32 %v775, %v1208
    %v1210 = vpop.f32.mrb[0].mxu0
    %1211 = vdwg.mxu0
    %1212 = vmatprep.subr.mxu0 0.0
    %1213 = vmatpush1.msra.mxu0 %v728
    %1214 = vmatprep.subr.mxu0 0.0
    %1215 = vmatpush1.msra.mxu0 %v729
    %1216 = vmatprep.subr.mxu0 0.0
    %1217 = vmatpush1.msra.mxu0 %v730
    %1218 = vmatprep.subr.mxu0 0.0
    %1219 = vmatpush1.msra.mxu0 %v731
    %1220 = vmatprep.subr.mxu0 0.0
    %1221 = vmatpush1.msra.mxu0 0.0
    %1222 = vmatprep.subr.mxu0 0.0
    %1223 = vmatpush1.msra.mxu0 0.0
    %1224 = vmatprep.subr.mxu0 0.0
    %1225 = vmatpush1.msra.mxu0 0.0
    %1226 = vmatprep.subr.mxu0 0.0
    %1227 = vmatpush1.msra.mxu0 0.0
    %1228 = vmatprep.subr.mxu0 0.0
    %1229 = vmatpush1.msra.mxu0 0.0
    %1230 = vmatprep.subr.mxu0 0.0
    %1231 = vmatpush1.msra.mxu0 0.0
    %1232 = vmatprep.subr.mxu0 0.0
    %1233 = vmatpush1.msra.mxu0 0.0
    %1234 = vmatprep.subr.mxu0 0.0
    %1235 = vmatpush1.msra.mxu0 0.0
    %1236 = vmatprep.subr.mxu0 0.0
    %1237 = vmatpush1.msra.mxu0 0.0
    %1238 = vmatprep.subr.mxu0 0.0
    %1239 = vmatpush1.msra.mxu0 0.0
    %1240 = vmatprep.subr.mxu0 0.0
    %1241 = vmatpush1.msra.mxu0 0.0
    %1242 = vmatprep.subr.mxu0 0.0
    %1243 = vmatpush1.msra.mxu0 0.0
    %1244 = vmatprep.subr.mxu0 0.0
    %1245 = vmatpush1.msra.mxu0 0.0
    %1246 = vmatprep.subr.mxu0 0.0
    %1247 = vmatpush1.msra.mxu0 0.0
    %1248 = vmatprep.subr.mxu0 0.0
    %1249 = vmatpush1.msra.mxu0 0.0
    %1250 = vmatprep.subr.mxu0 0.0
    %1251 = vmatpush1.msra.mxu0 0.0
    %1252 = vmatprep.subr.mxu0 0.0
    %1253 = vmatpush1.msra.mxu0 0.0
    %1254 = vmatprep.subr.mxu0 0.0
    %1255 = vmatpush1.msra.mxu0 0.0
    %1256 = vmatprep.subr.mxu0 0.0
    %1257 = vmatpush1.msra.mxu0 0.0
    %1258 = vmatprep.subr.mxu0 0.0
    %1259 = vmatpush1.msra.mxu0 0.0
    %1260 = vmatprep.subr.mxu0 0.0
    %1261 = vmatpush1.msra.mxu0 0.0
    %1262 = vmatprep.subr.mxu0 0.0
    %1263 = vmatpush1.msra.mxu0 0.0
    %1264 = vmatprep.subr.mxu0 0.0
    %1265 = vmatpush1.msra.mxu0 0.0
    %1266 = vmatprep.subr.mxu0 0.0
    %1267 = vmatpush1.msra.mxu0 0.0
    %1268 = vmatprep.subr.mxu0 0.0
    %1269 = vmatpush1.msra.mxu0 0.0
    %1270 = vmatprep.subr.mxu0 0.0
    %1271 = vmatpush1.msra.mxu0 0.0
    %1272 = vmatprep.subr.mxu0 0.0
    %1273 = vmatpush1.msra.mxu0 0.0
    %1274 = vmatprep.subr.mxu0 0.0
    %1275 = vmatpush1.msra.mxu0 0.0
    %1276 = vmatprep.mubr.f32.mxu0 0.0
    %1277 = vmatmul.mubr.f32.gmra.mrb[0].mxu0 %v139
    %v1278 = vpop.f32.mrb[0].mxu0
    %v1279 = vadd.f32 %v779, %v1278
    %v1280 = vpop.f32.mrb[0].mxu0
    %1281 = vdwg.mxu0
    %1282 = vmatprep.subr.mxu0 0.0
    %1283 = vmatpush1.msra.mxu0 %v732
    %1284 = vmatprep.subr.mxu0 0.0
    %1285 = vmatpush1.msra.mxu0 %v733
    %1286 = vmatprep.subr.mxu0 0.0
    %1287 = vmatpush1.msra.mxu0 %v734
    %1288 = vmatprep.subr.mxu0 0.0
    %1289 = vmatpush1.msra.mxu0 %v735
    %1290 = vmatprep.subr.mxu0 0.0
    %1291 = vmatpush1.msra.mxu0 0.0
    %1292 = vmatprep.subr.mxu0 0.0
    %1293 = vmatpush1.msra.mxu0 0.0
    %1294 = vmatprep.subr.mxu0 0.0
    %1295 = vmatpush1.msra.mxu0 0.0
    %1296 = vmatprep.subr.mxu0 0.0
    %1297 = vmatpush1.msra.mxu0 0.0
    %1298 = vmatprep.subr.mxu0 0.0
    %1299 = vmatpush1.msra.mxu0 0.0
    %1300 = vmatprep.subr.mxu0 0.0
    %1301 = vmatpush1.msra.mxu0 0.0
    %1302 = vmatprep.subr.mxu0 0.0
    %1303 = vmatpush1.msra.mxu0 0.0
    %1304 = vmatprep.subr.mxu0 0.0
    %1305 = vmatpush1.msra.mxu0 0.0
    %1306 = vmatprep.subr.mxu0 0.0
    %1307 = vmatpush1.msra.mxu0 0.0
    %1308 = vmatprep.subr.mxu0 0.0
    %1309 = vmatpush1.msra.mxu0 0.0
    %1310 = vmatprep.subr.mxu0 0.0
    %1311 = vmatpush1.msra.mxu0 0.0
    %1312 = vmatprep.subr.mxu0 0.0
    %1313 = vmatpush1.msra.mxu0 0.0
    %1314 = vmatprep.subr.mxu0 0.0
    %1315 = vmatpush1.msra.mxu0 0.0
    %1316 = vmatprep.subr.mxu0 0.0
    %1317 = vmatpush1.msra.mxu0 0.0
    %1318 = vmatprep.subr.mxu0 0.0
    %1319 = vmatpush1.msra.mxu0 0.0
    %1320 = vmatprep.subr.mxu0 0.0
    %1321 = vmatpush1.msra.mxu0 0.0
    %1322 = vmatprep.subr.mxu0 0.0
    %1323 = vmatpush1.msra.mxu0 0.0
    %1324 = vmatprep.subr.mxu0 0.0
    %1325 = vmatpush1.msra.mxu0 0.0
    %1326 = vmatprep.subr.mxu0 0.0
    %1327 = vmatpush1.msra.mxu0 0.0
    %1328 = vmatprep.subr.mxu0 0.0
    %1329 = vmatpush1.msra.mxu0 0.0
    %1330 = vmatprep.subr.mxu0 0.0
    %1331 = vmatpush1.msra.mxu0 0.0
    %1332 = vmatprep.subr.mxu0 0.0
    %1333 = vmatpush1.msra.mxu0 0.0
    %1334 = vmatprep.subr.mxu0 0.0
    %1335 = vmatpush1.msra.mxu0 0.0
    %1336 = vmatprep.subr.mxu0 0.0
    %1337 = vmatpush1.msra.mxu0 0.0
    %1338 = vmatprep.subr.mxu0 0.0
    %1339 = vmatpush1.msra.mxu0 0.0
    %1340 = vmatprep.subr.mxu0 0.0
    %1341 = vmatpush1.msra.mxu0 0.0
    %1342 = vmatprep.subr.mxu0 0.0
    %1343 = vmatpush1.msra.mxu0 0.0
    %1344 = vmatprep.subr.mxu0 0.0
    %1345 = vmatpush1.msra.mxu0 0.0
    %1346 = vmatprep.mubr.f32.mxu0 0.0
    %1347 = vmatmul.mubr.f32.gmra.mrb[0].mxu0 %v212
    %v1348 = vpop.f32.mrb[0].mxu0
    %v1349 = vadd.f32 %v783, %v1348
    %v1350 = vpop.f32.mrb[0].mxu0
    %1351 = vdwg.mxu0
    %v1352 = vld [vmem:[%s3] sm:$0xff]
    %v1353 = vld [vmem:[%s3 + $0x8] sm:$0xff]
    %v1354 = vld [vmem:[%s3 + $0x10] sm:$0xff]
    %v1355 = vld [vmem:[%s3 + $0x18] sm:$0xff]
    %v1356 = vld [vmem:[%s3 + $0x20] sm:$0xff]
    %v1357 = vld [vmem:[%s3 + $0x28] sm:$0xff]
    %v1358 = vld [vmem:[%s3 + $0x30] sm:$0xff]
    %v1359 = vld [vmem:[%s3 + $0x38] sm:$0xff]
    %v1360 = vld [vmem:[%s3 + $0x40] sm:$0xff]
    %v1361 = vld [vmem:[%s3 + $0x48] sm:$0xff]
    %v1362 = vld [vmem:[%s3 + $0x50] sm:$0xff]
    %v1363 = vld [vmem:[%s3 + $0x58] sm:$0xff]
    %v1364 = vld [vmem:[%s3 + $0x60] sm:$0xff]
    %v1365 = vld [vmem:[%s3 + $0x68] sm:$0xff]
    %v1366 = vld [vmem:[%s3 + $0x70] sm:$0xff]
    %v1367 = vld [vmem:[%s3 + $0x78] sm:$0xff]
    %v1368 = vld [vmem:[%s3 + $0x80] sm:$0xff]
    %v1369 = vld [vmem:[%s3 + $0x88] sm:$0xff]
    %v1370 = vld [vmem:[%s3 + $0x90] sm:$0xff]
    %v1371 = vld [vmem:[%s3 + $0x98] sm:$0xff]
    %v1372 = vld [vmem:[%s3 + $0xa0] sm:$0xff]
    %v1373 = vld [vmem:[%s3 + $0xa8] sm:$0xff]
    %v1374 = vld [vmem:[%s3 + $0xb0] sm:$0xff]
    %v1375 = vld [vmem:[%s3 + $0xb8] sm:$0xff]
    %v1376 = vld [vmem:[%s3 + $0xc0] sm:$0xff]
    %v1377 = vld [vmem:[%s3 + $0xc8] sm:$0xff]
    %v1378 = vld [vmem:[%s3 + $0xd0] sm:$0xff]
    %v1379 = vld [vmem:[%s3 + $0xd8] sm:$0xff]
    %v1380 = vld [vmem:[%s3 + $0xe0] sm:$0xff]
    %v1381 = vld [vmem:[%s3 + $0xe8] sm:$0xff]
    %v1382 = vld [vmem:[%s3 + $0xf0] sm:$0xff]
    %v1383 = vld [vmem:[%s3 + $0xf8] sm:$0xff]
    %v1384 = vld [vmem:[%s6] sm:$0x1]
    %v1385 = vld [vmem:[%s6 + $0x1] sm:$0x1]
    %v1386 = vld [vmem:[%s6 + $0x2] sm:$0x1]
    %v1387 = vld [vmem:[%s6 + $0x3] sm:$0x1]
    %v1388 = vld [vmem:[%s6 + $0x4] sm:$0x1]
    %v1389 = vld [vmem:[%s6 + $0x5] sm:$0x1]
    %v1390 = vld [vmem:[%s6 + $0x6] sm:$0x1]
    %v1391 = vld [vmem:[%s6 + $0x7] sm:$0x1]
    %v1400 = vlaneseq
    %v1401 = vshrl.u32 %v1400, 7
    %v1402 = vsub.s32 0, %v1401
    %v1403 = vrot.slane %v1384, %v1402
    %v1404 = vlaneseq
    %v1405 = vshrl.u32 %v1404, 7
    %v1406 = vsub.s32 0, %v1405
    %v1407 = vrot.slane %v1385, %v1406
    %v1408 = vlaneseq
    %v1409 = vshrl.u32 %v1408, 7
    %v1410 = vsub.s32 0, %v1409
    %v1411 = vrot.slane %v1386, %v1410
    %v1412 = vlaneseq
    %v1413 = vshrl.u32 %v1412, 7
    %v1414 = vsub.s32 0, %v1413
    %v1415 = vrot.slane %v1387, %v1414
    %v1416 = vlaneseq
    %v1417 = vshrl.u32 %v1416, 7
    %v1418 = vsub.s32 0, %v1417
    %v1419 = vrot.slane %v1388, %v1418
    %v1420 = vlaneseq
    %v1421 = vshrl.u32 %v1420, 7
    %v1422 = vsub.s32 0, %v1421
    %v1423 = vrot.slane %v1389, %v1422
    %v1424 = vlaneseq
    %v1425 = vshrl.u32 %v1424, 7
    %v1426 = vsub.s32 0, %v1425
    %v1427 = vrot.slane %v1390, %v1426
    %v1428 = vlaneseq
    %v1429 = vshrl.u32 %v1428, 7
    %v1430 = vsub.s32 0, %v1429
    %v1431 = vrot.slane %v1391, %v1430
    %1440 = vmatprep.subr.mxu0 0.0
    %1441 = vmatpush1.msra.mxu0 %v1352
    %1442 = vmatprep.subr.mxu0 0.0
    %1443 = vmatpush1.msra.mxu0 %v1353
    %1444 = vmatprep.subr.mxu0 0.0
    %1445 = vmatpush1.msra.mxu0 %v1354
    %1446 = vmatprep.subr.mxu0 0.0
    %1447 = vmatpush1.msra.mxu0 %v1355
    %1448 = vmatprep.subr.mxu0 0.0
    %1449 = vmatpush1.msra.mxu0 0.0
    %1450 = vmatprep.subr.mxu0 0.0
    %1451 = vmatpush1.msra.mxu0 0.0
    %1452 = vmatprep.subr.mxu0 0.0
    %1453 = vmatpush1.msra.mxu0 0.0
    %1454 = vmatprep.subr.mxu0 0.0
    %1455 = vmatpush1.msra.mxu0 0.0
    %1456 = vmatprep.subr.mxu0 0.0
    %1457 = vmatpush1.msra.mxu0 0.0
    %1458 = vmatprep.subr.mxu0 0.0
    %1459 = vmatpush1.msra.mxu0 0.0
    %1460 = vmatprep.subr.mxu0 0.0
    %1461 = vmatpush1.msra.mxu0 0.0
    %1462 = vmatprep.subr.mxu0 0.0
    %1463 = vmatpush1.msra.mxu0 0.0
    %1464 = vmatprep.subr.mxu0 0.0
    %1465 = vmatpush1.msra.mxu0 0.0
    %1466 = vmatprep.subr.mxu0 0.0
    %1467 = vmatpush1.msra.mxu0 0.0
    %1468 = vmatprep.subr.mxu0 0.0
    %1469 = vmatpush1.msra.mxu0 0.0
    %1470 = vmatprep.subr.mxu0 0.0
    %1471 = vmatpush1.msra.mxu0 0.0
    %1472 = vmatprep.subr.mxu0 0.0
    %1473 = vmatpush1.msra.mxu0 0.0
    %1474 = vmatprep.subr.mxu0 0.0
    %1475 = vmatpush1.msra.mxu0 0.0
    %1476 = vmatprep.subr.mxu0 0.0
    %1477 = vmatpush1.msra.mxu0 0.0
    %1478 = vmatprep.subr.mxu0 0.0
    %1479 = vmatpush1.msra.mxu0 0.0
    %1480 = vmatprep.subr.mxu0 0.0
    %1481 = vmatpush1.msra.mxu0 0.0
    %1482 = vmatprep.subr.mxu0 0.0
    %1483 = vmatpush1.msra.mxu0 0.0
    %1484 = vmatprep.subr.mxu0 0.0
    %1485 = vmatpush1.msra.mxu0 0.0
    %1486 = vmatprep.subr.mxu0 0.0
    %1487 = vmatpush1.msra.mxu0 0.0
    %1488 = vmatprep.subr.mxu0 0.0
    %1489 = vmatpush1.msra.mxu0 0.0
    %1490 = vmatprep.subr.mxu0 0.0
    %1491 = vmatpush1.msra.mxu0 0.0
    %1492 = vmatprep.subr.mxu0 0.0
    %1493 = vmatpush1.msra.mxu0 0.0
    %1494 = vmatprep.subr.mxu0 0.0
    %1495 = vmatpush1.msra.mxu0 0.0
    %1496 = vmatprep.subr.mxu0 0.0
    %1497 = vmatpush1.msra.mxu0 0.0
    %1498 = vmatprep.subr.mxu0 0.0
    %1499 = vmatpush1.msra.mxu0 0.0
    %1500 = vmatprep.subr.mxu0 0.0
    %1501 = vmatpush1.msra.mxu0 0.0
    %1502 = vmatprep.subr.mxu0 0.0
    %1503 = vmatpush1.msra.mxu0 0.0
    %1504 = vmatprep.mubr.f32.mxu0 0.0
    %1505 = vmatmul.mubr.f32.gmra.mrb[0].mxu0 %v139
    %v1506 = vpop.f32.mrb[0].mxu0
    %v1507 = vadd.f32 %v1403, %v1506
    %v1508 = vpop.f32.mrb[0].mxu0
    %1509 = vdwg.mxu0
    %1510 = vmatprep.subr.mxu0 0.0
    %1511 = vmatpush1.msra.mxu0 %v1356
    %1512 = vmatprep.subr.mxu0 0.0
    %1513 = vmatpush1.msra.mxu0 %v1357
    %1514 = vmatprep.subr.mxu0 0.0
    %1515 = vmatpush1.msra.mxu0 %v1358
    %1516 = vmatprep.subr.mxu0 0.0
    %1517 = vmatpush1.msra.mxu0 %v1359
    %1518 = vmatprep.subr.mxu0 0.0
    %1519 = vmatpush1.msra.mxu0 0.0
    %1520 = vmatprep.subr.mxu0 0.0
    %1521 = vmatpush1.msra.mxu0 0.0
    %1522 = vmatprep.subr.mxu0 0.0
    %1523 = vmatpush1.msra.mxu0 0.0
    %1524 = vmatprep.subr.mxu0 0.0
    %1525 = vmatpush1.msra.mxu0 0.0
    %1526 = vmatprep.subr.mxu0 0.0
    %1527 = vmatpush1.msra.mxu0 0.0
    %1528 = vmatprep.subr.mxu0 0.0
    %1529 = vmatpush1.msra.mxu0 0.0
    %1530 = vmatprep.subr.mxu0 0.0
    %1531 = vmatpush1.msra.mxu0 0.0
    %1532 = vmatprep.subr.mxu0 0.0
    %1533 = vmatpush1.msra.mxu0 0.0
    %1534 = vmatprep.subr.mxu0 0.0
    %1535 = vmatpush1.msra.mxu0 0.0
    %1536 = vmatprep.subr.mxu0 0.0
    %1537 = vmatpush1.msra.mxu0 0.0
    %1538 = vmatprep.subr.mxu0 0.0
    %1539 = vmatpush1.msra.mxu0 0.0
    %1540 = vmatprep.subr.mxu0 0.0
    %1541 = vmatpush1.msra.mxu0 0.0
    %1542 = vmatprep.subr.mxu0 0.0
    %1543 = vmatpush1.msra.mxu0 0.0
    %1544 = vmatprep.subr.mxu0 0.0
    %1545 = vmatpush1.msra.mxu0 0.0
    %1546 = vmatprep.subr.mxu0 0.0
    %1547 = vmatpush1.msra.mxu0 0.0
    %1548 = vmatprep.subr.mxu0 0.0
    %1549 = vmatpush1.msra.mxu0 0.0
    %1550 = vmatprep.subr.mxu0 0.0
    %1551 = vmatpush1.msra.mxu0 0.0
    %1552 = vmatprep.subr.mxu0 0.0
    %1553 = vmatpush1.msra.mxu0 0.0
    %1554 = vmatprep.subr.mxu0 0.0
    %1555 = vmatpush1.msra.mxu0 0.0
    %1556 = vmatprep.subr.mxu0 0.0
    %1557 = vmatpush1.msra.mxu0 0.0
    %1558 = vmatprep.subr.mxu0 0.0
    %1559 = vmatpush1.msra.mxu0 0.0
    %1560 = vmatprep.subr.mxu0 0.0
    %1561 = vmatpush1.msra.mxu0 0.0
    %1562 = vmatprep.subr.mxu0 0.0
    %1563 = vmatpush1.msra.mxu0 0.0
    %1564 = vmatprep.subr.mxu0 0.0
    %1565 = vmatpush1.msra.mxu0 0.0
    %1566 = vmatprep.subr.mxu0 0.0
    %1567 = vmatpush1.msra.mxu0 0.0
    %1568 = vmatprep.subr.mxu0 0.0
    %1569 = vmatpush1.msra.mxu0 0.0
    %1570 = vmatprep.subr.mxu0 0.0
    %1571 = vmatpush1.msra.mxu0 0.0
    %1572 = vmatprep.subr.mxu0 0.0
    %1573 = vmatpush1.msra.mxu0 0.0
    %1574 = vmatprep.mubr.f32.mxu0 0.0
    %1575 = vmatmul.mubr.f32.gmra.mrb[0].mxu0 %v212
    %v1576 = vpop.f32.mrb[0].mxu0
    %v1577 = vadd.f32 %v1407, %v1576
    %v1578 = vpop.f32.mrb[0].mxu0
    %1579 = vdwg.mxu0
    %1580 = vmatprep.subr.mxu0 0.0
    %1581 = vmatpush1.msra.mxu0 %v1360
    %1582 = vmatprep.subr.mxu0 0.0
    %1583 = vmatpush1.msra.mxu0 %v1361
    %1584 = vmatprep.subr.mxu0 0.0
    %1585 = vmatpush1.msra.mxu0 %v1362
    %1586 = vmatprep.subr.mxu0 0.0
    %1587 = vmatpush1.msra.mxu0 %v1363
    %1588 = vmatprep.subr.mxu0 0.0
    %1589 = vmatpush1.msra.mxu0 0.0
    %1590 = vmatprep.subr.mxu0 0.0
    %1591 = vmatpush1.msra.mxu0 0.0
    %1592 = vmatprep.subr.mxu0 0.0
    %1593 = vmatpush1.msra.mxu0 0.0
    %1594 = vmatprep.subr.mxu0 0.0
    %1595 = vmatpush1.msra.mxu0 0.0
    %1596 = vmatprep.subr.mxu0 0.0
    %1597 = vmatpush1.msra.mxu0 0.0
    %1598 = vmatprep.subr.mxu0 0.0
    %1599 = vmatpush1.msra.mxu0 0.0
    %1600 = vmatprep.subr.mxu0 0.0
    %1601 = vmatpush1.msra.mxu0 0.0
    %1602 = vmatprep.subr.mxu0 0.0
    %1603 = vmatpush1.msra.mxu0 0.0
    %1604 = vmatprep.subr.mxu0 0.0
    %1605 = vmatpush1.msra.mxu0 0.0
    %1606 = vmatprep.subr.mxu0 0.0
    %1607 = vmatpush1.msra.mxu0 0.0
    %1608 = vmatprep.subr.mxu0 0.0
    %1609 = vmatpush1.msra.mxu0 0.0
    %1610 = vmatprep.subr.mxu0 0.0
    %1611 = vmatpush1.msra.mxu0 0.0
    %1612 = vmatprep.subr.mxu0 0.0
    %1613 = vmatpush1.msra.mxu0 0.0
    %1614 = vmatprep.subr.mxu0 0.0
    %1615 = vmatpush1.msra.mxu0 0.0
    %1616 = vmatprep.subr.mxu0 0.0
    %1617 = vmatpush1.msra.mxu0 0.0
    %1618 = vmatprep.subr.mxu0 0.0
    %1619 = vmatpush1.msra.mxu0 0.0
    %1620 = vmatprep.subr.mxu0 0.0
    %1621 = vmatpush1.msra.mxu0 0.0
    %1622 = vmatprep.subr.mxu0 0.0
    %1623 = vmatpush1.msra.mxu0 0.0
    %1624 = vmatprep.subr.mxu0 0.0
    %1625 = vmatpush1.msra.mxu0 0.0
    %1626 = vmatprep.subr.mxu0 0.0
    %1627 = vmatpush1.msra.mxu0 0.0
    %1628 = vmatprep.subr.mxu0 0.0
    %1629 = vmatpush1.msra.mxu0 0.0
    %1630 = vmatprep.subr.mxu0 0.0
    %1631 = vmatpush1.msra.mxu0 0.0
    %1632 = vmatprep.subr.mxu0 0.0
    %1633 = vmatpush1.msra.mxu0 0.0
    %1634 = vmatprep.subr.mxu0 0.0
    %1635 = vmatpush1.msra.mxu0 0.0
    %1636 = vmatprep.subr.mxu0 0.0
    %1637 = vmatpush1.msra.mxu0 0.0
    %1638 = vmatprep.subr.mxu0 0.0
    %1639 = vmatpush1.msra.mxu0 0.0
    %1640 = vmatprep.subr.mxu0 0.0
    %1641 = vmatpush1.msra.mxu0 0.0
    %1642 = vmatprep.subr.mxu0 0.0
    %1643 = vmatpush1.msra.mxu0 0.0
    %1644 = vmatprep.mubr.f32.mxu0 0.0
    %1645 = vmatmul.mubr.f32.gmra.mrb[0].mxu0 %v139
    %v1646 = vpop.f32.mrb[0].mxu0
    %v1647 = vadd.f32 %v1411, %v1646
    %v1648 = vpop.f32.mrb[0].mxu0
    %1649 = vdwg.mxu0
    %1650 = vmatprep.subr.mxu0 0.0
    %1651 = vmatpush1.msra.mxu0 %v1364
    %1652 = vmatprep.subr.mxu0 0.0
    %1653 = vmatpush1.msra.mxu0 %v1365
    %1654 = vmatprep.subr.mxu0 0.0
    %1655 = vmatpush1.msra.mxu0 %v1366
    %1656 = vmatprep.subr.mxu0 0.0
    %1657 = vmatpush1.msra.mxu0 %v1367
    %1658 = vmatprep.subr.mxu0 0.0
    %1659 = vmatpush1.msra.mxu0 0.0
    %1660 = vmatprep.subr.mxu0 0.0
    %1661 = vmatpush1.msra.mxu0 0.0
    %1662 = vmatprep.subr.mxu0 0.0
    %1663 = vmatpush1.msra.mxu0 0.0
    %1664 = vmatprep.subr.mxu0 0.0
    %1665 = vmatpush1.msra.mxu0 0.0
    %1666 = vmatprep.subr.mxu0 0.0
    %1667 = vmatpush1.msra.mxu0 0.0
    %1668 = vmatprep.subr.mxu0 0.0
    %1669 = vmatpush1.msra.mxu0 0.0
    %1670 = vmatprep.subr.mxu0 0.0
    %1671 = vmatpush1.msra.mxu0 0.0
    %1672 = vmatprep.subr.mxu0 0.0
    %1673 = vmatpush1.msra.mxu0 0.0
    %1674 = vmatprep.subr.mxu0 0.0
    %1675 = vmatpush1.msra.mxu0 0.0
    %1676 = vmatprep.subr.mxu0 0.0
    %1677 = vmatpush1.msra.mxu0 0.0
    %1678 = vmatprep.subr.mxu0 0.0
    %1679 = vmatpush1.msra.mxu0 0.0
    %1680 = vmatprep.subr.mxu0 0.0
    %1681 = vmatpush1.msra.mxu0 0.0
    %1682 = vmatprep.subr.mxu0 0.0
    %1683 = vmatpush1.msra.mxu0 0.0
    %1684 = vmatprep.subr.mxu0 0.0
    %1685 = vmatpush1.msra.mxu0 0.0
    %1686 = vmatprep.subr.mxu0 0.0
    %1687 = vmatpush1.msra.mxu0 0.0
    %1688 = vmatprep.subr.mxu0 0.0
    %1689 = vmatpush1.msra.mxu0 0.0
    %1690 = vmatprep.subr.mxu0 0.0
    %1691 = vmatpush1.msra.mxu0 0.0
    %1692 = vmatprep.subr.mxu0 0.0
    %1693 = vmatpush1.msra.mxu0 0.0
    %1694 = vmatprep.subr.mxu0 0.0
    %1695 = vmatpush1.msra.mxu0 0.0
    %1696 = vmatprep.subr.mxu0 0.0
    %1697 = vmatpush1.msra.mxu0 0.0
    %1698 = vmatprep.subr.mxu0 0.0
    %1699 = vmatpush1.msra.mxu0 0.0
    %1700 = vmatprep.subr.mxu0 0.0
    %1701 = vmatpush1.msra.mxu0 0.0
    %1702 = vmatprep.subr.mxu0 0.0
    %1703 = vmatpush1.msra.mxu0 0.0
    %1704 = vmatprep.subr.mxu0 0.0
    %1705 = vmatpush1.msra.mxu0 0.0
    %1706 = vmatprep.subr.mxu0 0.0
    %1707 = vmatpush1.msra.mxu0 0.0
    %1708 = vmatprep.subr.mxu0 0.0
    %1709 = vmatpush1.msra.mxu0 0.0
    %1710 = vmatprep.subr.mxu0 0.0
    %1711 = vmatpush1.msra.mxu0 0.0
    %1712 = vmatprep.subr.mxu0 0.0
    %1713 = vmatpush1.msra.mxu0 0.0
    %1714 = vmatprep.mubr.f32.mxu0 0.0
    %1715 = vmatmul.mubr.f32.gmra.mrb[0].mxu0 %v212
    %v1716 = vpop.f32.mrb[0].mxu0
    %v1717 = vadd.f32 %v1415, %v1716
    %v1718 = vpop.f32.mrb[0].mxu0
    %1719 = vdwg.mxu0
    %1720 = vmatprep.subr.mxu0 0.0
    %1721 = vmatpush1.msra.mxu0 %v1368
    %1722 = vmatprep.subr.mxu0 0.0
    %1723 = vmatpush1.msra.mxu0 %v1369
    %1724 = vmatprep.subr.mxu0 0.0
    %1725 = vmatpush1.msra.mxu0 %v1370
    %1726 = vmatprep.subr.mxu0 0.0
    %1727 = vmatpush1.msra.mxu0 %v1371
    %1728 = vmatprep.subr.mxu0 0.0
    %1729 = vmatpush1.msra.mxu0 0.0
    %1730 = vmatprep.subr.mxu0 0.0
    %1731 = vmatpush1.msra.mxu0 0.0
    %1732 = vmatprep.subr.mxu0 0.0
    %1733 = vmatpush1.msra.mxu0 0.0
    %1734 = vmatprep.subr.mxu0 0.0
    %1735 = vmatpush1.msra.mxu0 0.0
    %1736 = vmatprep.subr.mxu0 0.0
    %1737 = vmatpush1.msra.mxu0 0.0
    %1738 = vmatprep.subr.mxu0 0.0
    %1739 = vmatpush1.msra.mxu0 0.0
    %1740 = vmatprep.subr.mxu0 0.0
    %1741 = vmatpush1.msra.mxu0 0.0
    %1742 = vmatprep.subr.mxu0 0.0
    %1743 = vmatpush1.msra.mxu0 0.0
    %1744 = vmatprep.subr.mxu0 0.0
    %1745 = vmatpush1.msra.mxu0 0.0
    %1746 = vmatprep.subr.mxu0 0.0
    %1747 = vmatpush1.msra.mxu0 0.0
    %1748 = vmatprep.subr.mxu0 0.0
    %1749 = vmatpush1.msra.mxu0 0.0
    %1750 = vmatprep.subr.mxu0 0.0
    %1751 = vmatpush1.msra.mxu0 0.0
    %1752 = vmatprep.subr.mxu0 0.0
    %1753 = vmatpush1.msra.mxu0 0.0
    %1754 = vmatprep.subr.mxu0 0.0
    %1755 = vmatpush1.msra.mxu0 0.0
    %1756 = vmatprep.subr.mxu0 0.0
    %1757 = vmatpush1.msra.mxu0 0.0
    %1758 = vmatprep.subr.mxu0 0.0
    %1759 = vmatpush1.msra.mxu0 0.0
    %1760 = vmatprep.subr.mxu0 0.0
    %1761 = vmatpush1.msra.mxu0 0.0
    %1762 = vmatprep.subr.mxu0 0.0
    %1763 = vmatpush1.msra.mxu0 0.0
    %1764 = vmatprep.subr.mxu0 0.0
    %1765 = vmatpush1.msra.mxu0 0.0
    %1766 = vmatprep.subr.mxu0 0.0
    %1767 = vmatpush1.msra.mxu0 0.0
    %1768 = vmatprep.subr.mxu0 0.0
    %1769 = vmatpush1.msra.mxu0 0.0
    %1770 = vmatprep.subr.mxu0 0.0
    %1771 = vmatpush1.msra.mxu0 0.0
    %1772 = vmatprep.subr.mxu0 0.0
    %1773 = vmatpush1.msra.mxu0 0.0
    %1774 = vmatprep.subr.mxu0 0.0
    %1775 = vmatpush1.msra.mxu0 0.0
    %1776 = vmatprep.subr.mxu0 0.0
    %1777 = vmatpush1.msra.mxu0 0.0
    %1778 = vmatprep.subr.mxu0 0.0
    %1779 = vmatpush1.msra.mxu0 0.0
    %1780 = vmatprep.subr.mxu0 0.0
    %1781 = vmatpush1.msra.mxu0 0.0
    %1782 = vmatprep.subr.mxu0 0.0
    %1783 = vmatpush1.msra.mxu0 0.0
    %1784 = vmatprep.mubr.f32.mxu0 0.0
    %1785 = vmatmul.mubr.f32.gmra.mrb[0].mxu0 %v139
    %v1786 = vpop.f32.mrb[0].mxu0
    %v1787 = vadd.f32 %v1419, %v1786
    %v1788 = vpop.f32.mrb[0].mxu0
    %1789 = vdwg.mxu0
    %1790 = vmatprep.subr.mxu0 0.0
    %1791 = vmatpush1.msra.mxu0 %v1372
    %1792 = vmatprep.subr.mxu0 0.0
    %1793 = vmatpush1.msra.mxu0 %v1373
    %1794 = vmatprep.subr.mxu0 0.0
    %1795 = vmatpush1.msra.mxu0 %v1374
    %1796 = vmatprep.subr.mxu0 0.0
    %1797 = vmatpush1.msra.mxu0 %v1375
    %1798 = vmatprep.subr.mxu0 0.0
    %1799 = vmatpush1.msra.mxu0 0.0
    %1800 = vmatprep.subr.mxu0 0.0
    %1801 = vmatpush1.msra.mxu0 0.0
    %1802 = vmatprep.subr.mxu0 0.0
    %1803 = vmatpush1.msra.mxu0 0.0
    %1804 = vmatprep.subr.mxu0 0.0
    %1805 = vmatpush1.msra.mxu0 0.0
    %1806 = vmatprep.subr.mxu0 0.0
    %1807 = vmatpush1.msra.mxu0 0.0
    %1808 = vmatprep.subr.mxu0 0.0
    %1809 = vmatpush1.msra.mxu0 0.0
    %1810 = vmatprep.subr.mxu0 0.0
    %1811 = vmatpush1.msra.mxu0 0.0
    %1812 = vmatprep.subr.mxu0 0.0
    %1813 = vmatpush1.msra.mxu0 0.0
    %1814 = vmatprep.subr.mxu0 0.0
    %1815 = vmatpush1.msra.mxu0 0.0
    %1816 = vmatprep.subr.mxu0 0.0
    %1817 = vmatpush1.msra.mxu0 0.0
    %1818 = vmatprep.subr.mxu0 0.0
    %1819 = vmatpush1.msra.mxu0 0.0
    %1820 = vmatprep.subr.mxu0 0.0
    %1821 = vmatpush1.msra.mxu0 0.0
    %1822 = vmatprep.subr.mxu0 0.0
    %1823 = vmatpush1.msra.mxu0 0.0
    %1824 = vmatprep.subr.mxu0 0.0
    %1825 = vmatpush1.msra.mxu0 0.0
    %1826 = vmatprep.subr.mxu0 0.0
    %1827 = vmatpush1.msra.mxu0 0.0
    %1828 = vmatprep.subr.mxu0 0.0
    %1829 = vmatpush1.msra.mxu0 0.0
    %1830 = vmatprep.subr.mxu0 0.0
    %1831 = vmatpush1.msra.mxu0 0.0
    %1832 = vmatprep.subr.mxu0 0.0
    %1833 = vmatpush1.msra.mxu0 0.0
    %1834 = vmatprep.subr.mxu0 0.0
    %1835 = vmatpush1.msra.mxu0 0.0
    %1836 = vmatprep.subr.mxu0 0.0
    %1837 = vmatpush1.msra.mxu0 0.0
    %1838 = vmatprep.subr.mxu0 0.0
    %1839 = vmatpush1.msra.mxu0 0.0
    %1840 = vmatprep.subr.mxu0 0.0
    %1841 = vmatpush1.msra.mxu0 0.0
    %1842 = vmatprep.subr.mxu0 0.0
    %1843 = vmatpush1.msra.mxu0 0.0
    %1844 = vmatprep.subr.mxu0 0.0
    %1845 = vmatpush1.msra.mxu0 0.0
    %1846 = vmatprep.subr.mxu0 0.0
    %1847 = vmatpush1.msra.mxu0 0.0
    %1848 = vmatprep.subr.mxu0 0.0
    %1849 = vmatpush1.msra.mxu0 0.0
    %1850 = vmatprep.subr.mxu0 0.0
    %1851 = vmatpush1.msra.mxu0 0.0
    %1852 = vmatprep.subr.mxu0 0.0
    %1853 = vmatpush1.msra.mxu0 0.0
    %1854 = vmatprep.mubr.f32.mxu0 0.0
    %1855 = vmatmul.mubr.f32.gmra.mrb[0].mxu0 %v212
    %v1856 = vpop.f32.mrb[0].mxu0
    %v1857 = vadd.f32 %v1423, %v1856
    %v1858 = vpop.f32.mrb[0].mxu0
    %1859 = vdwg.mxu0
    %1860 = vmatprep.subr.mxu0 0.0
    %1861 = vmatpush1.msra.mxu0 %v1376
    %1862 = vmatprep.subr.mxu0 0.0
    %1863 = vmatpush1.msra.mxu0 %v1377
    %1864 = vmatprep.subr.mxu0 0.0
    %1865 = vmatpush1.msra.mxu0 %v1378
    %1866 = vmatprep.subr.mxu0 0.0
    %1867 = vmatpush1.msra.mxu0 %v1379
    %1868 = vmatprep.subr.mxu0 0.0
    %1869 = vmatpush1.msra.mxu0 0.0
    %1870 = vmatprep.subr.mxu0 0.0
    %1871 = vmatpush1.msra.mxu0 0.0
    %1872 = vmatprep.subr.mxu0 0.0
    %1873 = vmatpush1.msra.mxu0 0.0
    %1874 = vmatprep.subr.mxu0 0.0
    %1875 = vmatpush1.msra.mxu0 0.0
    %1876 = vmatprep.subr.mxu0 0.0
    %1877 = vmatpush1.msra.mxu0 0.0
    %1878 = vmatprep.subr.mxu0 0.0
    %1879 = vmatpush1.msra.mxu0 0.0
    %1880 = vmatprep.subr.mxu0 0.0
    %1881 = vmatpush1.msra.mxu0 0.0
    %1882 = vmatprep.subr.mxu0 0.0
    %1883 = vmatpush1.msra.mxu0 0.0
    %1884 = vmatprep.subr.mxu0 0.0
    %1885 = vmatpush1.msra.mxu0 0.0
    %1886 = vmatprep.subr.mxu0 0.0
    %1887 = vmatpush1.msra.mxu0 0.0
    %1888 = vmatprep.subr.mxu0 0.0
    %1889 = vmatpush1.msra.mxu0 0.0
    %1890 = vmatprep.subr.mxu0 0.0
    %1891 = vmatpush1.msra.mxu0 0.0
    %1892 = vmatprep.subr.mxu0 0.0
    %1893 = vmatpush1.msra.mxu0 0.0
    %1894 = vmatprep.subr.mxu0 0.0
    %1895 = vmatpush1.msra.mxu0 0.0
    %1896 = vmatprep.subr.mxu0 0.0
    %1897 = vmatpush1.msra.mxu0 0.0
    %1898 = vmatprep.subr.mxu0 0.0
    %1899 = vmatpush1.msra.mxu0 0.0
    %1900 = vmatprep.subr.mxu0 0.0
    %1901 = vmatpush1.msra.mxu0 0.0
    %1902 = vmatprep.subr.mxu0 0.0
    %1903 = vmatpush1.msra.mxu0 0.0
    %1904 = vmatprep.subr.mxu0 0.0
    %1905 = vmatpush1.msra.mxu0 0.0
    %1906 = vmatprep.subr.mxu0 0.0
    %1907 = vmatpush1.msra.mxu0 0.0
    %1908 = vmatprep.subr.mxu0 0.0
    %1909 = vmatpush1.msra.mxu0 0.0
    %1910 = vmatprep.subr.mxu0 0.0
    %1911 = vmatpush1.msra.mxu0 0.0
    %1912 = vmatprep.subr.mxu0 0.0
    %1913 = vmatpush1.msra.mxu0 0.0
    %1914 = vmatprep.subr.mxu0 0.0
    %1915 = vmatpush1.msra.mxu0 0.0
    %1916 = vmatprep.subr.mxu0 0.0
    %1917 = vmatpush1.msra.mxu0 0.0
    %1918 = vmatprep.subr.mxu0 0.0
    %1919 = vmatpush1.msra.mxu0 0.0
    %1920 = vmatprep.subr.mxu0 0.0
    %1921 = vmatpush1.msra.mxu0 0.0
    %1922 = vmatprep.subr.mxu0 0.0
    %1923 = vmatpush1.msra.mxu0 0.0
    %1924 = vmatprep.mubr.f32.mxu0 0.0
    %1925 = vmatmul.mubr.f32.gmra.mrb[0].mxu0 %v139
    %v1926 = vpop.f32.mrb[0].mxu0
    %v1927 = vadd.f32 %v1427, %v1926
    %v1928 = vpop.f32.mrb[0].mxu0
    %1929 = vdwg.mxu0
    %1930 = vmatprep.subr.mxu0 0.0
    %1931 = vmatpush1.msra.mxu0 %v1380
    %1932 = vmatprep.subr.mxu0 0.0
    %1933 = vmatpush1.msra.mxu0 %v1381
    %1934 = vmatprep.subr.mxu0 0.0
    %1935 = vmatpush1.msra.mxu0 %v1382
    %1936 = vmatprep.subr.mxu0 0.0
    %1937 = vmatpush1.msra.mxu0 %v1383
    %1938 = vmatprep.subr.mxu0 0.0
    %1939 = vmatpush1.msra.mxu0 0.0
    %1940 = vmatprep.subr.mxu0 0.0
    %1941 = vmatpush1.msra.mxu0 0.0
    %1942 = vmatprep.subr.mxu0 0.0
    %1943 = vmatpush1.msra.mxu0 0.0
    %1944 = vmatprep.subr.mxu0 0.0
    %1945 = vmatpush1.msra.mxu0 0.0
    %1946 = vmatprep.subr.mxu0 0.0
    %1947 = vmatpush1.msra.mxu0 0.0
    %1948 = vmatprep.subr.mxu0 0.0
    %1949 = vmatpush1.msra.mxu0 0.0
    %1950 = vmatprep.subr.mxu0 0.0
    %1951 = vmatpush1.msra.mxu0 0.0
    %1952 = vmatprep.subr.mxu0 0.0
    %1953 = vmatpush1.msra.mxu0 0.0
    %1954 = vmatprep.subr.mxu0 0.0
    %1955 = vmatpush1.msra.mxu0 0.0
    %1956 = vmatprep.subr.mxu0 0.0
    %1957 = vmatpush1.msra.mxu0 0.0
    %1958 = vmatprep.subr.mxu0 0.0
    %1959 = vmatpush1.msra.mxu0 0.0
    %1960 = vmatprep.subr.mxu0 0.0
    %1961 = vmatpush1.msra.mxu0 0.0
    %1962 = vmatprep.subr.mxu0 0.0
    %1963 = vmatpush1.msra.mxu0 0.0
    %1964 = vmatprep.subr.mxu0 0.0
    %1965 = vmatpush1.msra.mxu0 0.0
    %1966 = vmatprep.subr.mxu0 0.0
    %1967 = vmatpush1.msra.mxu0 0.0
    %1968 = vmatprep.subr.mxu0 0.0
    %1969 = vmatpush1.msra.mxu0 0.0
    %1970 = vmatprep.subr.mxu0 0.0
    %1971 = vmatpush1.msra.mxu0 0.0
    %1972 = vmatprep.subr.mxu0 0.0
    %1973 = vmatpush1.msra.mxu0 0.0
    %1974 = vmatprep.subr.mxu0 0.0
    %1975 = vmatpush1.msra.mxu0 0.0
    %1976 = vmatprep.subr.mxu0 0.0
    %1977 = vmatpush1.msra.mxu0 0.0
    %1978 = vmatprep.subr.mxu0 0.0
    %1979 = vmatpush1.msra.mxu0 0.0
    %1980 = vmatprep.subr.mxu0 0.0
    %1981 = vmatpush1.msra.mxu0 0.0
    %1982 = vmatprep.subr.mxu0 0.0
    %1983 = vmatpush1.msra.mxu0 0.0
    %1984 = vmatprep.subr.mxu0 0.0
    %1985 = vmatpush1.msra.mxu0 0.0
    %1986 = vmatprep.subr.mxu0 0.0
    %1987 = vmatpush1.msra.mxu0 0.0
    %1988 = vmatprep.subr.mxu0 0.0
    %1989 = vmatpush1.msra.mxu0 0.0
    %1990 = vmatprep.subr.mxu0 0.0
    %1991 = vmatpush1.msra.mxu0 0.0
    %1992 = vmatprep.subr.mxu0 0.0
    %1993 = vmatpush1.msra.mxu0 0.0
    %1994 = vmatprep.mubr.f32.mxu0 0.0
    %1995 = vmatmul.mubr.f32.gmra.mrb[0].mxu0 %v212
    %v1996 = vpop.f32.mrb[0].mxu0
    %v1997 = vadd.f32 %v1431, %v1996
    %v1998 = vpop.f32.mrb[0].mxu0
    %1999 = vdwg.mxu0
    %vm2000 = vcmask 64512
    %v2002 = vsel %vm2000, %v208, 0
    %v2005 = vsel %vm2000, %v859, 0
    %2007 = vmatprep.subr.mxu0 0.0
    %2008 = vmatpush1.xpose.msra.mxu0 %v2005
    %2009 = vmatprep.subr.mxu0 0.0
    %2010 = vmatpush1.xpose.msra.mxu0 0.0
    %2011 = vmatprep.subr.mxu0 0.0
    %2012 = vmatpush1.xpose.msra.mxu0 0.0
    %2013 = vmatprep.subr.mxu0 0.0
    %2014 = vmatpush1.xpose.msra.mxu0 0.0
    %2015 = vmatprep.subr.mxu0 0.0
    %2016 = vmatpush1.xpose.msra.mxu0 0.0
    %2017 = vmatprep.subr.mxu0 0.0
    %2018 = vmatpush1.xpose.msra.mxu0 0.0
    %2019 = vmatprep.subr.mxu0 0.0
    %2020 = vmatpush1.xpose.msra.mxu0 0.0
    %2021 = vmatprep.subr.mxu0 0.0
    %2022 = vmatpush1.xpose.msra.mxu0 0.0
    %2023 = vmatprep.subr.mxu0 0.0
    %2024 = vmatpush1.xpose.msra.mxu0 0.0
    %2025 = vmatprep.subr.mxu0 0.0
    %2026 = vmatpush1.xpose.msra.mxu0 0.0
    %2027 = vmatprep.subr.mxu0 0.0
    %2028 = vmatpush1.xpose.msra.mxu0 0.0
    %2029 = vmatprep.subr.mxu0 0.0
    %2030 = vmatpush1.xpose.msra.mxu0 0.0
    %2031 = vmatprep.subr.mxu0 0.0
    %2032 = vmatpush1.xpose.msra.mxu0 0.0
    %2033 = vmatprep.subr.mxu0 0.0
    %2034 = vmatpush1.xpose.msra.mxu0 0.0
    %2035 = vmatprep.subr.mxu0 0.0
    %2036 = vmatpush1.xpose.msra.mxu0 0.0
    %2037 = vmatprep.subr.mxu0 0.0
    %2038 = vmatpush1.xpose.msra.mxu0 0.0
    %2039 = vmatprep.subr.mxu0 0.0
    %2040 = vmatpush1.xpose.msra.mxu0 0.0
    %2041 = vmatprep.subr.mxu0 0.0
    %2042 = vmatpush1.xpose.msra.mxu0 0.0
    %2043 = vmatprep.subr.mxu0 0.0
    %2044 = vmatpush1.xpose.msra.mxu0 0.0
    %2045 = vmatprep.subr.mxu0 0.0
    %2046 = vmatpush1.xpose.msra.mxu0 0.0
    %2047 = vmatprep.subr.mxu0 0.0
    %2048 = vmatpush1.xpose.msra.mxu0 0.0
    %2049 = vmatprep.subr.mxu0 0.0
    %2050 = vmatpush1.xpose.msra.mxu0 0.0
    %2051 = vmatprep.subr.mxu0 0.0
    %2052 = vmatpush1.xpose.msra.mxu0 0.0
    %2053 = vmatprep.subr.mxu0 0.0
    %2054 = vmatpush1.xpose.msra.mxu0 0.0
    %2055 = vmatprep.subr.mxu0 0.0
    %2056 = vmatpush1.xpose.msra.mxu0 0.0
    %2057 = vmatprep.subr.mxu0 0.0
    %2058 = vmatpush1.xpose.msra.mxu0 0.0
    %2059 = vmatprep.subr.mxu0 0.0
    %2060 = vmatpush1.xpose.msra.mxu0 0.0
    %2061 = vmatprep.subr.mxu0 0.0
    %2062 = vmatpush1.xpose.msra.mxu0 0.0
    %2063 = vmatprep.subr.mxu0 0.0
    %2064 = vmatpush1.xpose.msra.mxu0 0.0
    %2065 = vmatprep.subr.mxu0 0.0
    %2066 = vmatpush1.xpose.msra.mxu0 0.0
    %2067 = vmatprep.subr.mxu0 0.0
    %2068 = vmatpush1.xpose.msra.mxu0 0.0
    %2069 = vmatprep.subr.mxu0 0.0
    %2070 = vmatpush1.xpose.msra.mxu0 0.0
    %2071 = vmatprep.mubr.f32.mxu0 0.0
    %2072 = vmatmul.mubr.f32.gmra.mrb[0].mxu0 %v2002
    %v2073 = vpop.f32.mrb[0].mxu0
    %v2074 = vadd.f32 0.0, %v2073
    %v2075 = vpop.f32.mrb[0].mxu0
    %2076 = vdwg.mxu0
    %v2078 = vsel %vm2000, %v281, 0
    %v2081 = vsel %vm2000, %v929, 0
    %2083 = vmatprep.subr.mxu0 0.0
    %2084 = vmatpush1.xpose.msra.mxu0 %v2081
    %2085 = vmatprep.subr.mxu0 0.0
    %2086 = vmatpush1.xpose.msra.mxu0 0.0
    %2087 = vmatprep.subr.mxu0 0.0
    %2088 = vmatpush1.xpose.msra.mxu0 0.0
    %2089 = vmatprep.subr.mxu0 0.0
    %2090 = vmatpush1.xpose.msra.mxu0 0.0
    %2091 = vmatprep.subr.mxu0 0.0
    %2092 = vmatpush1.xpose.msra.mxu0 0.0
    %2093 = vmatprep.subr.mxu0 0.0
    %2094 = vmatpush1.xpose.msra.mxu0 0.0
    %2095 = vmatprep.subr.mxu0 0.0
    %2096 = vmatpush1.xpose.msra.mxu0 0.0
    %2097 = vmatprep.subr.mxu0 0.0
    %2098 = vmatpush1.xpose.msra.mxu0 0.0
    %2099 = vmatprep.subr.mxu0 0.0
    %2100 = vmatpush1.xpose.msra.mxu0 0.0
    %2101 = vmatprep.subr.mxu0 0.0
    %2102 = vmatpush1.xpose.msra.mxu0 0.0
    %2103 = vmatprep.subr.mxu0 0.0
    %2104 = vmatpush1.xpose.msra.mxu0 0.0
    %2105 = vmatprep.subr.mxu0 0.0
    %2106 = vmatpush1.xpose.msra.mxu0 0.0
    %2107 = vmatprep.subr.mxu0 0.0
    %2108 = vmatpush1.xpose.msra.mxu0 0.0
    %2109 = vmatprep.subr.mxu0 0.0
    %2110 = vmatpush1.xpose.msra.mxu0 0.0
    %2111 = vmatprep.subr.mxu0 0.0
    %2112 = vmatpush1.xpose.msra.mxu0 0.0
    %2113 = vmatprep.subr.mxu0 0.0
    %2114 = vmatpush1.xpose.msra.mxu0 0.0
    %2115 = vmatprep.subr.mxu0 0.0
    %2116 = vmatpush1.xpose.msra.mxu0 0.0
    %2117 = vmatprep.subr.mxu0 0.0
    %2118 = vmatpush1.xpose.msra.mxu0 0.0
    %2119 = vmatprep.subr.mxu0 0.0
    %2120 = vmatpush1.xpose.msra.mxu0 0.0
    %2121 = vmatprep.subr.mxu0 0.0
    %2122 = vmatpush1.xpose.msra.mxu0 0.0
    %2123 = vmatprep.subr.mxu0 0.0
    %2124 = vmatpush1.xpose.msra.mxu0 0.0
    %2125 = vmatprep.subr.mxu0 0.0
    %2126 = vmatpush1.xpose.msra.mxu0 0.0
    %2127 = vmatprep.subr.mxu0 0.0
    %2128 = vmatpush1.xpose.msra.mxu0 0.0
    %2129 = vmatprep.subr.mxu0 0.0
    %2130 = vmatpush1.xpose.msra.mxu0 0.0
    %2131 = vmatprep.subr.mxu0 0.0
    %2132 = vmatpush1.xpose.msra.mxu0 0.0
    %2133 = vmatprep.subr.mxu0 0.0
    %2134 = vmatpush1.xpose.msra.mxu0 0.0
    %2135 = vmatprep.subr.mxu0 0.0
    %2136 = vmatpush1.xpose.msra.mxu0 0.0
    %2137 = vmatprep.subr.mxu0 0.0
    %2138 = vmatpush1.xpose.msra.mxu0 0.0
    %2139 = vmatprep.subr.mxu0 0.0
    %2140 = vmatpush1.xpose.msra.mxu0 0.0
    %2141 = vmatprep.subr.mxu0 0.0
    %2142 = vmatpush1.xpose.msra.mxu0 0.0
    %2143 = vmatprep.subr.mxu0 0.0
    %2144 = vmatpush1.xpose.msra.mxu0 0.0
    %2145 = vmatprep.subr.mxu0 0.0
    %2146 = vmatpush1.xpose.msra.mxu0 0.0
    %2147 = vmatprep.mubr.f32.mxu0 0.0
    %2148 = vmatmul.mubr.f32.gmra.mrb[0].mxu0 %v2078
    %v2149 = vpop.f32.mrb[0].mxu0
    %v2150 = vadd.f32 0.0, %v2149
    %v2151 = vpop.f32.mrb[0].mxu0
    %2152 = vdwg.mxu0
    %v2154 = vsel %vm2000, %v351, 0
    %v2157 = vsel %vm2000, %v999, 0
    %2159 = vmatprep.subr.mxu0 0.0
    %2160 = vmatpush1.xpose.msra.mxu0 %v2157
    %2161 = vmatprep.subr.mxu0 0.0
    %2162 = vmatpush1.xpose.msra.mxu0 0.0
    %2163 = vmatprep.subr.mxu0 0.0
    %2164 = vmatpush1.xpose.msra.mxu0 0.0
    %2165 = vmatprep.subr.mxu0 0.0
    %2166 = vmatpush1.xpose.msra.mxu0 0.0
    %2167 = vmatprep.subr.mxu0 0.0
    %2168 = vmatpush1.xpose.msra.mxu0 0.0
    %2169 = vmatprep.subr.mxu0 0.0
    %2170 = vmatpush1.xpose.msra.mxu0 0.0
    %2171 = vmatprep.subr.mxu0 0.0
    %2172 = vmatpush1.xpose.msra.mxu0 0.0
    %2173 = vmatprep.subr.mxu0 0.0
    %2174 = vmatpush1.xpose.msra.mxu0 0.0
    %2175 = vmatprep.subr.mxu0 0.0
    %2176 = vmatpush1.xpose.msra.mxu0 0.0
    %2177 = vmatprep.subr.mxu0 0.0
    %2178 = vmatpush1.xpose.msra.mxu0 0.0
    %2179 = vmatprep.subr.mxu0 0.0
    %2180 = vmatpush1.xpose.msra.mxu0 0.0
    %2181 = vmatprep.subr.mxu0 0.0
    %2182 = vmatpush1.xpose.msra.mxu0 0.0
    %2183 = vmatprep.subr.mxu0 0.0
    %2184 = vmatpush1.xpose.msra.mxu0 0.0
    %2185 = vmatprep.subr.mxu0 0.0
    %2186 = vmatpush1.xpose.msra.mxu0 0.0
    %2187 = vmatprep.subr.mxu0 0.0
    %2188 = vmatpush1.xpose.msra.mxu0 0.0
    %2189 = vmatprep.subr.mxu0 0.0
    %2190 = vmatpush1.xpose.msra.mxu0 0.0
    %2191 = vmatprep.subr.mxu0 0.0
    %2192 = vmatpush1.xpose.msra.mxu0 0.0
    %2193 = vmatprep.subr.mxu0 0.0
    %2194 = vmatpush1.xpose.msra.mxu0 0.0
    %2195 = vmatprep.subr.mxu0 0.0
    %2196 = vmatpush1.xpose.msra.mxu0 0.0
    %2197 = vmatprep.subr.mxu0 0.0
    %2198 = vmatpush1.xpose.msra.mxu0 0.0
    %2199 = vmatprep.subr.mxu0 0.0
    %2200 = vmatpush1.xpose.msra.mxu0 0.0
    %2201 = vmatprep.subr.mxu0 0.0
    %2202 = vmatpush1.xpose.msra.mxu0 0.0
    %2203 = vmatprep.subr.mxu0 0.0
    %2204 = vmatpush1.xpose.msra.mxu0 0.0
    %2205 = vmatprep.subr.mxu0 0.0
    %2206 = vmatpush1.xpose.msra.mxu0 0.0
    %2207 = vmatprep.subr.mxu0 0.0
    %2208 = vmatpush1.xpose.msra.mxu0 0.0
    %2209 = vmatprep.subr.mxu0 0.0
    %2210 = vmatpush1.xpose.msra.mxu0 0.0
    %2211 = vmatprep.subr.mxu0 0.0
    %2212 = vmatpush1.xpose.msra.mxu0 0.0
    %2213 = vmatprep.subr.mxu0 0.0
    %2214 = vmatpush1.xpose.msra.mxu0 0.0
    %2215 = vmatprep.subr.mxu0 0.0
    %2216 = vmatpush1.xpose.msra.mxu0 0.0
    %2217 = vmatprep.subr.mxu0 0.0
    %2218 = vmatpush1.xpose.msra.mxu0 0.0
    %2219 = vmatprep.subr.mxu0 0.0
    %2220 = vmatpush1.xpose.msra.mxu0 0.0
    %2221 = vmatprep.subr.mxu0 0.0
    %2222 = vmatpush1.xpose.msra.mxu0 0.0
    %2223 = vmatprep.mubr.f32.mxu0 0.0
    %2224 = vmatmul.mubr.f32.gmra.mrb[0].mxu0 %v2154
    %v2225 = vpop.f32.mrb[0].mxu0
    %v2226 = vadd.f32 0.0, %v2225
    %v2227 = vpop.f32.mrb[0].mxu0
    %2228 = vdwg.mxu0
    %v2230 = vsel %vm2000, %v421, 0
    %v2233 = vsel %vm2000, %v1069, 0
    %2235 = vmatprep.subr.mxu0 0.0
    %2236 = vmatpush1.xpose.msra.mxu0 %v2233
    %2237 = vmatprep.subr.mxu0 0.0
    %2238 = vmatpush1.xpose.msra.mxu0 0.0
    %2239 = vmatprep.subr.mxu0 0.0
    %2240 = vmatpush1.xpose.msra.mxu0 0.0
    %2241 = vmatprep.subr.mxu0 0.0
    %2242 = vmatpush1.xpose.msra.mxu0 0.0
    %2243 = vmatprep.subr.mxu0 0.0
    %2244 = vmatpush1.xpose.msra.mxu0 0.0
    %2245 = vmatprep.subr.mxu0 0.0
    %2246 = vmatpush1.xpose.msra.mxu0 0.0
    %2247 = vmatprep.subr.mxu0 0.0
    %2248 = vmatpush1.xpose.msra.mxu0 0.0
    %2249 = vmatprep.subr.mxu0 0.0
    %2250 = vmatpush1.xpose.msra.mxu0 0.0
    %2251 = vmatprep.subr.mxu0 0.0
    %2252 = vmatpush1.xpose.msra.mxu0 0.0
    %2253 = vmatprep.subr.mxu0 0.0
    %2254 = vmatpush1.xpose.msra.mxu0 0.0
    %2255 = vmatprep.subr.mxu0 0.0
    %2256 = vmatpush1.xpose.msra.mxu0 0.0
    %2257 = vmatprep.subr.mxu0 0.0
    %2258 = vmatpush1.xpose.msra.mxu0 0.0
    %2259 = vmatprep.subr.mxu0 0.0
    %2260 = vmatpush1.xpose.msra.mxu0 0.0
    %2261 = vmatprep.subr.mxu0 0.0
    %2262 = vmatpush1.xpose.msra.mxu0 0.0
    %2263 = vmatprep.subr.mxu0 0.0
    %2264 = vmatpush1.xpose.msra.mxu0 0.0
    %2265 = vmatprep.subr.mxu0 0.0
    %2266 = vmatpush1.xpose.msra.mxu0 0.0
    %2267 = vmatprep.subr.mxu0 0.0
    %2268 = vmatpush1.xpose.msra.mxu0 0.0
    %2269 = vmatprep.subr.mxu0 0.0
    %2270 = vmatpush1.xpose.msra.mxu0 0.0
    %2271 = vmatprep.subr.mxu0 0.0
    %2272 = vmatpush1.xpose.msra.mxu0 0.0
    %2273 = vmatprep.subr.mxu0 0.0
    %2274 = vmatpush1.xpose.msra.mxu0 0.0
    %2275 = vmatprep.subr.mxu0 0.0
    %2276 = vmatpush1.xpose.msra.mxu0 0.0
    %2277 = vmatprep.subr.mxu0 0.0
    %2278 = vmatpush1.xpose.msra.mxu0 0.0
    %2279 = vmatprep.subr.mxu0 0.0
    %2280 = vmatpush1.xpose.msra.mxu0 0.0
    %2281 = vmatprep.subr.mxu0 0.0
    %2282 = vmatpush1.xpose.msra.mxu0 0.0
    %2283 = vmatprep.subr.mxu0 0.0
    %2284 = vmatpush1.xpose.msra.mxu0 0.0
    %2285 = vmatprep.subr.mxu0 0.0
    %2286 = vmatpush1.xpose.msra.mxu0 0.0
    %2287 = vmatprep.subr.mxu0 0.0
    %2288 = vmatpush1.xpose.msra.mxu0 0.0
    %2289 = vmatprep.subr.mxu0 0.0
    %2290 = vmatpush1.xpose.msra.mxu0 0.0
    %2291 = vmatprep.subr.mxu0 0.0
    %2292 = vmatpush1.xpose.msra.mxu0 0.0
    %2293 = vmatprep.subr.mxu0 0.0
    %2294 = vmatpush1.xpose.msra.mxu0 0.0
    %2295 = vmatprep.subr.mxu0 0.0
    %2296 = vmatpush1.xpose.msra.mxu0 0.0
    %2297 = vmatprep.subr.mxu0 0.0
    %2298 = vmatpush1.xpose.msra.mxu0 0.0
    %2299 = vmatprep.mubr.f32.mxu0 0.0
    %2300 = vmatmul.mubr.f32.gmra.mrb[0].mxu0 %v2230
    %v2301 = vpop.f32.mrb[0].mxu0
    %v2302 = vadd.f32 0.0, %v2301
    %v2303 = vpop.f32.mrb[0].mxu0
    %2304 = vdwg.mxu0
    %v2306 = vsel %vm2000, %v491, 0
    %v2309 = vsel %vm2000, %v1139, 0
    %2311 = vmatprep.subr.mxu0 0.0
    %2312 = vmatpush1.xpose.msra.mxu0 %v2309
    %2313 = vmatprep.subr.mxu0 0.0
    %2314 = vmatpush1.xpose.msra.mxu0 0.0
    %2315 = vmatprep.subr.mxu0 0.0
    %2316 = vmatpush1.xpose.msra.mxu0 0.0
    %2317 = vmatprep.subr.mxu0 0.0
    %2318 = vmatpush1.xpose.msra.mxu0 0.0
    %2319 = vmatprep.subr.mxu0 0.0
    %2320 = vmatpush1.xpose.msra.mxu0 0.0
    %2321 = vmatprep.subr.mxu0 0.0
    %2322 = vmatpush1.xpose.msra.mxu0 0.0
    %2323 = vmatprep.subr.mxu0 0.0
    %2324 = vmatpush1.xpose.msra.mxu0 0.0
    %2325 = vmatprep.subr.mxu0 0.0
    %2326 = vmatpush1.xpose.msra.mxu0 0.0
    %2327 = vmatprep.subr.mxu0 0.0
    %2328 = vmatpush1.xpose.msra.mxu0 0.0
    %2329 = vmatprep.subr.mxu0 0.0
    %2330 = vmatpush1.xpose.msra.mxu0 0.0
    %2331 = vmatprep.subr.mxu0 0.0
    %2332 = vmatpush1.xpose.msra.mxu0 0.0
    %2333 = vmatprep.subr.mxu0 0.0
    %2334 = vmatpush1.xpose.msra.mxu0 0.0
    %2335 = vmatprep.subr.mxu0 0.0
    %2336 = vmatpush1.xpose.msra.mxu0 0.0
    %2337 = vmatprep.subr.mxu0 0.0
    %2338 = vmatpush1.xpose.msra.mxu0 0.0
    %2339 = vmatprep.subr.mxu0 0.0
    %2340 = vmatpush1.xpose.msra.mxu0 0.0
    %2341 = vmatprep.subr.mxu0 0.0
    %2342 = vmatpush1.xpose.msra.mxu0 0.0
    %2343 = vmatprep.subr.mxu0 0.0
    %2344 = vmatpush1.xpose.msra.mxu0 0.0
    %2345 = vmatprep.subr.mxu0 0.0
    %2346 = vmatpush1.xpose.msra.mxu0 0.0
    %2347 = vmatprep.subr.mxu0 0.0
    %2348 = vmatpush1.xpose.msra.mxu0 0.0
    %2349 = vmatprep.subr.mxu0 0.0
    %2350 = vmatpush1.xpose.msra.mxu0 0.0
    %2351 = vmatprep.subr.mxu0 0.0
    %2352 = vmatpush1.xpose.msra.mxu0 0.0
    %2353 = vmatprep.subr.mxu0 0.0
    %2354 = vmatpush1.xpose.msra.mxu0 0.0
    %2355 = vmatprep.subr.mxu0 0.0
    %2356 = vmatpush1.xpose.msra.mxu0 0.0
    %2357 = vmatprep.subr.mxu0 0.0
    %2358 = vmatpush1.xpose.msra.mxu0 0.0
    %2359 = vmatprep.subr.mxu0 0.0
    %2360 = vmatpush1.xpose.msra.mxu0 0.0
    %2361 = vmatprep.subr.mxu0 0.0
    %2362 = vmatpush1.xpose.msra.mxu0 0.0
    %2363 = vmatprep.subr.mxu0 0.0
    %2364 = vmatpush1.xpose.msra.mxu0 0.0
    %2365 = vmatprep.subr.mxu0 0.0
    %2366 = vmatpush1.xpose.msra.mxu0 0.0
    %2367 = vmatprep.subr.mxu0 0.0
    %2368 = vmatpush1.xpose.msra.mxu0 0.0
    %2369 = vmatprep.subr.mxu0 0.0
    %2370 = vmatpush1.xpose.msra.mxu0 0.0
    %2371 = vmatprep.subr.mxu0 0.0
    %2372 = vmatpush1.xpose.msra.mxu0 0.0
    %2373 = vmatprep.subr.mxu0 0.0
    %2374 = vmatpush1.xpose.msra.mxu0 0.0
    %2375 = vmatprep.mubr.f32.mxu0 0.0
    %2376 = vmatmul.mubr.f32.gmra.mrb[0].mxu0 %v2306
    %v2377 = vpop.f32.mrb[0].mxu0
    %v2378 = vadd.f32 0.0, %v2377
    %v2379 = vpop.f32.mrb[0].mxu0
    %2380 = vdwg.mxu0
    %v2382 = vsel %vm2000, %v561, 0
    %v2385 = vsel %vm2000, %v1209, 0
    %2387 = vmatprep.subr.mxu0 0.0
    %2388 = vmatpush1.xpose.msra.mxu0 %v2385
    %2389 = vmatprep.subr.mxu0 0.0
    %2390 = vmatpush1.xpose.msra.mxu0 0.0
    %2391 = vmatprep.subr.mxu0 0.0
    %2392 = vmatpush1.xpose.msra.mxu0 0.0
    %2393 = vmatprep.subr.mxu0 0.0
    %2394 = vmatpush1.xpose.msra.mxu0 0.0
    %2395 = vmatprep.subr.mxu0 0.0
    %2396 = vmatpush1.xpose.msra.mxu0 0.0
    %2397 = vmatprep.subr.mxu0 0.0
    %2398 = vmatpush1.xpose.msra.mxu0 0.0
    %2399 = vmatprep.subr.mxu0 0.0
    %2400 = vmatpush1.xpose.msra.mxu0 0.0
    %2401 = vmatprep.subr.mxu0 0.0
    %2402 = vmatpush1.xpose.msra.mxu0 0.0
    %2403 = vmatprep.subr.mxu0 0.0
    %2404 = vmatpush1.xpose.msra.mxu0 0.0
    %2405 = vmatprep.subr.mxu0 0.0
    %2406 = vmatpush1.xpose.msra.mxu0 0.0
    %2407 = vmatprep.subr.mxu0 0.0
    %2408 = vmatpush1.xpose.msra.mxu0 0.0
    %2409 = vmatprep.subr.mxu0 0.0
    %2410 = vmatpush1.xpose.msra.mxu0 0.0
    %2411 = vmatprep.subr.mxu0 0.0
    %2412 = vmatpush1.xpose.msra.mxu0 0.0
    %2413 = vmatprep.subr.mxu0 0.0
    %2414 = vmatpush1.xpose.msra.mxu0 0.0
    %2415 = vmatprep.subr.mxu0 0.0
    %2416 = vmatpush1.xpose.msra.mxu0 0.0
    %2417 = vmatprep.subr.mxu0 0.0
    %2418 = vmatpush1.xpose.msra.mxu0 0.0
    %2419 = vmatprep.subr.mxu0 0.0
    %2420 = vmatpush1.xpose.msra.mxu0 0.0
    %2421 = vmatprep.subr.mxu0 0.0
    %2422 = vmatpush1.xpose.msra.mxu0 0.0
    %2423 = vmatprep.subr.mxu0 0.0
    %2424 = vmatpush1.xpose.msra.mxu0 0.0
    %2425 = vmatprep.subr.mxu0 0.0
    %2426 = vmatpush1.xpose.msra.mxu0 0.0
    %2427 = vmatprep.subr.mxu0 0.0
    %2428 = vmatpush1.xpose.msra.mxu0 0.0
    %2429 = vmatprep.subr.mxu0 0.0
    %2430 = vmatpush1.xpose.msra.mxu0 0.0
    %2431 = vmatprep.subr.mxu0 0.0
    %2432 = vmatpush1.xpose.msra.mxu0 0.0
    %2433 = vmatprep.subr.mxu0 0.0
    %2434 = vmatpush1.xpose.msra.mxu0 0.0
    %2435 = vmatprep.subr.mxu0 0.0
    %2436 = vmatpush1.xpose.msra.mxu0 0.0
    %2437 = vmatprep.subr.mxu0 0.0
    %2438 = vmatpush1.xpose.msra.mxu0 0.0
    %2439 = vmatprep.subr.mxu0 0.0
    %2440 = vmatpush1.xpose.msra.mxu0 0.0
    %2441 = vmatprep.subr.mxu0 0.0
    %2442 = vmatpush1.xpose.msra.mxu0 0.0
    %2443 = vmatprep.subr.mxu0 0.0
    %2444 = vmatpush1.xpose.msra.mxu0 0.0
    %2445 = vmatprep.subr.mxu0 0.0
    %2446 = vmatpush1.xpose.msra.mxu0 0.0
    %2447 = vmatprep.subr.mxu0 0.0
    %2448 = vmatpush1.xpose.msra.mxu0 0.0
    %2449 = vmatprep.subr.mxu0 0.0
    %2450 = vmatpush1.xpose.msra.mxu0 0.0
    %2451 = vmatprep.mubr.f32.mxu0 0.0
    %2452 = vmatmul.mubr.f32.gmra.mrb[0].mxu0 %v2382
    %v2453 = vpop.f32.mrb[0].mxu0
    %v2454 = vadd.f32 0.0, %v2453
    %v2455 = vpop.f32.mrb[0].mxu0
    %2456 = vdwg.mxu0
    %v2458 = vsel %vm2000, %v631, 0
    %v2461 = vsel %vm2000, %v1279, 0
    %2463 = vmatprep.subr.mxu0 0.0
    %2464 = vmatpush1.xpose.msra.mxu0 %v2461
    %2465 = vmatprep.subr.mxu0 0.0
    %2466 = vmatpush1.xpose.msra.mxu0 0.0
    %2467 = vmatprep.subr.mxu0 0.0
    %2468 = vmatpush1.xpose.msra.mxu0 0.0
    %2469 = vmatprep.subr.mxu0 0.0
    %2470 = vmatpush1.xpose.msra.mxu0 0.0
    %2471 = vmatprep.subr.mxu0 0.0
    %2472 = vmatpush1.xpose.msra.mxu0 0.0
    %2473 = vmatprep.subr.mxu0 0.0
    %2474 = vmatpush1.xpose.msra.mxu0 0.0
    %2475 = vmatprep.subr.mxu0 0.0
    %2476 = vmatpush1.xpose.msra.mxu0 0.0
    %2477 = vmatprep.subr.mxu0 0.0
    %2478 = vmatpush1.xpose.msra.mxu0 0.0
    %2479 = vmatprep.subr.mxu0 0.0
    %2480 = vmatpush1.xpose.msra.mxu0 0.0
    %2481 = vmatprep.subr.mxu0 0.0
    %2482 = vmatpush1.xpose.msra.mxu0 0.0
    %2483 = vmatprep.subr.mxu0 0.0
    %2484 = vmatpush1.xpose.msra.mxu0 0.0
    %2485 = vmatprep.subr.mxu0 0.0
    %2486 = vmatpush1.xpose.msra.mxu0 0.0
    %2487 = vmatprep.subr.mxu0 0.0
    %2488 = vmatpush1.xpose.msra.mxu0 0.0
    %2489 = vmatprep.subr.mxu0 0.0
    %2490 = vmatpush1.xpose.msra.mxu0 0.0
    %2491 = vmatprep.subr.mxu0 0.0
    %2492 = vmatpush1.xpose.msra.mxu0 0.0
    %2493 = vmatprep.subr.mxu0 0.0
    %2494 = vmatpush1.xpose.msra.mxu0 0.0
    %2495 = vmatprep.subr.mxu0 0.0
    %2496 = vmatpush1.xpose.msra.mxu0 0.0
    %2497 = vmatprep.subr.mxu0 0.0
    %2498 = vmatpush1.xpose.msra.mxu0 0.0
    %2499 = vmatprep.subr.mxu0 0.0
    %2500 = vmatpush1.xpose.msra.mxu0 0.0
    %2501 = vmatprep.subr.mxu0 0.0
    %2502 = vmatpush1.xpose.msra.mxu0 0.0
    %2503 = vmatprep.subr.mxu0 0.0
    %2504 = vmatpush1.xpose.msra.mxu0 0.0
    %2505 = vmatprep.subr.mxu0 0.0
    %2506 = vmatpush1.xpose.msra.mxu0 0.0
    %2507 = vmatprep.subr.mxu0 0.0
    %2508 = vmatpush1.xpose.msra.mxu0 0.0
    %2509 = vmatprep.subr.mxu0 0.0
    %2510 = vmatpush1.xpose.msra.mxu0 0.0
    %2511 = vmatprep.subr.mxu0 0.0
    %2512 = vmatpush1.xpose.msra.mxu0 0.0
    %2513 = vmatprep.subr.mxu0 0.0
    %2514 = vmatpush1.xpose.msra.mxu0 0.0
    %2515 = vmatprep.subr.mxu0 0.0
    %2516 = vmatpush1.xpose.msra.mxu0 0.0
    %2517 = vmatprep.subr.mxu0 0.0
    %2518 = vmatpush1.xpose.msra.mxu0 0.0
    %2519 = vmatprep.subr.mxu0 0.0
    %2520 = vmatpush1.xpose.msra.mxu0 0.0
    %2521 = vmatprep.subr.mxu0 0.0
    %2522 = vmatpush1.xpose.msra.mxu0 0.0
    %2523 = vmatprep.subr.mxu0 0.0
    %2524 = vmatpush1.xpose.msra.mxu0 0.0
    %2525 = vmatprep.subr.mxu0 0.0
    %2526 = vmatpush1.xpose.msra.mxu0 0.0
    %2527 = vmatprep.mubr.f32.mxu0 0.0
    %2528 = vmatmul.mubr.f32.gmra.mrb[0].mxu0 %v2458
    %v2529 = vpop.f32.mrb[0].mxu0
    %v2530 = vadd.f32 0.0, %v2529
    %v2531 = vpop.f32.mrb[0].mxu0
    %2532 = vdwg.mxu0
    %v2534 = vsel %vm2000, %v701, 0
    %v2537 = vsel %vm2000, %v1349, 0
    %2539 = vmatprep.subr.mxu0 0.0
    %2540 = vmatpush1.xpose.msra.mxu0 %v2537
    %2541 = vmatprep.subr.mxu0 0.0
    %2542 = vmatpush1.xpose.msra.mxu0 0.0
    %2543 = vmatprep.subr.mxu0 0.0
    %2544 = vmatpush1.xpose.msra.mxu0 0.0
    %2545 = vmatprep.subr.mxu0 0.0
    %2546 = vmatpush1.xpose.msra.mxu0 0.0
    %2547 = vmatprep.subr.mxu0 0.0
    %2548 = vmatpush1.xpose.msra.mxu0 0.0
    %2549 = vmatprep.subr.mxu0 0.0
    %2550 = vmatpush1.xpose.msra.mxu0 0.0
    %2551 = vmatprep.subr.mxu0 0.0
    %2552 = vmatpush1.xpose.msra.mxu0 0.0
    %2553 = vmatprep.subr.mxu0 0.0
    %2554 = vmatpush1.xpose.msra.mxu0 0.0
    %2555 = vmatprep.subr.mxu0 0.0
    %2556 = vmatpush1.xpose.msra.mxu0 0.0
    %2557 = vmatprep.subr.mxu0 0.0
    %2558 = vmatpush1.xpose.msra.mxu0 0.0
    %2559 = vmatprep.subr.mxu0 0.0
    %2560 = vmatpush1.xpose.msra.mxu0 0.0
    %2561 = vmatprep.subr.mxu0 0.0
    %2562 = vmatpush1.xpose.msra.mxu0 0.0
    %2563 = vmatprep.subr.mxu0 0.0
    %2564 = vmatpush1.xpose.msra.mxu0 0.0
    %2565 = vmatprep.subr.mxu0 0.0
    %2566 = vmatpush1.xpose.msra.mxu0 0.0
    %2567 = vmatprep.subr.mxu0 0.0
    %2568 = vmatpush1.xpose.msra.mxu0 0.0
    %2569 = vmatprep.subr.mxu0 0.0
    %2570 = vmatpush1.xpose.msra.mxu0 0.0
    %2571 = vmatprep.subr.mxu0 0.0
    %2572 = vmatpush1.xpose.msra.mxu0 0.0
    %2573 = vmatprep.subr.mxu0 0.0
    %2574 = vmatpush1.xpose.msra.mxu0 0.0
    %2575 = vmatprep.subr.mxu0 0.0
    %2576 = vmatpush1.xpose.msra.mxu0 0.0
    %2577 = vmatprep.subr.mxu0 0.0
    %2578 = vmatpush1.xpose.msra.mxu0 0.0
    %2579 = vmatprep.subr.mxu0 0.0
    %2580 = vmatpush1.xpose.msra.mxu0 0.0
    %2581 = vmatprep.subr.mxu0 0.0
    %2582 = vmatpush1.xpose.msra.mxu0 0.0
    %2583 = vmatprep.subr.mxu0 0.0
    %2584 = vmatpush1.xpose.msra.mxu0 0.0
    %2585 = vmatprep.subr.mxu0 0.0
    %2586 = vmatpush1.xpose.msra.mxu0 0.0
    %2587 = vmatprep.subr.mxu0 0.0
    %2588 = vmatpush1.xpose.msra.mxu0 0.0
    %2589 = vmatprep.subr.mxu0 0.0
    %2590 = vmatpush1.xpose.msra.mxu0 0.0
    %2591 = vmatprep.subr.mxu0 0.0
    %2592 = vmatpush1.xpose.msra.mxu0 0.0
    %2593 = vmatprep.subr.mxu0 0.0
    %2594 = vmatpush1.xpose.msra.mxu0 0.0
    %2595 = vmatprep.subr.mxu0 0.0
    %2596 = vmatpush1.xpose.msra.mxu0 0.0
    %2597 = vmatprep.subr.mxu0 0.0
    %2598 = vmatpush1.xpose.msra.mxu0 0.0
    %2599 = vmatprep.subr.mxu0 0.0
    %2600 = vmatpush1.xpose.msra.mxu0 0.0
    %2601 = vmatprep.subr.mxu0 0.0
    %2602 = vmatpush1.xpose.msra.mxu0 0.0
    %2603 = vmatprep.mubr.f32.mxu0 0.0
    %2604 = vmatmul.mubr.f32.gmra.mrb[0].mxu0 %v2534
    %v2605 = vpop.f32.mrb[0].mxu0
    %v2606 = vadd.f32 0.0, %v2605
    %v2607 = vpop.f32.mrb[0].mxu0
    %2608 = vdwg.mxu0
    %v2609 = vsel %vm2000, %v2074, -inf
    %2610 = vmax.xlane.f32.xlu0 %v2609
    %v2611 = vpop.xlane.xlu0 %2610
    %v2612 = vsel %vm2000, %v2150, -inf
    %2613 = vmax.xlane.f32.xlu0 %v2612
    %v2614 = vpop.xlane.xlu0 %2613
    %v2615 = vsel %vm2000, %v2226, -inf
    %2616 = vmax.xlane.f32.xlu0 %v2615
    %v2617 = vpop.xlane.xlu0 %2616
    %v2618 = vsel %vm2000, %v2302, -inf
    %2619 = vmax.xlane.f32.xlu0 %v2618
    %v2620 = vpop.xlane.xlu0 %2619
    %v2621 = vsel %vm2000, %v2378, -inf
    %2622 = vmax.xlane.f32.xlu0 %v2621
    %v2623 = vpop.xlane.xlu0 %2622
    %v2624 = vsel %vm2000, %v2454, -inf
    %2625 = vmax.xlane.f32.xlu0 %v2624
    %v2626 = vpop.xlane.xlu0 %2625
    %v2627 = vsel %vm2000, %v2530, -inf
    %2628 = vmax.xlane.f32.xlu0 %v2627
    %v2629 = vpop.xlane.xlu0 %2628
    %v2630 = vsel %vm2000, %v2606, -inf
    %2631 = vmax.xlane.f32.xlu0 %v2630
    %v2632 = vpop.xlane.xlu0 %2631
    %v2633 = vsub.f32 %v2074, %v2611
    %v2634 = vsub.f32 %v2150, %v2614
    %v2635 = vsub.f32 %v2226, %v2617
    %v2636 = vsub.f32 %v2302, %v2620
    %v2637 = vsub.f32 %v2378, %v2623
    %v2638 = vsub.f32 %v2454, %v2626
    %v2639 = vsub.f32 %v2530, %v2629
    %v2640 = vsub.f32 %v2606, %v2632
    %v2641 = vmul.f32 %v2633, 1.442695
    %v2642 = vpow.pop %v2641
    %v2643 = vmul.f32 %v2634, 1.442695
    %v2644 = vpow.pop %v2643
    %v2645 = vmul.f32 %v2635, 1.442695
    %v2646 = vpow.pop %v2645
    %v2647 = vmul.f32 %v2636, 1.442695
    %v2648 = vpow.pop %v2647
    %v2649 = vmul.f32 %v2637, 1.442695
    %v2650 = vpow.pop %v2649
    %v2651 = vmul.f32 %v2638, 1.442695
    %v2652 = vpow.pop %v2651
    %v2653 = vmul.f32 %v2639, 1.442695
    %v2654 = vpow.pop %v2653
    %v2655 = vmul.f32 %v2640, 1.442695
    %v2656 = vpow.pop %v2655
    %v2657 = vsel %vm2000, %v2642, 0.0
    %2658 = vadd.xlane.f32.xlu0 %v2657
    %v2659 = vpop.xlane.xlu0 %2658
    %v2660 = vsel %vm2000, %v2644, 0.0
    %2661 = vadd.xlane.f32.xlu0 %v2660
    %v2662 = vpop.xlane.xlu0 %2661
    %v2663 = vsel %vm2000, %v2646, 0.0
    %2664 = vadd.xlane.f32.xlu0 %v2663
    %v2665 = vpop.xlane.xlu0 %2664
    %v2666 = vsel %vm2000, %v2648, 0.0
    %2667 = vadd.xlane.f32.xlu0 %v2666
    %v2668 = vpop.xlane.xlu0 %2667
    %v2669 = vsel %vm2000, %v2650, 0.0
    %2670 = vadd.xlane.f32.xlu0 %v2669
    %v2671 = vpop.xlane.xlu0 %2670
    %v2672 = vsel %vm2000, %v2652, 0.0
    %2673 = vadd.xlane.f32.xlu0 %v2672
    %v2674 = vpop.xlane.xlu0 %2673
    %v2675 = vsel %vm2000, %v2654, 0.0
    %2676 = vadd.xlane.f32.xlu0 %v2675
    %v2677 = vpop.xlane.xlu0 %2676
    %v2678 = vsel %vm2000, %v2656, 0.0
    %2679 = vadd.xlane.f32.xlu0 %v2678
    %v2680 = vpop.xlane.xlu0 %2679
    %v2681 = vrcp.pop %v2659
    %v2682 = vrcp.pop %v2662
    %v2683 = vrcp.pop %v2665
    %v2684 = vrcp.pop %v2668
    %v2685 = vrcp.pop %v2671
    %v2686 = vrcp.pop %v2674
    %v2687 = vrcp.pop %v2677
    %v2688 = vrcp.pop %v2680
    %v2689 = vmul.f32 %v2642, %v2681
    %v2690 = vmul.f32 %v2644, %v2682
    %v2691 = vmul.f32 %v2646, %v2683
    %v2692 = vmul.f32 %v2648, %v2684
    %v2693 = vmul.f32 %v2650, %v2685
    %v2694 = vmul.f32 %v2652, %v2686
    %v2695 = vmul.f32 %v2654, %v2687
    %v2696 = vmul.f32 %v2656, %v2688
    %v2698 = vsel %vm2000, %v2689, 0
    %2700 = vmatprep.subr.mxu0 0.0
    %2701 = vmatpush1.msra.mxu0 %v1507
    %2702 = vmatprep.subr.mxu0 0.0
    %2703 = vmatpush1.msra.mxu0 0.0
    %2704 = vmatprep.subr.mxu0 0.0
    %2705 = vmatpush1.msra.mxu0 0.0
    %2706 = vmatprep.subr.mxu0 0.0
    %2707 = vmatpush1.msra.mxu0 0.0
    %2708 = vmatprep.subr.mxu0 0.0
    %2709 = vmatpush1.msra.mxu0 0.0
    %2710 = vmatprep.subr.mxu0 0.0
    %2711 = vmatpush1.msra.mxu0 0.0
    %2712 = vmatprep.subr.mxu0 0.0
    %2713 = vmatpush1.msra.mxu0 0.0
    %2714 = vmatprep.subr.mxu0 0.0
    %2715 = vmatpush1.msra.mxu0 0.0
    %2716 = vmatprep.subr.mxu0 0.0
    %2717 = vmatpush1.msra.mxu0 0.0
    %2718 = vmatprep.subr.mxu0 0.0
    %2719 = vmatpush1.msra.mxu0 0.0
    %2720 = vmatprep.subr.mxu0 0.0
    %2721 = vmatpush1.msra.mxu0 0.0
    %2722 = vmatprep.subr.mxu0 0.0
    %2723 = vmatpush1.msra.mxu0 0.0
    %2724 = vmatprep.subr.mxu0 0.0
    %2725 = vmatpush1.msra.mxu0 0.0
    %2726 = vmatprep.subr.mxu0 0.0
    %2727 = vmatpush1.msra.mxu0 0.0
    %2728 = vmatprep.subr.mxu0 0.0
    %2729 = vmatpush1.msra.mxu0 0.0
    %2730 = vmatprep.subr.mxu0 0.0
    %2731 = vmatpush1.msra.mxu0 0.0
    %2732 = vmatprep.subr.mxu0 0.0
    %2733 = vmatpush1.msra.mxu0 0.0
    %2734 = vmatprep.subr.mxu0 0.0
    %2735 = vmatpush1.msra.mxu0 0.0
    %2736 = vmatprep.subr.mxu0 0.0
    %2737 = vmatpush1.msra.mxu0 0.0
    %2738 = vmatprep.subr.mxu0 0.0
    %2739 = vmatpush1.msra.mxu0 0.0
    %2740 = vmatprep.subr.mxu0 0.0
    %2741 = vmatpush1.msra.mxu0 0.0
    %2742 = vmatprep.subr.mxu0 0.0
    %2743 = vmatpush1.msra.mxu0 0.0
    %2744 = vmatprep.subr.mxu0 0.0
    %2745 = vmatpush1.msra.mxu0 0.0
    %2746 = vmatprep.subr.mxu0 0.0
    %2747 = vmatpush1.msra.mxu0 0.0
    %2748 = vmatprep.subr.mxu0 0.0
    %2749 = vmatpush1.msra.mxu0 0.0
    %2750 = vmatprep.subr.mxu0 0.0
    %2751 = vmatpush1.msra.mxu0 0.0
    %2752 = vmatprep.subr.mxu0 0.0
    %2753 = vmatpush1.msra.mxu0 0.0
    %2754 = vmatprep.subr.mxu0 0.0
    %2755 = vmatpush1.msra.mxu0 0.0
    %2756 = vmatprep.subr.mxu0 0.0
    %2757 = vmatpush1.msra.mxu0 0.0
    %2758 = vmatprep.subr.mxu0 0.0
    %2759 = vmatpush1.msra.mxu0 0.0
    %2760 = vmatprep.subr.mxu0 0.0
    %2761 = vmatpush1.msra.mxu0 0.0
    %2762 = vmatprep.subr.mxu0 0.0
    %2763 = vmatpush1.msra.mxu0 0.0
    %2764 = vmatprep.mubr.f32.mxu0 0.0
    %2765 = vmatmul.mubr.f32.gmra.mrb[0].mxu0 %v2698
    %v2766 = vpop.f32.mrb[0].mxu0
    %v2767 = vadd.f32 0.0, %v2766
    %v2768 = vpop.f32.mrb[0].mxu0
    %2769 = vdwg.mxu0
    %v2771 = vsel %vm2000, %v2690, 0
    %2773 = vmatprep.subr.mxu0 0.0
    %2774 = vmatpush1.msra.mxu0 %v1577
    %2775 = vmatprep.subr.mxu0 0.0
    %2776 = vmatpush1.msra.mxu0 0.0
    %2777 = vmatprep.subr.mxu0 0.0
    %2778 = vmatpush1.msra.mxu0 0.0
    %2779 = vmatprep.subr.mxu0 0.0
    %2780 = vmatpush1.msra.mxu0 0.0
    %2781 = vmatprep.subr.mxu0 0.0
    %2782 = vmatpush1.msra.mxu0 0.0
    %2783 = vmatprep.subr.mxu0 0.0
    %2784 = vmatpush1.msra.mxu0 0.0
    %2785 = vmatprep.subr.mxu0 0.0
    %2786 = vmatpush1.msra.mxu0 0.0
    %2787 = vmatprep.subr.mxu0 0.0
    %2788 = vmatpush1.msra.mxu0 0.0
    %2789 = vmatprep.subr.mxu0 0.0
    %2790 = vmatpush1.msra.mxu0 0.0
    %2791 = vmatprep.subr.mxu0 0.0
    %2792 = vmatpush1.msra.mxu0 0.0
    %2793 = vmatprep.subr.mxu0 0.0
    %2794 = vmatpush1.msra.mxu0 0.0
    %2795 = vmatprep.subr.mxu0 0.0
    %2796 = vmatpush1.msra.mxu0 0.0
    %2797 = vmatprep.subr.mxu0 0.0
    %2798 = vmatpush1.msra.mxu0 0.0
    %2799 = vmatprep.subr.mxu0 0.0
    %2800 = vmatpush1.msra.mxu0 0.0
    %2801 = vmatprep.subr.mxu0 0.0
    %2802 = vmatpush1.msra.mxu0 0.0
    %2803 = vmatprep.subr.mxu0 0.0
    %2804 = vmatpush1.msra.mxu0 0.0
    %2805 = vmatprep.subr.mxu0 0.0
    %2806 = vmatpush1.msra.mxu0 0.0
    %2807 = vmatprep.subr.mxu0 0.0
    %2808 = vmatpush1.msra.mxu0 0.0
    %2809 = vmatprep.subr.mxu0 0.0
    %2810 = vmatpush1.msra.mxu0 0.0
    %2811 = vmatprep.subr.mxu0 0.0
    %2812 = vmatpush1.msra.mxu0 0.0
    %2813 = vmatprep.subr.mxu0 0.0
    %2814 = vmatpush1.msra.mxu0 0.0
    %2815 = vmatprep.subr.mxu0 0.0
    %2816 = vmatpush1.msra.mxu0 0.0
    %2817 = vmatprep.subr.mxu0 0.0
    %2818 = vmatpush1.msra.mxu0 0.0
    %2819 = vmatprep.subr.mxu0 0.0
    %2820 = vmatpush1.msra.mxu0 0.0
    %2821 = vmatprep.subr.mxu0 0.0
    %2822 = vmatpush1.msra.mxu0 0.0
    %2823 = vmatprep.subr.mxu0 0.0
    %2824 = vmatpush1.msra.mxu0 0.0
    %2825 = vmatprep.subr.mxu0 0.0
    %2826 = vmatpush1.msra.mxu0 0.0
    %2827 = vmatprep.subr.mxu0 0.0
    %2828 = vmatpush1.msra.mxu0 0.0
    %2829 = vmatprep.subr.mxu0 0.0
    %2830 = vmatpush1.msra.mxu0 0.0
    %2831 = vmatprep.subr.mxu0 0.0
    %2832 = vmatpush1.msra.mxu0 0.0
    %2833 = vmatprep.subr.mxu0 0.0
    %2834 = vmatpush1.msra.mxu0 0.0
    %2835 = vmatprep.subr.mxu0 0.0
    %2836 = vmatpush1.msra.mxu0 0.0
    %2837 = vmatprep.mubr.f32.mxu0 0.0
    %2838 = vmatmul.mubr.f32.gmra.mrb[0].mxu0 %v2771
    %v2839 = vpop.f32.mrb[0].mxu0
    %v2840 = vadd.f32 0.0, %v2839
    %v2841 = vpop.f32.mrb[0].mxu0
    %2842 = vdwg.mxu0
    %v2844 = vsel %vm2000, %v2691, 0
    %2846 = vmatprep.subr.mxu0 0.0
    %2847 = vmatpush1.msra.mxu0 %v1647
    %2848 = vmatprep.subr.mxu0 0.0
    %2849 = vmatpush1.msra.mxu0 0.0
    %2850 = vmatprep.subr.mxu0 0.0
    %2851 = vmatpush1.msra.mxu0 0.0
    %2852 = vmatprep.subr.mxu0 0.0
    %2853 = vmatpush1.msra.mxu0 0.0
    %2854 = vmatprep.subr.mxu0 0.0
    %2855 = vmatpush1.msra.mxu0 0.0
    %2856 = vmatprep.subr.mxu0 0.0
    %2857 = vmatpush1.msra.mxu0 0.0
    %2858 = vmatprep.subr.mxu0 0.0
    %2859 = vmatpush1.msra.mxu0 0.0
    %2860 = vmatprep.subr.mxu0 0.0
    %2861 = vmatpush1.msra.mxu0 0.0
    %2862 = vmatprep.subr.mxu0 0.0
    %2863 = vmatpush1.msra.mxu0 0.0
    %2864 = vmatprep.subr.mxu0 0.0
    %2865 = vmatpush1.msra.mxu0 0.0
    %2866 = vmatprep.subr.mxu0 0.0
    %2867 = vmatpush1.msra.mxu0 0.0
    %2868 = vmatprep.subr.mxu0 0.0
    %2869 = vmatpush1.msra.mxu0 0.0
    %2870 = vmatprep.subr.mxu0 0.0
    %2871 = vmatpush1.msra.mxu0 0.0
    %2872 = vmatprep.subr.mxu0 0.0
    %2873 = vmatpush1.msra.mxu0 0.0
    %2874 = vmatprep.subr.mxu0 0.0
    %2875 = vmatpush1.msra.mxu0 0.0
    %2876 = vmatprep.subr.mxu0 0.0
    %2877 = vmatpush1.msra.mxu0 0.0
    %2878 = vmatprep.subr.mxu0 0.0
    %2879 = vmatpush1.msra.mxu0 0.0
    %2880 = vmatprep.subr.mxu0 0.0
    %2881 = vmatpush1.msra.mxu0 0.0
    %2882 = vmatprep.subr.mxu0 0.0
    %2883 = vmatpush1.msra.mxu0 0.0
    %2884 = vmatprep.subr.mxu0 0.0
    %2885 = vmatpush1.msra.mxu0 0.0
    %2886 = vmatprep.subr.mxu0 0.0
    %2887 = vmatpush1.msra.mxu0 0.0
    %2888 = vmatprep.subr.mxu0 0.0
    %2889 = vmatpush1.msra.mxu0 0.0
    %2890 = vmatprep.subr.mxu0 0.0
    %2891 = vmatpush1.msra.mxu0 0.0
    %2892 = vmatprep.subr.mxu0 0.0
    %2893 = vmatpush1.msra.mxu0 0.0
    %2894 = vmatprep.subr.mxu0 0.0
    %2895 = vmatpush1.msra.mxu0 0.0
    %2896 = vmatprep.subr.mxu0 0.0
    %2897 = vmatpush1.msra.mxu0 0.0
    %2898 = vmatprep.subr.mxu0 0.0
    %2899 = vmatpush1.msra.mxu0 0.0
    %2900 = vmatprep.subr.mxu0 0.0
    %2901 = vmatpush1.msra.mxu0 0.0
    %2902 = vmatprep.subr.mxu0 0.0
    %2903 = vmatpush1.msra.mxu0 0.0
    %2904 = vmatprep.subr.mxu0 0.0
    %2905 = vmatpush1.msra.mxu0 0.0
    %2906 = vmatprep.subr.mxu0 0.0
    %2907 = vmatpush1.msra.mxu0 0.0
    %2908 = vmatprep.subr.mxu0 0.0
    %2909 = vmatpush1.msra.mxu0 0.0
    %2910 = vmatprep.mubr.f32.mxu0 0.0
    %2911 = vmatmul.mubr.f32.gmra.mrb[0].mxu0 %v2844
    %v2912 = vpop.f32.mrb[0].mxu0
    %v2913 = vadd.f32 0.0, %v2912
    %v2914 = vpop.f32.mrb[0].mxu0
    %2915 = vdwg.mxu0
    %v2917 = vsel %vm2000, %v2692, 0
    %2919 = vmatprep.subr.mxu0 0.0
    %2920 = vmatpush1.msra.mxu0 %v1717
    %2921 = vmatprep.subr.mxu0 0.0
    %2922 = vmatpush1.msra.mxu0 0.0
    %2923 = vmatprep.subr.mxu0 0.0
    %2924 = vmatpush1.msra.mxu0 0.0
    %2925 = vmatprep.subr.mxu0 0.0
    %2926 = vmatpush1.msra.mxu0 0.0
    %2927 = vmatprep.subr.mxu0 0.0
    %2928 = vmatpush1.msra.mxu0 0.0
    %2929 = vmatprep.subr.mxu0 0.0
    %2930 = vmatpush1.msra.mxu0 0.0
    %2931 = vmatprep.subr.mxu0 0.0
    %2932 = vmatpush1.msra.mxu0 0.0
    %2933 = vmatprep.subr.mxu0 0.0
    %2934 = vmatpush1.msra.mxu0 0.0
    %2935 = vmatprep.subr.mxu0 0.0
    %2936 = vmatpush1.msra.mxu0 0.0
    %2937 = vmatprep.subr.mxu0 0.0
    %2938 = vmatpush1.msra.mxu0 0.0
    %2939 = vmatprep.subr.mxu0 0.0
    %2940 = vmatpush1.msra.mxu0 0.0
    %2941 = vmatprep.subr.mxu0 0.0
    %2942 = vmatpush1.msra.mxu0 0.0
    %2943 = vmatprep.subr.mxu0 0.0
    %2944 = vmatpush1.msra.mxu0 0.0
    %2945 = vmatprep.subr.mxu0 0.0
    %2946 = vmatpush1.msra.mxu0 0.0
    %2947 = vmatprep.subr.mxu0 0.0
    %2948 = vmatpush1.msra.mxu0 0.0
    %2949 = vmatprep.subr.mxu0 0.0
    %2950 = vmatpush1.msra.mxu0 0.0
    %2951 = vmatprep.subr.mxu0 0.0
    %2952 = vmatpush1.msra.mxu0 0.0
    %2953 = vmatprep.subr.mxu0 0.0
    %2954 = vmatpush1.msra.mxu0 0.0
    %2955 = vmatprep.subr.mxu0 0.0
    %2956 = vmatpush1.msra.mxu0 0.0
    %2957 = vmatprep.subr.mxu0 0.0
    %2958 = vmatpush1.msra.mxu0 0.0
    %2959 = vmatprep.subr.mxu0 0.0
    %2960 = vmatpush1.msra.mxu0 0.0
    %2961 = vmatprep.subr.mxu0 0.0
    %2962 = vmatpush1.msra.mxu0 0.0
    %2963 = vmatprep.subr.mxu0 0.0
    %2964 = vmatpush1.msra.mxu0 0.0
    %2965 = vmatprep.subr.mxu0 0.0
    %2966 = vmatpush1.msra.mxu0 0.0
    %2967 = vmatprep.subr.mxu0 0.0
    %2968 = vmatpush1.msra.mxu0 0.0
    %2969 = vmatprep.subr.mxu0 0.0
    %2970 = vmatpush1.msra.mxu0 0.0
    %2971 = vmatprep.subr.mxu0 0.0
    %2972 = vmatpush1.msra.mxu0 0.0
    %2973 = vmatprep.subr.mxu0 0.0
    %2974 = vmatpush1.msra.mxu0 0.0
    %2975 = vmatprep.subr.mxu0 0.0
    %2976 = vmatpush1.msra.mxu0 0.0
    %2977 = vmatprep.subr.mxu0 0.0
    %2978 = vmatpush1.msra.mxu0 0.0
    %2979 = vmatprep.subr.mxu0 0.0
    %2980 = vmatpush1.msra.mxu0 0.0
    %2981 = vmatprep.subr.mxu0 0.0
    %2982 = vmatpush1.msra.mxu0 0.0
    %2983 = vmatprep.mubr.f32.mxu0 0.0
    %2984 = vmatmul.mubr.f32.gmra.mrb[0].mxu0 %v2917
    %v2985 = vpop.f32.mrb[0].mxu0
    %v2986 = vadd.f32 0.0, %v2985
    %v2987 = vpop.f32.mrb[0].mxu0
    %2988 = vdwg.mxu0
    %v2990 = vsel %vm2000, %v2693, 0
    %2992 = vmatprep.subr.mxu0 0.0
    %2993 = vmatpush1.msra.mxu0 %v1787
    %2994 = vmatprep.subr.mxu0 0.0
    %2995 = vmatpush1.msra.mxu0 0.0
    %2996 = vmatprep.subr.mxu0 0.0
    %2997 = vmatpush1.msra.mxu0 0.0
    %2998 = vmatprep.subr.mxu0 0.0
    %2999 = vmatpush1.msra.mxu0 0.0
    %3000 = vmatprep.subr.mxu0 0.0
    %3001 = vmatpush1.msra.mxu0 0.0
    %3002 = vmatprep.subr.mxu0 0.0
    %3003 = vmatpush1.msra.mxu0 0.0
    %3004 = vmatprep.subr.mxu0 0.0
    %3005 = vmatpush1.msra.mxu0 0.0
    %3006 = vmatprep.subr.mxu0 0.0
    %3007 = vmatpush1.msra.mxu0 0.0
    %3008 = vmatprep.subr.mxu0 0.0
    %3009 = vmatpush1.msra.mxu0 0.0
    %3010 = vmatprep.subr.mxu0 0.0
    %3011 = vmatpush1.msra.mxu0 0.0
    %3012 = vmatprep.subr.mxu0 0.0
    %3013 = vmatpush1.msra.mxu0 0.0
    %3014 = vmatprep.subr.mxu0 0.0
    %3015 = vmatpush1.msra.mxu0 0.0
    %3016 = vmatprep.subr.mxu0 0.0
    %3017 = vmatpush1.msra.mxu0 0.0
    %3018 = vmatprep.subr.mxu0 0.0
    %3019 = vmatpush1.msra.mxu0 0.0
    %3020 = vmatprep.subr.mxu0 0.0
    %3021 = vmatpush1.msra.mxu0 0.0
    %3022 = vmatprep.subr.mxu0 0.0
    %3023 = vmatpush1.msra.mxu0 0.0
    %3024 = vmatprep.subr.mxu0 0.0
    %3025 = vmatpush1.msra.mxu0 0.0
    %3026 = vmatprep.subr.mxu0 0.0
    %3027 = vmatpush1.msra.mxu0 0.0
    %3028 = vmatprep.subr.mxu0 0.0
    %3029 = vmatpush1.msra.mxu0 0.0
    %3030 = vmatprep.subr.mxu0 0.0
    %3031 = vmatpush1.msra.mxu0 0.0
    %3032 = vmatprep.subr.mxu0 0.0
    %3033 = vmatpush1.msra.mxu0 0.0
    %3034 = vmatprep.subr.mxu0 0.0
    %3035 = vmatpush1.msra.mxu0 0.0
    %3036 = vmatprep.subr.mxu0 0.0
    %3037 = vmatpush1.msra.mxu0 0.0
    %3038 = vmatprep.subr.mxu0 0.0
    %3039 = vmatpush1.msra.mxu0 0.0
    %3040 = vmatprep.subr.mxu0 0.0
    %3041 = vmatpush1.msra.mxu0 0.0
    %3042 = vmatprep.subr.mxu0 0.0
    %3043 = vmatpush1.msra.mxu0 0.0
    %3044 = vmatprep.subr.mxu0 0.0
    %3045 = vmatpush1.msra.mxu0 0.0
    %3046 = vmatprep.subr.mxu0 0.0
    %3047 = vmatpush1.msra.mxu0 0.0
    %3048 = vmatprep.subr.mxu0 0.0
    %3049 = vmatpush1.msra.mxu0 0.0
    %3050 = vmatprep.subr.mxu0 0.0
    %3051 = vmatpush1.msra.mxu0 0.0
    %3052 = vmatprep.subr.mxu0 0.0
    %3053 = vmatpush1.msra.mxu0 0.0
    %3054 = vmatprep.subr.mxu0 0.0
    %3055 = vmatpush1.msra.mxu0 0.0
    %3056 = vmatprep.mubr.f32.mxu0 0.0
    %3057 = vmatmul.mubr.f32.gmra.mrb[0].mxu0 %v2990
    %v3058 = vpop.f32.mrb[0].mxu0
    %v3059 = vadd.f32 0.0, %v3058
    %v3060 = vpop.f32.mrb[0].mxu0
    %3061 = vdwg.mxu0
    %v3063 = vsel %vm2000, %v2694, 0
    %3065 = vmatprep.subr.mxu0 0.0
    %3066 = vmatpush1.msra.mxu0 %v1857
    %3067 = vmatprep.subr.mxu0 0.0
    %3068 = vmatpush1.msra.mxu0 0.0
    %3069 = vmatprep.subr.mxu0 0.0
    %3070 = vmatpush1.msra.mxu0 0.0
    %3071 = vmatprep.subr.mxu0 0.0
    %3072 = vmatpush1.msra.mxu0 0.0
    %3073 = vmatprep.subr.mxu0 0.0
    %3074 = vmatpush1.msra.mxu0 0.0
    %3075 = vmatprep.subr.mxu0 0.0
    %3076 = vmatpush1.msra.mxu0 0.0
    %3077 = vmatprep.subr.mxu0 0.0
    %3078 = vmatpush1.msra.mxu0 0.0
    %3079 = vmatprep.subr.mxu0 0.0
    %3080 = vmatpush1.msra.mxu0 0.0
    %3081 = vmatprep.subr.mxu0 0.0
    %3082 = vmatpush1.msra.mxu0 0.0
    %3083 = vmatprep.subr.mxu0 0.0
    %3084 = vmatpush1.msra.mxu0 0.0
    %3085 = vmatprep.subr.mxu0 0.0
    %3086 = vmatpush1.msra.mxu0 0.0
    %3087 = vmatprep.subr.mxu0 0.0
    %3088 = vmatpush1.msra.mxu0 0.0
    %3089 = vmatprep.subr.mxu0 0.0
    %3090 = vmatpush1.msra.mxu0 0.0
    %3091 = vmatprep.subr.mxu0 0.0
    %3092 = vmatpush1.msra.mxu0 0.0
    %3093 = vmatprep.subr.mxu0 0.0
    %3094 = vmatpush1.msra.mxu0 0.0
    %3095 = vmatprep.subr.mxu0 0.0
    %3096 = vmatpush1.msra.mxu0 0.0
    %3097 = vmatprep.subr.mxu0 0.0
    %3098 = vmatpush1.msra.mxu0 0.0
    %3099 = vmatprep.subr.mxu0 0.0
    %3100 = vmatpush1.msra.mxu0 0.0
    %3101 = vmatprep.subr.mxu0 0.0
    %3102 = vmatpush1.msra.mxu0 0.0
    %3103 = vmatprep.subr.mxu0 0.0
    %3104 = vmatpush1.msra.mxu0 0.0
    %3105 = vmatprep.subr.mxu0 0.0
    %3106 = vmatpush1.msra.mxu0 0.0
    %3107 = vmatprep.subr.mxu0 0.0
    %3108 = vmatpush1.msra.mxu0 0.0
    %3109 = vmatprep.subr.mxu0 0.0
    %3110 = vmatpush1.msra.mxu0 0.0
    %3111 = vmatprep.subr.mxu0 0.0
    %3112 = vmatpush1.msra.mxu0 0.0
    %3113 = vmatprep.subr.mxu0 0.0
    %3114 = vmatpush1.msra.mxu0 0.0
    %3115 = vmatprep.subr.mxu0 0.0
    %3116 = vmatpush1.msra.mxu0 0.0
    %3117 = vmatprep.subr.mxu0 0.0
    %3118 = vmatpush1.msra.mxu0 0.0
    %3119 = vmatprep.subr.mxu0 0.0
    %3120 = vmatpush1.msra.mxu0 0.0
    %3121 = vmatprep.subr.mxu0 0.0
    %3122 = vmatpush1.msra.mxu0 0.0
    %3123 = vmatprep.subr.mxu0 0.0
    %3124 = vmatpush1.msra.mxu0 0.0
    %3125 = vmatprep.subr.mxu0 0.0
    %3126 = vmatpush1.msra.mxu0 0.0
    %3127 = vmatprep.subr.mxu0 0.0
    %3128 = vmatpush1.msra.mxu0 0.0
    %3129 = vmatprep.mubr.f32.mxu0 0.0
    %3130 = vmatmul.mubr.f32.gmra.mrb[0].mxu0 %v3063
    %v3131 = vpop.f32.mrb[0].mxu0
    %v3132 = vadd.f32 0.0, %v3131
    %v3133 = vpop.f32.mrb[0].mxu0
    %3134 = vdwg.mxu0
    %v3136 = vsel %vm2000, %v2695, 0
    %3138 = vmatprep.subr.mxu0 0.0
    %3139 = vmatpush1.msra.mxu0 %v1927
    %3140 = vmatprep.subr.mxu0 0.0
    %3141 = vmatpush1.msra.mxu0 0.0
    %3142 = vmatprep.subr.mxu0 0.0
    %3143 = vmatpush1.msra.mxu0 0.0
    %3144 = vmatprep.subr.mxu0 0.0
    %3145 = vmatpush1.msra.mxu0 0.0
    %3146 = vmatprep.subr.mxu0 0.0
    %3147 = vmatpush1.msra.mxu0 0.0
    %3148 = vmatprep.subr.mxu0 0.0
    %3149 = vmatpush1.msra.mxu0 0.0
    %3150 = vmatprep.subr.mxu0 0.0
    %3151 = vmatpush1.msra.mxu0 0.0
    %3152 = vmatprep.subr.mxu0 0.0
    %3153 = vmatpush1.msra.mxu0 0.0
    %3154 = vmatprep.subr.mxu0 0.0
    %3155 = vmatpush1.msra.mxu0 0.0
    %3156 = vmatprep.subr.mxu0 0.0
    %3157 = vmatpush1.msra.mxu0 0.0
    %3158 = vmatprep.subr.mxu0 0.0
    %3159 = vmatpush1.msra.mxu0 0.0
    %3160 = vmatprep.subr.mxu0 0.0
    %3161 = vmatpush1.msra.mxu0 0.0
    %3162 = vmatprep.subr.mxu0 0.0
    %3163 = vmatpush1.msra.mxu0 0.0
    %3164 = vmatprep.subr.mxu0 0.0
    %3165 = vmatpush1.msra.mxu0 0.0
    %3166 = vmatprep.subr.mxu0 0.0
    %3167 = vmatpush1.msra.mxu0 0.0
    %3168 = vmatprep.subr.mxu0 0.0
    %3169 = vmatpush1.msra.mxu0 0.0
    %3170 = vmatprep.subr.mxu0 0.0
    %3171 = vmatpush1.msra.mxu0 0.0
    %3172 = vmatprep.subr.mxu0 0.0
    %3173 = vmatpush1.msra.mxu0 0.0
    %3174 = vmatprep.subr.mxu0 0.0
    %3175 = vmatpush1.msra.mxu0 0.0
    %3176 = vmatprep.subr.mxu0 0.0
    %3177 = vmatpush1.msra.mxu0 0.0
    %3178 = vmatprep.subr.mxu0 0.0
    %3179 = vmatpush1.msra.mxu0 0.0
    %3180 = vmatprep.subr.mxu0 0.0
    %3181 = vmatpush1.msra.mxu0 0.0
    %3182 = vmatprep.subr.mxu0 0.0
    %3183 = vmatpush1.msra.mxu0 0.0
    %3184 = vmatprep.subr.mxu0 0.0
    %3185 = vmatpush1.msra.mxu0 0.0
    %3186 = vmatprep.subr.mxu0 0.0
    %3187 = vmatpush1.msra.mxu0 0.0
    %3188 = vmatprep.subr.mxu0 0.0
    %3189 = vmatpush1.msra.mxu0 0.0
    %3190 = vmatprep.subr.mxu0 0.0
    %3191 = vmatpush1.msra.mxu0 0.0
    %3192 = vmatprep.subr.mxu0 0.0
    %3193 = vmatpush1.msra.mxu0 0.0
    %3194 = vmatprep.subr.mxu0 0.0
    %3195 = vmatpush1.msra.mxu0 0.0
    %3196 = vmatprep.subr.mxu0 0.0
    %3197 = vmatpush1.msra.mxu0 0.0
    %3198 = vmatprep.subr.mxu0 0.0
    %3199 = vmatpush1.msra.mxu0 0.0
    %3200 = vmatprep.subr.mxu0 0.0
    %3201 = vmatpush1.msra.mxu0 0.0
    %3202 = vmatprep.mubr.f32.mxu0 0.0
    %3203 = vmatmul.mubr.f32.gmra.mrb[0].mxu0 %v3136
    %v3204 = vpop.f32.mrb[0].mxu0
    %v3205 = vadd.f32 0.0, %v3204
    %v3206 = vpop.f32.mrb[0].mxu0
    %3207 = vdwg.mxu0
    %v3209 = vsel %vm2000, %v2696, 0
    %3211 = vmatprep.subr.mxu0 0.0
    %3212 = vmatpush1.msra.mxu0 %v1997
    %3213 = vmatprep.subr.mxu0 0.0
    %3214 = vmatpush1.msra.mxu0 0.0
    %3215 = vmatprep.subr.mxu0 0.0
    %3216 = vmatpush1.msra.mxu0 0.0
    %3217 = vmatprep.subr.mxu0 0.0
    %3218 = vmatpush1.msra.mxu0 0.0
    %3219 = vmatprep.subr.mxu0 0.0
    %3220 = vmatpush1.msra.mxu0 0.0
    %3221 = vmatprep.subr.mxu0 0.0
    %3222 = vmatpush1.msra.mxu0 0.0
    %3223 = vmatprep.subr.mxu0 0.0
    %3224 = vmatpush1.msra.mxu0 0.0
    %3225 = vmatprep.subr.mxu0 0.0
    %3226 = vmatpush1.msra.mxu0 0.0
    %3227 = vmatprep.subr.mxu0 0.0
    %3228 = vmatpush1.msra.mxu0 0.0
    %3229 = vmatprep.subr.mxu0 0.0
    %3230 = vmatpush1.msra.mxu0 0.0
    %3231 = vmatprep.subr.mxu0 0.0
    %3232 = vmatpush1.msra.mxu0 0.0
    %3233 = vmatprep.subr.mxu0 0.0
    %3234 = vmatpush1.msra.mxu0 0.0
    %3235 = vmatprep.subr.mxu0 0.0
    %3236 = vmatpush1.msra.mxu0 0.0
    %3237 = vmatprep.subr.mxu0 0.0
    %3238 = vmatpush1.msra.mxu0 0.0
    %3239 = vmatprep.subr.mxu0 0.0
    %3240 = vmatpush1.msra.mxu0 0.0
    %3241 = vmatprep.subr.mxu0 0.0
    %3242 = vmatpush1.msra.mxu0 0.0
    %3243 = vmatprep.subr.mxu0 0.0
    %3244 = vmatpush1.msra.mxu0 0.0
    %3245 = vmatprep.subr.mxu0 0.0
    %3246 = vmatpush1.msra.mxu0 0.0
    %3247 = vmatprep.subr.mxu0 0.0
    %3248 = vmatpush1.msra.mxu0 0.0
    %3249 = vmatprep.subr.mxu0 0.0
    %3250 = vmatpush1.msra.mxu0 0.0
    %3251 = vmatprep.subr.mxu0 0.0
    %3252 = vmatpush1.msra.mxu0 0.0
    %3253 = vmatprep.subr.mxu0 0.0
    %3254 = vmatpush1.msra.mxu0 0.0
    %3255 = vmatprep.subr.mxu0 0.0
    %3256 = vmatpush1.msra.mxu0 0.0
    %3257 = vmatprep.subr.mxu0 0.0
    %3258 = vmatpush1.msra.mxu0 0.0
    %3259 = vmatprep.subr.mxu0 0.0
    %3260 = vmatpush1.msra.mxu0 0.0
    %3261 = vmatprep.subr.mxu0 0.0
    %3262 = vmatpush1.msra.mxu0 0.0
    %3263 = vmatprep.subr.mxu0 0.0
    %3264 = vmatpush1.msra.mxu0 0.0
    %3265 = vmatprep.subr.mxu0 0.0
    %3266 = vmatpush1.msra.mxu0 0.0
    %3267 = vmatprep.subr.mxu0 0.0
    %3268 = vmatpush1.msra.mxu0 0.0
    %3269 = vmatprep.subr.mxu0 0.0
    %3270 = vmatpush1.msra.mxu0 0.0
    %3271 = vmatprep.subr.mxu0 0.0
    %3272 = vmatpush1.msra.mxu0 0.0
    %3273 = vmatprep.subr.mxu0 0.0
    %3274 = vmatpush1.msra.mxu0 0.0
    %3275 = vmatprep.mubr.f32.mxu0 0.0
    %3276 = vmatmul.mubr.f32.gmra.mrb[0].mxu0 %v3209
    %v3277 = vpop.f32.mrb[0].mxu0
    %v3278 = vadd.f32 0.0, %v3277
    %v3279 = vpop.f32.mrb[0].mxu0
    %3280 = vdwg.mxu0
    %v3281 = vld [vmem:[%s7] sm:$0xff]
    %v3282 = vld [vmem:[%s7 + $0x8] sm:$0xff]
    %v3283 = vld [vmem:[%s7 + $0x10] sm:$0xff]
    %v3284 = vld [vmem:[%s7 + $0x18] sm:$0xff]
    %v3285 = vld [vmem:[%s7 + $0x20] sm:$0xff]
    %v3286 = vld [vmem:[%s7 + $0x28] sm:$0xff]
    %v3287 = vld [vmem:[%s7 + $0x30] sm:$0xff]
    %v3288 = vld [vmem:[%s7 + $0x38] sm:$0xff]
    %v3290 = vsel %vm2000, %v2767, 0
    %3292 = vmatprep.subr.mxu0 0.0
    %3293 = vmatpush1.msra.mxu0 %v3281
    %3294 = vmatprep.subr.mxu0 0.0
    %3295 = vmatpush1.msra.mxu0 0.0
    %3296 = vmatprep.subr.mxu0 0.0
    %3297 = vmatpush1.msra.mxu0 0.0
    %3298 = vmatprep.subr.mxu0 0.0
    %3299 = vmatpush1.msra.mxu0 0.0
    %3300 = vmatprep.subr.mxu0 0.0
    %3301 = vmatpush1.msra.mxu0 0.0
    %3302 = vmatprep.subr.mxu0 0.0
    %3303 = vmatpush1.msra.mxu0 0.0
    %3304 = vmatprep.subr.mxu0 0.0
    %3305 = vmatpush1.msra.mxu0 0.0
    %3306 = vmatprep.subr.mxu0 0.0
    %3307 = vmatpush1.msra.mxu0 0.0
    %3308 = vmatprep.subr.mxu0 0.0
    %3309 = vmatpush1.msra.mxu0 0.0
    %3310 = vmatprep.subr.mxu0 0.0
    %3311 = vmatpush1.msra.mxu0 0.0
    %3312 = vmatprep.subr.mxu0 0.0
    %3313 = vmatpush1.msra.mxu0 0.0
    %3314 = vmatprep.subr.mxu0 0.0
    %3315 = vmatpush1.msra.mxu0 0.0
    %3316 = vmatprep.subr.mxu0 0.0
    %3317 = vmatpush1.msra.mxu0 0.0
    %3318 = vmatprep.subr.mxu0 0.0
    %3319 = vmatpush1.msra.mxu0 0.0
    %3320 = vmatprep.subr.mxu0 0.0
    %3321 = vmatpush1.msra.mxu0 0.0
    %3322 = vmatprep.subr.mxu0 0.0
    %3323 = vmatpush1.msra.mxu0 0.0
    %3324 = vmatprep.subr.mxu0 0.0
    %3325 = vmatpush1.msra.mxu0 0.0
    %3326 = vmatprep.subr.mxu0 0.0
    %3327 = vmatpush1.msra.mxu0 0.0
    %3328 = vmatprep.subr.mxu0 0.0
    %3329 = vmatpush1.msra.mxu0 0.0
    %3330 = vmatprep.subr.mxu0 0.0
    %3331 = vmatpush1.msra.mxu0 0.0
    %3332 = vmatprep.subr.mxu0 0.0
    %3333 = vmatpush1.msra.mxu0 0.0
    %3334 = vmatprep.subr.mxu0 0.0
    %3335 = vmatpush1.msra.mxu0 0.0
    %3336 = vmatprep.subr.mxu0 0.0
    %3337 = vmatpush1.msra.mxu0 0.0
    %3338 = vmatprep.subr.mxu0 0.0
    %3339 = vmatpush1.msra.mxu0 0.0
    %3340 = vmatprep.subr.mxu0 0.0
    %3341 = vmatpush1.msra.mxu0 0.0
    %3342 = vmatprep.subr.mxu0 0.0
    %3343 = vmatpush1.msra.mxu0 0.0
    %3344 = vmatprep.subr.mxu0 0.0
    %3345 = vmatpush1.msra.mxu0 0.0
    %3346 = vmatprep.subr.mxu0 0.0
    %3347 = vmatpush1.msra.mxu0 0.0
    %3348 = vmatprep.subr.mxu0 0.0
    %3349 = vmatpush1.msra.mxu0 0.0
    %3350 = vmatprep.subr.mxu0 0.0
    %3351 = vmatpush1.msra.mxu0 0.0
    %3352 = vmatprep.subr.mxu0 0.0
    %3353 = vmatpush1.msra.mxu0 0.0
    %3354 = vmatprep.subr.mxu0 0.0
    %3355 = vmatpush1.msra.mxu0 0.0
    %3356 = vmatprep.mubr.f32.mxu0 0.0
    %3357 = vmatmul.mubr.f32.gmra.mrb[0].mxu0 %v3290
    %v3358 = vpop.f32.mrb[0].mxu0
    %v3359 = vadd.f32 0.0, %v3358
    %v3360 = vpop.f32.mrb[0].mxu0
    %3361 = vdwg.mxu0
    %v3363 = vsel %vm2000, %v2840, 0
    %3365 = vmatprep.subr.mxu0 0.0
    %3366 = vmatpush1.msra.mxu0 %v3282
    %3367 = vmatprep.subr.mxu0 0.0
    %3368 = vmatpush1.msra.mxu0 0.0
    %3369 = vmatprep.subr.mxu0 0.0
    %3370 = vmatpush1.msra.mxu0 0.0
    %3371 = vmatprep.subr.mxu0 0.0
    %3372 = vmatpush1.msra.mxu0 0.0
    %3373 = vmatprep.subr.mxu0 0.0
    %3374 = vmatpush1.msra.mxu0 0.0
    %3375 = vmatprep.subr.mxu0 0.0
    %3376 = vmatpush1.msra.mxu0 0.0
    %3377 = vmatprep.subr.mxu0 0.0
    %3378 = vmatpush1.msra.mxu0 0.0
    %3379 = vmatprep.subr.mxu0 0.0
    %3380 = vmatpush1.msra.mxu0 0.0
    %3381 = vmatprep.subr.mxu0 0.0
    %3382 = vmatpush1.msra.mxu0 0.0
    %3383 = vmatprep.subr.mxu0 0.0
    %3384 = vmatpush1.msra.mxu0 0.0
    %3385 = vmatprep.subr.mxu0 0.0
    %3386 = vmatpush1.msra.mxu0 0.0
    %3387 = vmatprep.subr.mxu0 0.0
    %3388 = vmatpush1.msra.mxu0 0.0
    %3389 = vmatprep.subr.mxu0 0.0
    %3390 = vmatpush1.msra.mxu0 0.0
    %3391 = vmatprep.subr.mxu0 0.0
    %3392 = vmatpush1.msra.mxu0 0.0
    %3393 = vmatprep.subr.mxu0 0.0
    %3394 = vmatpush1.msra.mxu0 0.0
    %3395 = vmatprep.subr.mxu0 0.0
    %3396 = vmatpush1.msra.mxu0 0.0
    %3397 = vmatprep.subr.mxu0 0.0
    %3398 = vmatpush1.msra.mxu0 0.0
    %3399 = vmatprep.subr.mxu0 0.0
    %3400 = vmatpush1.msra.mxu0 0.0
    %3401 = vmatprep.subr.mxu0 0.0
    %3402 = vmatpush1.msra.mxu0 0.0
    %3403 = vmatprep.subr.mxu0 0.0
    %3404 = vmatpush1.msra.mxu0 0.0
    %3405 = vmatprep.subr.mxu0 0.0
    %3406 = vmatpush1.msra.mxu0 0.0
    %3407 = vmatprep.subr.mxu0 0.0
    %3408 = vmatpush1.msra.mxu0 0.0
    %3409 = vmatprep.subr.mxu0 0.0
    %3410 = vmatpush1.msra.mxu0 0.0
    %3411 = vmatprep.subr.mxu0 0.0
    %3412 = vmatpush1.msra.mxu0 0.0
    %3413 = vmatprep.subr.mxu0 0.0
    %3414 = vmatpush1.msra.mxu0 0.0
    %3415 = vmatprep.subr.mxu0 0.0
    %3416 = vmatpush1.msra.mxu0 0.0
    %3417 = vmatprep.subr.mxu0 0.0
    %3418 = vmatpush1.msra.mxu0 0.0
    %3419 = vmatprep.subr.mxu0 0.0
    %3420 = vmatpush1.msra.mxu0 0.0
    %3421 = vmatprep.subr.mxu0 0.0
    %3422 = vmatpush1.msra.mxu0 0.0
    %3423 = vmatprep.subr.mxu0 0.0
    %3424 = vmatpush1.msra.mxu0 0.0
    %3425 = vmatprep.subr.mxu0 0.0
    %3426 = vmatpush1.msra.mxu0 0.0
    %3427 = vmatprep.subr.mxu0 0.0
    %3428 = vmatpush1.msra.mxu0 0.0
    %3429 = vmatprep.mubr.f32.mxu0 0.0
    %3430 = vmatmul.mubr.f32.gmra.mrb[0].mxu0 %v3363
    %v3431 = vpop.f32.mrb[0].mxu0
    %v3432 = vadd.f32 0.0, %v3431
    %v3433 = vpop.f32.mrb[0].mxu0
    %3434 = vdwg.mxu0
    %v3436 = vsel %vm2000, %v2913, 0
    %3438 = vmatprep.subr.mxu0 0.0
    %3439 = vmatpush1.msra.mxu0 %v3283
    %3440 = vmatprep.subr.mxu0 0.0
    %3441 = vmatpush1.msra.mxu0 0.0
    %3442 = vmatprep.subr.mxu0 0.0
    %3443 = vmatpush1.msra.mxu0 0.0
    %3444 = vmatprep.subr.mxu0 0.0
    %3445 = vmatpush1.msra.mxu0 0.0
    %3446 = vmatprep.subr.mxu0 0.0
    %3447 = vmatpush1.msra.mxu0 0.0
    %3448 = vmatprep.subr.mxu0 0.0
    %3449 = vmatpush1.msra.mxu0 0.0
    %3450 = vmatprep.subr.mxu0 0.0
    %3451 = vmatpush1.msra.mxu0 0.0
    %3452 = vmatprep.subr.mxu0 0.0
    %3453 = vmatpush1.msra.mxu0 0.0
    %3454 = vmatprep.subr.mxu0 0.0
    %3455 = vmatpush1.msra.mxu0 0.0
    %3456 = vmatprep.subr.mxu0 0.0
    %3457 = vmatpush1.msra.mxu0 0.0
    %3458 = vmatprep.subr.mxu0 0.0
    %3459 = vmatpush1.msra.mxu0 0.0
    %3460 = vmatprep.subr.mxu0 0.0
    %3461 = vmatpush1.msra.mxu0 0.0
    %3462 = vmatprep.subr.mxu0 0.0
    %3463 = vmatpush1.msra.mxu0 0.0
    %3464 = vmatprep.subr.mxu0 0.0
    %3465 = vmatpush1.msra.mxu0 0.0
    %3466 = vmatprep.subr.mxu0 0.0
    %3467 = vmatpush1.msra.mxu0 0.0
    %3468 = vmatprep.subr.mxu0 0.0
    %3469 = vmatpush1.msra.mxu0 0.0
    %3470 = vmatprep.subr.mxu0 0.0
    %3471 = vmatpush1.msra.mxu0 0.0
    %3472 = vmatprep.subr.mxu0 0.0
    %3473 = vmatpush1.msra.mxu0 0.0
    %3474 = vmatprep.subr.mxu0 0.0
    %3475 = vmatpush1.msra.mxu0 0.0
    %3476 = vmatprep.subr.mxu0 0.0
    %3477 = vmatpush1.msra.mxu0 0.0
    %3478 = vmatprep.subr.mxu0 0.0
    %3479 = vmatpush1.msra.mxu0 0.0
    %3480 = vmatprep.subr.mxu0 0.0
    %3481 = vmatpush1.msra.mxu0 0.0
    %3482 = vmatprep.subr.mxu0 0.0
    %3483 = vmatpush1.msra.mxu0 0.0
    %3484 = vmatprep.subr.mxu0 0.0
    %3485 = vmatpush1.msra.mxu0 0.0
    %3486 = vmatprep.subr.mxu0 0.0
    %3487 = vmatpush1.msra.mxu0 0.0
    %3488 = vmatprep.subr.mxu0 0.0
    %3489 = vmatpush1.msra.mxu0 0.0
    %3490 = vmatprep.subr.mxu0 0.0
    %3491 = vmatpush1.msra.mxu0 0.0
    %3492 = vmatprep.subr.mxu0 0.0
    %3493 = vmatpush1.msra.mxu0 0.0
    %3494 = vmatprep.subr.mxu0 0.0
    %3495 = vmatpush1.msra.mxu0 0.0
    %3496 = vmatprep.subr.mxu0 0.0
    %3497 = vmatpush1.msra.mxu0 0.0
    %3498 = vmatprep.subr.mxu0 0.0
    %3499 = vmatpush1.msra.mxu0 0.0
    %3500 = vmatprep.subr.mxu0 0.0
    %3501 = vmatpush1.msra.mxu0 0.0
    %3502 = vmatprep.mubr.f32.mxu0 0.0
    %3503 = vmatmul.mubr.f32.gmra.mrb[0].mxu0 %v3436
    %v3504 = vpop.f32.mrb[0].mxu0
    %v3505 = vadd.f32 0.0, %v3504
    %v3506 = vpop.f32.mrb[0].mxu0
    %3507 = vdwg.mxu0
    %v3509 = vsel %vm2000, %v2986, 0
    %3511 = vmatprep.subr.mxu0 0.0
    %3512 = vmatpush1.msra.mxu0 %v3284
    %3513 = vmatprep.subr.mxu0 0.0
    %3514 = vmatpush1.msra.mxu0 0.0
    %3515 = vmatprep.subr.mxu0 0.0
    %3516 = vmatpush1.msra.mxu0 0.0
    %3517 = vmatprep.subr.mxu0 0.0
    %3518 = vmatpush1.msra.mxu0 0.0
    %3519 = vmatprep.subr.mxu0 0.0
    %3520 = vmatpush1.msra.mxu0 0.0
    %3521 = vmatprep.subr.mxu0 0.0
    %3522 = vmatpush1.msra.mxu0 0.0
    %3523 = vmatprep.subr.mxu0 0.0
    %3524 = vmatpush1.msra.mxu0 0.0
    %3525 = vmatprep.subr.mxu0 0.0
    %3526 = vmatpush1.msra.mxu0 0.0
    %3527 = vmatprep.subr.mxu0 0.0
    %3528 = vmatpush1.msra.mxu0 0.0
    %3529 = vmatprep.subr.mxu0 0.0
    %3530 = vmatpush1.msra.mxu0 0.0
    %3531 = vmatprep.subr.mxu0 0.0
    %3532 = vmatpush1.msra.mxu0 0.0
    %3533 = vmatprep.subr.mxu0 0.0
    %3534 = vmatpush1.msra.mxu0 0.0
    %3535 = vmatprep.subr.mxu0 0.0
    %3536 = vmatpush1.msra.mxu0 0.0
    %3537 = vmatprep.subr.mxu0 0.0
    %3538 = vmatpush1.msra.mxu0 0.0
    %3539 = vmatprep.subr.mxu0 0.0
    %3540 = vmatpush1.msra.mxu0 0.0
    %3541 = vmatprep.subr.mxu0 0.0
    %3542 = vmatpush1.msra.mxu0 0.0
    %3543 = vmatprep.subr.mxu0 0.0
    %3544 = vmatpush1.msra.mxu0 0.0
    %3545 = vmatprep.subr.mxu0 0.0
    %3546 = vmatpush1.msra.mxu0 0.0
    %3547 = vmatprep.subr.mxu0 0.0
    %3548 = vmatpush1.msra.mxu0 0.0
    %3549 = vmatprep.subr.mxu0 0.0
    %3550 = vmatpush1.msra.mxu0 0.0
    %3551 = vmatprep.subr.mxu0 0.0
    %3552 = vmatpush1.msra.mxu0 0.0
    %3553 = vmatprep.subr.mxu0 0.0
    %3554 = vmatpush1.msra.mxu0 0.0
    %3555 = vmatprep.subr.mxu0 0.0
    %3556 = vmatpush1.msra.mxu0 0.0
    %3557 = vmatprep.subr.mxu0 0.0
    %3558 = vmatpush1.msra.mxu0 0.0
    %3559 = vmatprep.subr.mxu0 0.0
    %3560 = vmatpush1.msra.mxu0 0.0
    %3561 = vmatprep.subr.mxu0 0.0
    %3562 = vmatpush1.msra.mxu0 0.0
    %3563 = vmatprep.subr.mxu0 0.0
    %3564 = vmatpush1.msra.mxu0 0.0
    %3565 = vmatprep.subr.mxu0 0.0
    %3566 = vmatpush1.msra.mxu0 0.0
    %3567 = vmatprep.subr.mxu0 0.0
    %3568 = vmatpush1.msra.mxu0 0.0
    %3569 = vmatprep.subr.mxu0 0.0
    %3570 = vmatpush1.msra.mxu0 0.0
    %3571 = vmatprep.subr.mxu0 0.0
    %3572 = vmatpush1.msra.mxu0 0.0
    %3573 = vmatprep.subr.mxu0 0.0
    %3574 = vmatpush1.msra.mxu0 0.0
    %3575 = vmatprep.mubr.f32.mxu0 0.0
    %3576 = vmatmul.mubr.f32.gmra.mrb[0].mxu0 %v3509
    %v3577 = vpop.f32.mrb[0].mxu0
    %v3578 = vadd.f32 0.0, %v3577
    %v3579 = vpop.f32.mrb[0].mxu0
    %3580 = vdwg.mxu0
    %v3582 = vsel %vm2000, %v3059, 0
    %3584 = vmatprep.subr.mxu0 0.0
    %3585 = vmatpush1.msra.mxu0 %v3285
    %3586 = vmatprep.subr.mxu0 0.0
    %3587 = vmatpush1.msra.mxu0 0.0
    %3588 = vmatprep.subr.mxu0 0.0
    %3589 = vmatpush1.msra.mxu0 0.0
    %3590 = vmatprep.subr.mxu0 0.0
    %3591 = vmatpush1.msra.mxu0 0.0
    %3592 = vmatprep.subr.mxu0 0.0
    %3593 = vmatpush1.msra.mxu0 0.0
    %3594 = vmatprep.subr.mxu0 0.0
    %3595 = vmatpush1.msra.mxu0 0.0
    %3596 = vmatprep.subr.mxu0 0.0
    %3597 = vmatpush1.msra.mxu0 0.0
    %3598 = vmatprep.subr.mxu0 0.0
    %3599 = vmatpush1.msra.mxu0 0.0
    %3600 = vmatprep.subr.mxu0 0.0
    %3601 = vmatpush1.msra.mxu0 0.0
    %3602 = vmatprep.subr.mxu0 0.0
    %3603 = vmatpush1.msra.mxu0 0.0
    %3604 = vmatprep.subr.mxu0 0.0
    %3605 = vmatpush1.msra.mxu0 0.0
    %3606 = vmatprep.subr.mxu0 0.0
    %3607 = vmatpush1.msra.mxu0 0.0
    %3608 = vmatprep.subr.mxu0 0.0
    %3609 = vmatpush1.msra.mxu0 0.0
    %3610 = vmatprep.subr.mxu0 0.0
    %3611 = vmatpush1.msra.mxu0 0.0
    %3612 = vmatprep.subr.mxu0 0.0
    %3613 = vmatpush1.msra.mxu0 0.0
    %3614 = vmatprep.subr.mxu0 0.0
    %3615 = vmatpush1.msra.mxu0 0.0
    %3616 = vmatprep.subr.mxu0 0.0
    %3617 = vmatpush1.msra.mxu0 0.0
    %3618 = vmatprep.subr.mxu0 0.0
    %3619 = vmatpush1.msra.mxu0 0.0
    %3620 = vmatprep.subr.mxu0 0.0
    %3621 = vmatpush1.msra.mxu0 0.0
    %3622 = vmatprep.subr.mxu0 0.0
    %3623 = vmatpush1.msra.mxu0 0.0
    %3624 = vmatprep.subr.mxu0 0.0
    %3625 = vmatpush1.msra.mxu0 0.0
    %3626 = vmatprep.subr.mxu0 0.0
    %3627 = vmatpush1.msra.mxu0 0.0
    %3628 = vmatprep.subr.mxu0 0.0
    %3629 = vmatpush1.msra.mxu0 0.0
    %3630 = vmatprep.subr.mxu0 0.0
    %3631 = vmatpush1.msra.mxu0 0.0
    %3632 = vmatprep.subr.mxu0 0.0
    %3633 = vmatpush1.msra.mxu0 0.0
    %3634 = vmatprep.subr.mxu0 0.0
    %3635 = vmatpush1.msra.mxu0 0.0
    %3636 = vmatprep.subr.mxu0 0.0
    %3637 = vmatpush1.msra.mxu0 0.0
    %3638 = vmatprep.subr.mxu0 0.0
    %3639 = vmatpush1.msra.mxu0 0.0
    %3640 = vmatprep.subr.mxu0 0.0
    %3641 = vmatpush1.msra.mxu0 0.0
    %3642 = vmatprep.subr.mxu0 0.0
    %3643 = vmatpush1.msra.mxu0 0.0
    %3644 = vmatprep.subr.mxu0 0.0
    %3645 = vmatpush1.msra.mxu0 0.0
    %3646 = vmatprep.subr.mxu0 0.0
    %3647 = vmatpush1.msra.mxu0 0.0
    %3648 = vmatprep.mubr.f32.mxu0 0.0
    %3649 = vmatmul.mubr.f32.gmra.mrb[0].mxu0 %v3582
    %v3650 = vpop.f32.mrb[0].mxu0
    %v3651 = vadd.f32 0.0, %v3650
    %v3652 = vpop.f32.mrb[0].mxu0
    %3653 = vdwg.mxu0
    %v3655 = vsel %vm2000, %v3132, 0
    %3657 = vmatprep.subr.mxu0 0.0
    %3658 = vmatpush1.msra.mxu0 %v3286
    %3659 = vmatprep.subr.mxu0 0.0
    %3660 = vmatpush1.msra.mxu0 0.0
    %3661 = vmatprep.subr.mxu0 0.0
    %3662 = vmatpush1.msra.mxu0 0.0
    %3663 = vmatprep.subr.mxu0 0.0
    %3664 = vmatpush1.msra.mxu0 0.0
    %3665 = vmatprep.subr.mxu0 0.0
    %3666 = vmatpush1.msra.mxu0 0.0
    %3667 = vmatprep.subr.mxu0 0.0
    %3668 = vmatpush1.msra.mxu0 0.0
    %3669 = vmatprep.subr.mxu0 0.0
    %3670 = vmatpush1.msra.mxu0 0.0
    %3671 = vmatprep.subr.mxu0 0.0
    %3672 = vmatpush1.msra.mxu0 0.0
    %3673 = vmatprep.subr.mxu0 0.0
    %3674 = vmatpush1.msra.mxu0 0.0
    %3675 = vmatprep.subr.mxu0 0.0
    %3676 = vmatpush1.msra.mxu0 0.0
    %3677 = vmatprep.subr.mxu0 0.0
    %3678 = vmatpush1.msra.mxu0 0.0
    %3679 = vmatprep.subr.mxu0 0.0
    %3680 = vmatpush1.msra.mxu0 0.0
    %3681 = vmatprep.subr.mxu0 0.0
    %3682 = vmatpush1.msra.mxu0 0.0
    %3683 = vmatprep.subr.mxu0 0.0
    %3684 = vmatpush1.msra.mxu0 0.0
    %3685 = vmatprep.subr.mxu0 0.0
    %3686 = vmatpush1.msra.mxu0 0.0
    %3687 = vmatprep.subr.mxu0 0.0
    %3688 = vmatpush1.msra.mxu0 0.0
    %3689 = vmatprep.subr.mxu0 0.0
    %3690 = vmatpush1.msra.mxu0 0.0
    %3691 = vmatprep.subr.mxu0 0.0
    %3692 = vmatpush1.msra.mxu0 0.0
    %3693 = vmatprep.subr.mxu0 0.0
    %3694 = vmatpush1.msra.mxu0 0.0
    %3695 = vmatprep.subr.mxu0 0.0
    %3696 = vmatpush1.msra.mxu0 0.0
    %3697 = vmatprep.subr.mxu0 0.0
    %3698 = vmatpush1.msra.mxu0 0.0
    %3699 = vmatprep.subr.mxu0 0.0
    %3700 = vmatpush1.msra.mxu0 0.0
    %3701 = vmatprep.subr.mxu0 0.0
    %3702 = vmatpush1.msra.mxu0 0.0
    %3703 = vmatprep.subr.mxu0 0.0
    %3704 = vmatpush1.msra.mxu0 0.0
    %3705 = vmatprep.subr.mxu0 0.0
    %3706 = vmatpush1.msra.mxu0 0.0
    %3707 = vmatprep.subr.mxu0 0.0
    %3708 = vmatpush1.msra.mxu0 0.0
    %3709 = vmatprep.subr.mxu0 0.0
    %3710 = vmatpush1.msra.mxu0 0.0
    %3711 = vmatprep.subr.mxu0 0.0
    %3712 = vmatpush1.msra.mxu0 0.0
    %3713 = vmatprep.subr.mxu0 0.0
    %3714 = vmatpush1.msra.mxu0 0.0
    %3715 = vmatprep.subr.mxu0 0.0
    %3716 = vmatpush1.msra.mxu0 0.0
    %3717 = vmatprep.subr.mxu0 0.0
    %3718 = vmatpush1.msra.mxu0 0.0
    %3719 = vmatprep.subr.mxu0 0.0
    %3720 = vmatpush1.msra.mxu0 0.0
    %3721 = vmatprep.mubr.f32.mxu0 0.0
    %3722 = vmatmul.mubr.f32.gmra.mrb[0].mxu0 %v3655
    %v3723 = vpop.f32.mrb[0].mxu0
    %v3724 = vadd.f32 0.0, %v3723
    %v3725 = vpop.f32.mrb[0].mxu0
    %3726 = vdwg.mxu0
    %v3728 = vsel %vm2000, %v3205, 0
    %3730 = vmatprep.subr.mxu0 0.0
    %3731 = vmatpush1.msra.mxu0 %v3287
    %3732 = vmatprep.subr.mxu0 0.0
    %3733 = vmatpush1.msra.mxu0 0.0
    %3734 = vmatprep.subr.mxu0 0.0
    %3735 = vmatpush1.msra.mxu0 0.0
    %3736 = vmatprep.subr.mxu0 0.0
    %3737 = vmatpush1.msra.mxu0 0.0
    %3738 = vmatprep.subr.mxu0 0.0
    %3739 = vmatpush1.msra.mxu0 0.0
    %3740 = vmatprep.subr.mxu0 0.0
    %3741 = vmatpush1.msra.mxu0 0.0
    %3742 = vmatprep.subr.mxu0 0.0
    %3743 = vmatpush1.msra.mxu0 0.0
    %3744 = vmatprep.subr.mxu0 0.0
    %3745 = vmatpush1.msra.mxu0 0.0
    %3746 = vmatprep.subr.mxu0 0.0
    %3747 = vmatpush1.msra.mxu0 0.0
    %3748 = vmatprep.subr.mxu0 0.0
    %3749 = vmatpush1.msra.mxu0 0.0
    %3750 = vmatprep.subr.mxu0 0.0
    %3751 = vmatpush1.msra.mxu0 0.0
    %3752 = vmatprep.subr.mxu0 0.0
    %3753 = vmatpush1.msra.mxu0 0.0
    %3754 = vmatprep.subr.mxu0 0.0
    %3755 = vmatpush1.msra.mxu0 0.0
    %3756 = vmatprep.subr.mxu0 0.0
    %3757 = vmatpush1.msra.mxu0 0.0
    %3758 = vmatprep.subr.mxu0 0.0
    %3759 = vmatpush1.msra.mxu0 0.0
    %3760 = vmatprep.subr.mxu0 0.0
    %3761 = vmatpush1.msra.mxu0 0.0
    %3762 = vmatprep.subr.mxu0 0.0
    %3763 = vmatpush1.msra.mxu0 0.0
    %3764 = vmatprep.subr.mxu0 0.0
    %3765 = vmatpush1.msra.mxu0 0.0
    %3766 = vmatprep.subr.mxu0 0.0
    %3767 = vmatpush1.msra.mxu0 0.0
    %3768 = vmatprep.subr.mxu0 0.0
    %3769 = vmatpush1.msra.mxu0 0.0
    %3770 = vmatprep.subr.mxu0 0.0
    %3771 = vmatpush1.msra.mxu0 0.0
    %3772 = vmatprep.subr.mxu0 0.0
    %3773 = vmatpush1.msra.mxu0 0.0
    %3774 = vmatprep.subr.mxu0 0.0
    %3775 = vmatpush1.msra.mxu0 0.0
    %3776 = vmatprep.subr.mxu0 0.0
    %3777 = vmatpush1.msra.mxu0 0.0
    %3778 = vmatprep.subr.mxu0 0.0
    %3779 = vmatpush1.msra.mxu0 0.0
    %3780 = vmatprep.subr.mxu0 0.0
    %3781 = vmatpush1.msra.mxu0 0.0
    %3782 = vmatprep.subr.mxu0 0.0
    %3783 = vmatpush1.msra.mxu0 0.0
    %3784 = vmatprep.subr.mxu0 0.0
    %3785 = vmatpush1.msra.mxu0 0.0
    %3786 = vmatprep.subr.mxu0 0.0
    %3787 = vmatpush1.msra.mxu0 0.0
    %3788 = vmatprep.subr.mxu0 0.0
    %3789 = vmatpush1.msra.mxu0 0.0
    %3790 = vmatprep.subr.mxu0 0.0
    %3791 = vmatpush1.msra.mxu0 0.0
    %3792 = vmatprep.subr.mxu0 0.0
    %3793 = vmatpush1.msra.mxu0 0.0
    %3794 = vmatprep.mubr.f32.mxu0 0.0
    %3795 = vmatmul.mubr.f32.gmra.mrb[0].mxu0 %v3728
    %v3796 = vpop.f32.mrb[0].mxu0
    %v3797 = vadd.f32 0.0, %v3796
    %v3798 = vpop.f32.mrb[0].mxu0
    %3799 = vdwg.mxu0
    %v3801 = vsel %vm2000, %v3278, 0
    %3803 = vmatprep.subr.mxu0 0.0
    %3804 = vmatpush1.msra.mxu0 %v3288
    %3805 = vmatprep.subr.mxu0 0.0
    %3806 = vmatpush1.msra.mxu0 0.0
    %3807 = vmatprep.subr.mxu0 0.0
    %3808 = vmatpush1.msra.mxu0 0.0
    %3809 = vmatprep.subr.mxu0 0.0
    %3810 = vmatpush1.msra.mxu0 0.0
    %3811 = vmatprep.subr.mxu0 0.0
    %3812 = vmatpush1.msra.mxu0 0.0
    %3813 = vmatprep.subr.mxu0 0.0
    %3814 = vmatpush1.msra.mxu0 0.0
    %3815 = vmatprep.subr.mxu0 0.0
    %3816 = vmatpush1.msra.mxu0 0.0
    %3817 = vmatprep.subr.mxu0 0.0
    %3818 = vmatpush1.msra.mxu0 0.0
    %3819 = vmatprep.subr.mxu0 0.0
    %3820 = vmatpush1.msra.mxu0 0.0
    %3821 = vmatprep.subr.mxu0 0.0
    %3822 = vmatpush1.msra.mxu0 0.0
    %3823 = vmatprep.subr.mxu0 0.0
    %3824 = vmatpush1.msra.mxu0 0.0
    %3825 = vmatprep.subr.mxu0 0.0
    %3826 = vmatpush1.msra.mxu0 0.0
    %3827 = vmatprep.subr.mxu0 0.0
    %3828 = vmatpush1.msra.mxu0 0.0
    %3829 = vmatprep.subr.mxu0 0.0
    %3830 = vmatpush1.msra.mxu0 0.0
    %3831 = vmatprep.subr.mxu0 0.0
    %3832 = vmatpush1.msra.mxu0 0.0
    %3833 = vmatprep.subr.mxu0 0.0
    %3834 = vmatpush1.msra.mxu0 0.0
    %3835 = vmatprep.subr.mxu0 0.0
    %3836 = vmatpush1.msra.mxu0 0.0
    %3837 = vmatprep.subr.mxu0 0.0
    %3838 = vmatpush1.msra.mxu0 0.0
    %3839 = vmatprep.subr.mxu0 0.0
    %3840 = vmatpush1.msra.mxu0 0.0
    %3841 = vmatprep.subr.mxu0 0.0
    %3842 = vmatpush1.msra.mxu0 0.0
    %3843 = vmatprep.subr.mxu0 0.0
    %3844 = vmatpush1.msra.mxu0 0.0
    %3845 = vmatprep.subr.mxu0 0.0
    %3846 = vmatpush1.msra.mxu0 0.0
    %3847 = vmatprep.subr.mxu0 0.0
    %3848 = vmatpush1.msra.mxu0 0.0
    %3849 = vmatprep.subr.mxu0 0.0
    %3850 = vmatpush1.msra.mxu0 0.0
    %3851 = vmatprep.subr.mxu0 0.0
    %3852 = vmatpush1.msra.mxu0 0.0
    %3853 = vmatprep.subr.mxu0 0.0
    %3854 = vmatpush1.msra.mxu0 0.0
    %3855 = vmatprep.subr.mxu0 0.0
    %3856 = vmatpush1.msra.mxu0 0.0
    %3857 = vmatprep.subr.mxu0 0.0
    %3858 = vmatpush1.msra.mxu0 0.0
    %3859 = vmatprep.subr.mxu0 0.0
    %3860 = vmatpush1.msra.mxu0 0.0
    %3861 = vmatprep.subr.mxu0 0.0
    %3862 = vmatpush1.msra.mxu0 0.0
    %3863 = vmatprep.subr.mxu0 0.0
    %3864 = vmatpush1.msra.mxu0 0.0
    %3865 = vmatprep.subr.mxu0 0.0
    %3866 = vmatpush1.msra.mxu0 0.0
    %3867 = vmatprep.mubr.f32.mxu0 0.0
    %3868 = vmatmul.mubr.f32.gmra.mrb[0].mxu0 %v3801
    %v3869 = vpop.f32.mrb[0].mxu0
    %v3870 = vadd.f32 0.0, %v3869
    %v3871 = vpop.f32.mrb[0].mxu0
    %3872 = vdwg.mxu0
    %v3873 = vsel %vm137, %v3359, 0.0
    %v3874 = vsel %vm137, %v3505, 0.0
    %v3875 = vadd.f32 %v3873, %v3874
    %v3876 = vsel %vm137, %v3651, 0.0
    %v3877 = vadd.f32 %v3875, %v3876
    %v3878 = vsel %vm137, %v3797, 0.0
    %v3879 = vadd.f32 %v3877, %v3878
    %v3880 = vsel %vm137, %v3432, 0.0
    %v3881 = vsel %vm137, %v3578, 0.0
    %v3882 = vadd.f32 %v3880, %v3881
    %v3883 = vsel %vm137, %v3724, 0.0
    %v3884 = vadd.f32 %v3882, %v3883
    %v3885 = vsel %vm137, %v3870, 0.0
    %v3886 = vadd.f32 %v3884, %v3885
    %v3887 = vld [vmem:[%s8] sm:$0x1]
    %v3889 = vlaneseq
    %v3890 = vshrl.u32 %v3889, 7
    %v3891 = vsub.s32 0, %v3890
    %v3892 = vrot.slane %v3887, %v3891
    %v3894 = vadd.f32 %v3879, %v3892
    %v3895 = vadd.f32 %v3886, %v3892
    %v3896 = vld [vmem:[%s9] sm:$0xff]
    %v3897 = vld [vmem:[%s9 + $0x8] sm:$0xff]
    %v3898 = vld [vmem:[%s9 + $0x10] sm:$0xff]
    %v3899 = vld [vmem:[%s9 + $0x18] sm:$0xff]
    %v3901 = vsel %vm137, %v3894, 0
    %v3904 = vsel %vm137, %v3895, 0
    %3906 = vmatprep.subr.mxu0 0.0
    %3907 = vmatpush1.msra.mxu0 %v3896
    %3908 = vmatprep.subr.mxu0 0.0
    %3909 = vmatpush1.msra.mxu0 %v3897
    %3910 = vmatprep.subr.mxu0 0.0
    %3911 = vmatpush1.msra.mxu0 %v3898
    %3912 = vmatprep.subr.mxu0 0.0
    %3913 = vmatpush1.msra.mxu0 %v3899
    %3914 = vmatprep.subr.mxu0 0.0
    %3915 = vmatpush1.msra.mxu0 0.0
    %3916 = vmatprep.subr.mxu0 0.0
    %3917 = vmatpush1.msra.mxu0 0.0
    %3918 = vmatprep.subr.mxu0 0.0
    %3919 = vmatpush1.msra.mxu0 0.0
    %3920 = vmatprep.subr.mxu0 0.0
    %3921 = vmatpush1.msra.mxu0 0.0
    %3922 = vmatprep.subr.mxu0 0.0
    %3923 = vmatpush1.msra.mxu0 0.0
    %3924 = vmatprep.subr.mxu0 0.0
    %3925 = vmatpush1.msra.mxu0 0.0
    %3926 = vmatprep.subr.mxu0 0.0
    %3927 = vmatpush1.msra.mxu0 0.0
    %3928 = vmatprep.subr.mxu0 0.0
    %3929 = vmatpush1.msra.mxu0 0.0
    %3930 = vmatprep.subr.mxu0 0.0
    %3931 = vmatpush1.msra.mxu0 0.0
    %3932 = vmatprep.subr.mxu0 0.0
    %3933 = vmatpush1.msra.mxu0 0.0
    %3934 = vmatprep.subr.mxu0 0.0
    %3935 = vmatpush1.msra.mxu0 0.0
    %3936 = vmatprep.subr.mxu0 0.0
    %3937 = vmatpush1.msra.mxu0 0.0
    %3938 = vmatprep.subr.mxu0 0.0
    %3939 = vmatpush1.msra.mxu0 0.0
    %3940 = vmatprep.subr.mxu0 0.0
    %3941 = vmatpush1.msra.mxu0 0.0
    %3942 = vmatprep.subr.mxu0 0.0
    %3943 = vmatpush1.msra.mxu0 0.0
    %3944 = vmatprep.subr.mxu0 0.0
    %3945 = vmatpush1.msra.mxu0 0.0
    %3946 = vmatprep.subr.mxu0 0.0
    %3947 = vmatpush1.msra.mxu0 0.0
    %3948 = vmatprep.subr.mxu0 0.0
    %3949 = vmatpush1.msra.mxu0 0.0
    %3950 = vmatprep.subr.mxu0 0.0
    %3951 = vmatpush1.msra.mxu0 0.0
    %3952 = vmatprep.subr.mxu0 0.0
    %3953 = vmatpush1.msra.mxu0 0.0
    %3954 = vmatprep.subr.mxu0 0.0
    %3955 = vmatpush1.msra.mxu0 0.0
    %3956 = vmatprep.subr.mxu0 0.0
    %3957 = vmatpush1.msra.mxu0 0.0
    %3958 = vmatprep.subr.mxu0 0.0
    %3959 = vmatpush1.msra.mxu0 0.0
    %3960 = vmatprep.subr.mxu0 0.0
    %3961 = vmatpush1.msra.mxu0 0.0
    %3962 = vmatprep.subr.mxu0 0.0
    %3963 = vmatpush1.msra.mxu0 0.0
    %3964 = vmatprep.subr.mxu0 0.0
    %3965 = vmatpush1.msra.mxu0 0.0
    %3966 = vmatprep.subr.mxu0 0.0
    %3967 = vmatpush1.msra.mxu0 0.0
    %3968 = vmatprep.subr.mxu0 0.0
    %3969 = vmatpush1.msra.mxu0 0.0
    %3970 = vmatprep.mubr.f32.mxu0 0.0
    %3971 = vmatmul.mubr.f32.gmra.mrb[0].mxu0 %v3901
    %v3972 = vpop.f32.mrb[0].mxu0
    %v3973 = vadd.f32 0.0, %v3972
    %v3974 = vpop.f32.mrb[0].mxu0
    %3975 = vmatprep.mubr.f32.mxu0 0.0
    %3976 = vmatmul.mubr.f32.gmra.mrb[0].mxu0 %v3904
    %v3977 = vpop.f32.mrb[0].mxu0
    %v3978 = vadd.f32 0.0, %v3977
    %v3979 = vpop.f32.mrb[0].mxu0
    %3980 = vdwg.mxu0
    %v3981 = vtanh.pop %v3973
    %v3982 = vtanh.pop %v3978
    %v3983 = vld [vmem:[%s10] sm:$0x1]
    %v3985 = vlaneseq
    %v3986 = vshrl.u32 %v3985, 7
    %v3987 = vsub.s32 0, %v3986
    %v3988 = vrot.slane %v3983, %v3987
    %v3990 = vmul.f32 %v3981, %v3988
    %v3991 = vmul.f32 %v3982, %v3988
    %vm3992 = vcmask 130048
    %v3993 = vsel %vm3992, %v3990, 0.0
    %3994 = vadd.xlane.f32.xlu0 %v3993
    %v3995 = vpop.xlane.xlu0 %3994
    %v3996 = vsel %vm3992, %v3991, 0.0
    %3997 = vadd.xlane.f32.xlu0 %v3996
    %v3998 = vpop.xlane.xlu0 %3997
    %v3999 = vrot.slane %v3995, 4
    %v4000 = vmax.f32 %v3995, %v3999
    %v4001 = vrot.slane %v4000, 2
    %v4002 = vmax.f32 %v4000, %v4001
    %v4003 = vrot.slane %v4002, 1
    %v4004 = vmax.f32 %v4002, %v4003
    %v4005 = vrot.slane %v3998, 4
    %v4006 = vmax.f32 %v3998, %v4005
    %v4007 = vrot.slane %v4006, 2
    %v4008 = vmax.f32 %v4006, %v4007
    %v4009 = vrot.slane %v4008, 1
    %v4010 = vmax.f32 %v4008, %v4009
    %v4011 = vsub.f32 %v3995, %v4004
    %v4012 = vsub.f32 %v3998, %v4010
    %v4013 = vmul.f32 %v4011, 1.442695
    %v4014 = vpow.pop %v4013
    %v4015 = vmul.f32 %v4012, 1.442695
    %v4016 = vpow.pop %v4015
    %v4017 = vrot.slane %v4014, 4
    %v4018 = vadd.f32 %v4014, %v4017
    %v4019 = vrot.slane %v4018, 2
    %v4020 = vadd.f32 %v4018, %v4019
    %v4021 = vrot.slane %v4020, 1
    %v4022 = vadd.f32 %v4020, %v4021
    %v4023 = vrot.slane %v4016, 4
    %v4024 = vadd.f32 %v4016, %v4023
    %v4025 = vrot.slane %v4024, 2
    %v4026 = vadd.f32 %v4024, %v4025
    %v4027 = vrot.slane %v4026, 1
    %v4028 = vadd.f32 %v4026, %v4027
    %v4029 = vrcp.pop %v4022
    %v4030 = vrcp.pop %v4028
    %v4031 = vmul.f32 %v4014, %v4029
    %v4032 = vmul.f32 %v4016, %v4030
    %v4033 = vmul.f32 %v4031, %v3894
    %v4034 = vmul.f32 %v4032, %v3895
    %v4035 = vsel %vm137, %v4033, 0.0
    %v4036 = vrot.slane %v4035, 4
    %v4037 = vadd.f32 %v4035, %v4036
    %v4038 = vrot.slane %v4037, 2
    %v4039 = vadd.f32 %v4037, %v4038
    %v4040 = vrot.slane %v4039, 1
    %v4041 = vadd.f32 %v4039, %v4040
    %v4042 = vsel %vm137, %v4034, 0.0
    %v4043 = vrot.slane %v4042, 4
    %v4044 = vadd.f32 %v4042, %v4043
    %v4045 = vrot.slane %v4044, 2
    %v4046 = vadd.f32 %v4044, %v4045
    %v4047 = vrot.slane %v4046, 1
    %v4048 = vadd.f32 %v4046, %v4047
    %v4049 = vld [vmem:[%s11] sm:$0x1]
    %v4051 = vlaneseq
    %v4052 = vshrl.u32 %v4051, 7
    %v4053 = vsub.s32 0, %v4052
    %v4054 = vrot.slane %v4049, %v4053
    %v4056 = vmul.f32 %v4041, %v4054
    %v4057 = vmul.f32 %v4048, %v4054
    %v4060 = vrot.slane %v4057, 7
    %vm4061 = vcmask 1041409
    %v4062 = vsel %vm4061, %v4060, %v4056
    %vm4064 = vcmask 254976
    %v4065 = vsel %vm4064, %v4062, 0.0
    %4066 = vadd.xlane.f32.xlu0 %v4065
    %v4067 = vpop.xlane.xlu0 %4066
    %v4068 = vld [vmem:[#allocation2] sm:$0x1]
    %v4070 = vlaneseq
    %v4071 = vshrl.u32 %v4070, 7
    %v4072 = vsub.s32 0, %v4071
    %v4073 = vrot.slane %v4068, %v4072
    %v4075 = vadd.f32 %v4067, %v4073
    %4077 = vset.pattern.permute.xlu0 0
    %4078 = vperm.xlu0 %4077, %v4075
    %v4079 = vpop.permute.xlu0 %4078
    %4081 = vst [vmem:[#allocation3] sm:$0x3] %v4079
    // Predicated region
    $region54: #{tpu_custom_call.1} parent=1 // pred_check
      _
    $region55: #{tpu_custom_call.1} parent=1 // pred_check_branch
      %4083 = sbr.rel (0) target = $region57
    $region56: #{tpu_custom_call.1} parent=1 // pred_region
      %s4085 = ssub.s32 32, 32
      %4086 = vsyncadd [#allocation4], %s4085
      %s4088 = sshll.u32 [#allocation3], 4
      %s4089 = int_to_ptr.vmem [resolvable:$true] %s4088
      %4091 = dma.vmem_to_hbm [thread:$0]  %s4089, 32, %s13, [#allocation4]
    $region57: #{tpu_custom_call.1} parent=1 // pred_fallthru
      _
    // Predicated region
    $region58: #{tpu_custom_call.1} parent=1 // pred_check
      _
    $region59: #{tpu_custom_call.1} parent=1 // pred_check_branch
      %4093 = sbr.rel (0) target = $region61
    $region60: #{tpu_custom_call.1} parent=1 // pred_region
      %4094 = dma.done [#allocation4], 32
    $region61: #{tpu_custom_call.1} parent=1 // pred_fallthru
      _
    %4095 = vsyncpa [#allocation4], 1

</llo_original>
